<compile_context>
chip_gen: v7x
topology: tpu7x:2x2x1
jax: 0.10.0
libtpu: 0.0.40
codegen_flags: <defaults>
</compile_context>

<pallas_src>
import numpy as np
import jax
import jax.numpy as jnp
from jax.experimental import pallas as pl
from jax.experimental.pallas import tpu as pltpu


def _freq_transform_kernel(x_ref, tww_ref, twh_ref, amp_ref, pha_ref):
    TN, H, W = x_ref.shape
    Wf = tww_ref.shape[1] // 2

    x = x_ref[...]  # (TN, H, W) f32

    # Stage 1: rFFT along W.  Fold the batch into the MXU M dimension and fuse
    # the cos/-sin twiddles into one (W, 2*Wf) RHS:  y = [yr | yi].
    y = jnp.dot(
        x.reshape(TN * H, W), tww_ref[...],
        precision=jax.lax.Precision.HIGHEST,
        preferred_element_type=jnp.float32,
    )  # (TN*H, 2*Wf)
    y3 = y.reshape(TN, H, 2 * Wf)

    # Stage 2: full complex FFT along H.  Stack [ch; sh] into one (2H, H)
    # twiddle and run a single batched matmul over the TN images
    # (canonical (B, M, K) @ (B, K, N) form).
    twh = jnp.broadcast_to(twh_ref[...], (TN, 2 * H, H))
    p = jnp.einsum(
        "nkh,nhf->nkf", twh, y3,
        precision=jax.lax.Precision.HIGHEST,
        preferred_element_type=jnp.float32,
    )  # (TN, 2H, 2*Wf)

    ch_y = p[:, :H, :]   # [ch@yr | ch@yi]
    sh_y = p[:, H:, :]   # [sh@yr | sh@yi]

    # Z = (ch + i*sh) @ (yr + i*yi)
    zr = ch_y[..., :Wf] - sh_y[..., Wf:]   # (TN, H, Wf)
    zi = ch_y[..., Wf:] + sh_y[..., :Wf]

    amp_ref[...] = jnp.sqrt(zr * zr + zi * zi)   # torch.abs of complex
    pha_ref[...] = jnp.arctan2(zi, zr)           # torch.angle


def _pick_tile_n(N, H, W, Wf, budget_bytes):
    """Largest TN | N fitting a per-step VMEM budget, preferring >= 2 grid steps."""
    per_img = 4 * (
        2 * H * W          # x block, double buffered
        + 2 * 2 * H * Wf   # amp + pha blocks, double buffered
        + 3 * H * 2 * Wf   # stage-1/stage-2 intermediates
        + 2 * H * H        # broadcast [ch; sh] twiddle
    )
    cap = max(1, budget_bytes // max(per_img, 1))
    divisors = [d for d in range(1, N + 1) if N % d == 0]
    cands = [d for d in divisors if d <= cap and N // d >= 2]
    if not cands:
        cands = [d for d in divisors if d <= cap] or [1]
    return max(cands)


def frequency_transform(x, *, vmem_budget_bytes=4 * 1024 * 1024):
    """x: (B, C, H, W) float32 -> (amp, pha), each (B, C, H, W//2 + 1) float32."""
    B, C, H, W = x.shape
    Wf = W // 2 + 1
    N = B * C
    xf = x.reshape(N, H, W).astype(jnp.float32)

    # DFT twiddles (norm='backward' => no scaling), built in float64 then cast.
    ang_w = 2.0 * np.pi * np.outer(np.arange(W), np.arange(Wf)) / W
    tww = jnp.asarray(
        np.concatenate([np.cos(ang_w), -np.sin(ang_w)], axis=1), dtype=jnp.float32
    )  # (W, 2*Wf) = [cos | -sin]
    ang_h = 2.0 * np.pi * np.outer(np.arange(H), np.arange(H)) / H
    twh = jnp.asarray(
        np.concatenate([np.cos(ang_h), -np.sin(ang_h)], axis=0), dtype=jnp.float32
    )  # (2H, H) = [cos ; -sin]

    TN = _pick_tile_n(N, H, W, Wf, vmem_budget_bytes)
    G = N // TN

    amp, pha = pl.pallas_call(
        _freq_transform_kernel,
        out_shape=(jax.ShapeDtypeStruct((N, H, Wf), jnp.float32),
                   jax.ShapeDtypeStruct((N, H, Wf), jnp.float32)),
        grid=(G,),
        in_specs=[
            pl.BlockSpec((TN, H, W), lambda g: (g, 0, 0)),
            pl.BlockSpec((W, 2 * Wf), lambda g: (0, 0)),   # constant block
            pl.BlockSpec((2 * H, H), lambda g: (0, 0)),    # constant block
        ],
        out_specs=(pl.BlockSpec((TN, H, Wf), lambda g: (g, 0, 0)),
                   pl.BlockSpec((TN, H, Wf), lambda g: (g, 0, 0))),
        compiler_params=pltpu.CompilerParams(
            dimension_semantics=("parallel",),
            vmem_limit_bytes=32 * 1024 * 1024,
        ),
    )(xf, tww, twh)

    return amp.reshape(B, C, H, Wf), pha.reshape(B, C, H, Wf)


if __name__ == "__main__":
    key = jax.random.PRNGKey(0)
    B, C, H, W = 2, 4, 16, 16
    x = jax.random.normal(key, (B, C, H, W), dtype=jnp.float32)

    amp, pha = frequency_transform(x)
    amp = jax.block_until_ready(amp)
    pha = jax.block_until_ready(pha)

    # Reference: jnp.fft.rfft2 over the last two dims (matches torch.fft.rfft2).
    ref = jnp.fft.rfft2(x, norm="backward")
    ref_amp = jnp.abs(ref)
    np.testing.assert_allclose(np.asarray(amp), np.asarray(ref_amp),
                               rtol=2e-3, atol=2e-3)
    np.testing.assert_allclose(np.asarray(amp * jnp.cos(pha)),
                               np.asarray(ref.real), rtol=2e-3, atol=2e-3)
    np.testing.assert_allclose(np.asarray(amp * jnp.sin(pha)),
                               np.asarray(ref.imag), rtol=2e-3, atol=2e-3)

    print("KERNEL_OK")
</pallas_src>

<mosaic_0001>
module attributes {stable_mosaic.version = 11 : i64} {
  func.func @_freq_transform_kernel(%arg0: i32, %arg1: memref<4x16x16xf32, #tpu.memory_space<vmem>>, %arg2: memref<16x18xf32, #tpu.memory_space<vmem>>, %arg3: memref<32x16xf32, #tpu.memory_space<vmem>>, %arg4: memref<4x16x9xf32, #tpu.memory_space<vmem>>, %arg5: memref<4x16x9xf32, #tpu.memory_space<vmem>>) attributes {dimension_semantics = [#tpu.dimension_semantics<parallel>], iteration_bounds = array<i64: 2>, scalar_prefetch = 0 : i64, scratch_operands = 0 : i64, tpu.core_type = #tpu.core_type<tc>, window_params = [{transform_indices = @transform_0, window_bounds = array<i64: 4, 16, 16>}, {pipeline_mode = #tpu.pipeline_mode<synchronous>, transform_indices = @transform_1, window_bounds = array<i64: 16, 18>}, {pipeline_mode = #tpu.pipeline_mode<synchronous>, transform_indices = @transform_2, window_bounds = array<i64: 32, 16>}, {transform_indices = @transform_3, window_bounds = array<i64: 4, 16, 9>}, {transform_indices = @transform_4, window_bounds = array<i64: 4, 16, 9>}]} {
    %c0 = arith.constant 0 : index
    %c0_0 = arith.constant 0 : index
    %c0_1 = arith.constant 0 : index
    %0 = vector.load %arg1[%c0, %c0_0, %c0_1] : memref<4x16x16xf32, #tpu.memory_space<vmem>>, vector<4x16x16xf32>
    %1 = vector.shape_cast %0 : vector<4x16x16xf32> to vector<64x16xf32>
    %c0_2 = arith.constant 0 : index
    %c0_3 = arith.constant 0 : index
    %2 = vector.load %arg2[%c0_2, %c0_3] : memref<16x18xf32, #tpu.memory_space<vmem>>, vector<16x18xf32>
    %cst = arith.constant dense<0.000000e+00> : vector<64x18xf32>
    %3 = tpu.matmul %1, %2, %cst {dimension_numbers = #tpu.dot_dimension_numbers<[1], [0], [0], [1], [0, 0, 1, 1], [], []>, precision = #tpu.contract_precision<fp32>} : vector<64x16xf32>, vector<16x18xf32>, vector<64x18xf32> -> vector<64x18xf32>
    %4 = vector.shape_cast %3 : vector<64x18xf32> to vector<4x16x18xf32>
    %c0_4 = arith.constant 0 : index
    %c0_5 = arith.constant 0 : index
    %5 = vector.load %arg3[%c0_4, %c0_5] : memref<32x16xf32, #tpu.memory_space<vmem>>, vector<32x16xf32>
    %6 = vector.shape_cast %5 : vector<32x16xf32> to vector<1x32x16xf32>
    %7 = vector.broadcast %6 : vector<1x32x16xf32> to vector<4x32x16xf32>
    "tpu.trace_start"() <{level = 10 : i32, message = "nkh,nhf->nkf"}> : () -> ()
    %cst_6 = arith.constant dense<0.000000e+00> : vector<4x32x18xf32>
    %8 = tpu.matmul %7, %4, %cst_6 {dimension_numbers = #tpu.dot_dimension_numbers<[2], [1], [1], [2], [0, 0, 0, 1, 1, 2], [0], [0]>, precision = #tpu.contract_precision<fp32>} : vector<4x32x16xf32>, vector<4x16x18xf32>, vector<4x32x18xf32> -> vector<4x32x18xf32>
    "tpu.trace_stop"() : () -> ()
    %9 = vector.extract_strided_slice %8 {offsets = [0, 0, 0], sizes = [4, 16, 18], strides = [1, 1, 1]} : vector<4x32x18xf32> to vector<4x16x18xf32>
    %10 = vector.extract_strided_slice %8 {offsets = [0, 16, 0], sizes = [4, 16, 18], strides = [1, 1, 1]} : vector<4x32x18xf32> to vector<4x16x18xf32>
    %11 = vector.extract_strided_slice %9 {offsets = [0, 0, 0], sizes = [4, 16, 9], strides = [1, 1, 1]} : vector<4x16x18xf32> to vector<4x16x9xf32>
    %12 = vector.extract_strided_slice %10 {offsets = [0, 0, 9], sizes = [4, 16, 9], strides = [1, 1, 1]} : vector<4x16x18xf32> to vector<4x16x9xf32>
    %13 = arith.subf %11, %12 : vector<4x16x9xf32>
    %14 = vector.extract_strided_slice %9 {offsets = [0, 0, 9], sizes = [4, 16, 9], strides = [1, 1, 1]} : vector<4x16x18xf32> to vector<4x16x9xf32>
    %15 = vector.extract_strided_slice %10 {offsets = [0, 0, 0], sizes = [4, 16, 9], strides = [1, 1, 1]} : vector<4x16x18xf32> to vector<4x16x9xf32>
    %16 = arith.addf %14, %15 : vector<4x16x9xf32>
    %17 = arith.mulf %13, %13 : vector<4x16x9xf32>
    %18 = arith.mulf %16, %16 : vector<4x16x9xf32>
    %19 = arith.addf %17, %18 : vector<4x16x9xf32>
    %20 = math.sqrt %19 : vector<4x16x9xf32>
    %c0_7 = arith.constant 0 : index
    %c0_8 = arith.constant 0 : index
    %c0_9 = arith.constant 0 : index
    %21 = vector.load %arg4[%c0_7, %c0_8, %c0_9] : memref<4x16x9xf32, #tpu.memory_space<vmem>>, vector<4x16x9xf32>
    tpu.vector_store %arg4[%c0_7, %c0_8, %c0_9], %20 {strides = array<i32>} : memref<4x16x9xf32, #tpu.memory_space<vmem>>, vector<4x16x9xf32>,
    %22 = math.atan2 %16, %13 : vector<4x16x9xf32>
    %c0_10 = arith.constant 0 : index
    %c0_11 = arith.constant 0 : index
    %c0_12 = arith.constant 0 : index
    %23 = vector.load %arg5[%c0_10, %c0_11, %c0_12] : memref<4x16x9xf32, #tpu.memory_space<vmem>>, vector<4x16x9xf32>
    tpu.vector_store %arg5[%c0_10, %c0_11, %c0_12], %22 {strides = array<i32>} : memref<4x16x9xf32, #tpu.memory_space<vmem>>, vector<4x16x9xf32>,
    return
  }
  func.func @transform_0(%arg0: i32) -> (i32, i32, i32) {
    %c0_i32 = arith.constant 0 : i32
    %c0_i32_0 = arith.constant 0 : i32
    %c0_i32_1 = arith.constant 0 : i32
    return %arg0, %c0_i32, %c0_i32_0 : i32, i32, i32
  }
  func.func @transform_1(%arg0: i32) -> (i32, i32) {
    %c0_i32 = arith.constant 0 : i32
    %c0_i32_0 = arith.constant 0 : i32
    %c0_i32_1 = arith.constant 0 : i32
    return %c0_i32, %c0_i32_0 : i32, i32
  }
  func.func @transform_2(%arg0: i32) -> (i32, i32) {
    %c0_i32 = arith.constant 0 : i32
    %c0_i32_0 = arith.constant 0 : i32
    %c0_i32_1 = arith.constant 0 : i32
    return %c0_i32, %c0_i32_0 : i32, i32
  }
  func.func @transform_3(%arg0: i32) -> (i32, i32, i32) {
    %c0_i32 = arith.constant 0 : i32
    %c0_i32_0 = arith.constant 0 : i32
    %c0_i32_1 = arith.constant 0 : i32
    return %arg0, %c0_i32, %c0_i32_0 : i32, i32, i32
  }
  func.func @transform_4(%arg0: i32) -> (i32, i32, i32) {
    %c0_i32 = arith.constant 0 : i32
    %c0_i32_0 = arith.constant 0 : i32
    %c0_i32_1 = arith.constant 0 : i32
    return %arg0, %c0_i32, %c0_i32_0 : i32, i32, i32
  }
}

</mosaic_0001>

<llo_original>
// kernel: tpu_custom_call.1
$region0: #{tpu_custom_call.1}
  #allocation0 [shape = 'u32[]', space=smem, size = 0x4, offset = 0x4, fixed_abs, tag = 'smem constant byte address 0x4 - core index']
  #allocation1 [shape = 'u32[144,128]{1,0:T(1,128)}', space=vmem, size = 0x12000, scoped, tag = 'internal scratch']
  %s0 = inlined_call_operand.hbm [shape: f32[8,16,16], index: 0, kind: input, shape index: {}]
  %s1 = inlined_call_operand.vmem [shape: f32[16,18], index: 1, kind: input, shape index: {}]
  %s2 = inlined_call_operand.vmem [shape: f32[32,16], index: 2, kind: input, shape index: {}]
  %s3 = inlined_call_operand.vmem [shape: f32[8,16,9], index: 3, kind: output, shape index: {0}]
  %s4 = inlined_call_operand.vmem [shape: f32[8,16,9], index: 4, kind: output, shape index: {1}]
  %5 = xla_tuple %s3, %s4
  %s6 = sld [smem:[#allocation0]]
  $region57: #{tpu_custom_call.1} parent=0
    _
  %s8 = ssub.s32 1, %s6
  %s9 = scalar_select 0, %s8, %s6
  $region1: #{tpu_custom_call.1} parent=0
    #allocation2 [shape = 'u8[65536]{0}', space=vmem, size = 0x10000, scoped, tag = 'input window, operand 0']
    #allocation3 [shape = 's32[2]{0}', space=sflag, size = 0x8, scoped, tag = 'scoped memory for tpu_custom_call.1']
    %10 = vsyncpa [#allocation3], 0
    %s11 = scalar_lea.sflag [#allocation3], 1
    %12 = vsyncpa %s11, 0
    loop: start=0, step=1, limit=4
    $region2: #{tpu_custom_call.1} parent=1 // loop_pre_header
      _
    $region3: #{tpu_custom_call.1} parent=1 // loop_header
      %s14 = sphi 0, %s18
      %p15 = scmp.ge.s32.totalorder %s14, 4
      %s24 = sphi 0, %s26
      %s27 = sphi 0, %s24
      %s28 = sphi 0, %s27
      %s44 = sphi 0, %s28
      %s48 = sphi 0, %s48
      %s50 = sphi 0, %s48
      %s51 = sphi 0, %s50
      %s65 = sphi 0, %s51
      %s69 = sphi 0, %s69
      %s71 = sphi 0, %s69
      %s72 = sphi 0, %s71
      %s86 = sphi 0, %s72
      %s92 = sphi 0, %s94
      %s95 = sphi 0, %s92
      %s96 = sphi 0, %s95
      %s112 = sphi 0, %s96
      %s118 = sphi 0, %s120
      %s121 = sphi 0, %s118
      %s122 = sphi 0, %s121
      %s138 = sphi 0, %s122
    $region4: #{tpu_custom_call.1} parent=1 // loop_header_branch
      %17 = sbr.rel (%p15) target = $region8
    $region5: #{tpu_custom_call.1} parent=1 // loop_body
      %s19 = ssub.s32 %s14, 1
      %s20 = ssub.s32 %s14, 2
      %s21 = sadd.s32 %s14, 1
      %s22 = ssub.s32 %s14, %s21
      %p23 = scmp.eq.s32.totalorder %s22, 0
      %s25 = sadd.s32 %s24, 1
      %s26 = scalar_select %p23, %s24, %s25
      %p29 = pneg %p23
      %p30 = scmp.eq.s32.totalorder %s14, 1
      %p31 = por %p29, %p30
      %p32 = scmp.ne.s32.totalorder %s24, %s27
      %p33 = scmp.eq.s32.totalorder %s14, 0
      %p34 = por %p32, %p33
      %p35 = scmp.ne.s32.totalorder %s24, %s27
      %p36 = scmp.eq.s32.totalorder %s19, 1
      %p37 = por %p35, %p36
      %p38 = scmp.ne.s32.totalorder %s27, %s28
      %p39 = scmp.eq.s32.totalorder %s19, 0
      %p40 = por %p38, %p39
      %p41 = scmp.ne.s32.totalorder %s27, %s28
      %p42 = scmp.eq.s32.totalorder %s20, 1
      %p43 = por %p41, %p42
      %p45 = scmp.ne.s32.totalorder %s28, %s44
      %p46 = scmp.eq.s32.totalorder %s20, 0
      %p47 = por %p45, %p46
      %s49 = sadd.s32 %s48, 1
      %p52 = scmp.eq.s32.totalorder %s14, 1
      %p53 = scmp.ne.s32.totalorder %s48, %s50
      %p54 = scmp.eq.s32.totalorder %s14, 0
      %p55 = por %p53, %p54
      %p56 = scmp.ne.s32.totalorder %s48, %s50
      %p57 = scmp.eq.s32.totalorder %s19, 1
      %p58 = por %p56, %p57
      %p59 = scmp.ne.s32.totalorder %s50, %s51
      %p60 = scmp.eq.s32.totalorder %s19, 0
      %p61 = por %p59, %p60
      %p62 = scmp.ne.s32.totalorder %s50, %s51
      %p63 = scmp.eq.s32.totalorder %s20, 1
      %p64 = por %p62, %p63
      %p66 = scmp.ne.s32.totalorder %s51, %s65
      %p67 = scmp.eq.s32.totalorder %s20, 0
      %p68 = por %p66, %p67
      %s70 = sadd.s32 %s69, 1
      %p73 = scmp.eq.s32.totalorder %s14, 1
      %p74 = scmp.ne.s32.totalorder %s69, %s71
      %p75 = scmp.eq.s32.totalorder %s14, 0
      %p76 = por %p74, %p75
      %p77 = scmp.ne.s32.totalorder %s69, %s71
      %p78 = scmp.eq.s32.totalorder %s19, 1
      %p79 = por %p77, %p78
      %p80 = scmp.ne.s32.totalorder %s71, %s72
      %p81 = scmp.eq.s32.totalorder %s19, 0
      %p82 = por %p80, %p81
      %p83 = scmp.ne.s32.totalorder %s71, %s72
      %p84 = scmp.eq.s32.totalorder %s20, 1
      %p85 = por %p83, %p84
      %p87 = scmp.ne.s32.totalorder %s72, %s86
      %p88 = scmp.eq.s32.totalorder %s20, 0
      %p89 = por %p87, %p88
      %s90 = ssub.s32 %s14, %s21
      %p91 = scmp.eq.s32.totalorder %s90, 0
      %s93 = sadd.s32 %s92, 1
      %s94 = scalar_select %p91, %s92, %s93
      %p97 = pneg %p91
      %p98 = scmp.eq.s32.totalorder %s14, 1
      %p99 = por %p97, %p98
      %p100 = scmp.ne.s32.totalorder %s92, %s95
      %p101 = scmp.eq.s32.totalorder %s14, 0
      %p102 = por %p100, %p101
      %p103 = scmp.ne.s32.totalorder %s92, %s95
      %p104 = scmp.eq.s32.totalorder %s19, 1
      %p105 = por %p103, %p104
      %p106 = scmp.ne.s32.totalorder %s95, %s96
      %p107 = scmp.eq.s32.totalorder %s19, 0
      %p108 = por %p106, %p107
      %p109 = scmp.ne.s32.totalorder %s95, %s96
      %p110 = scmp.eq.s32.totalorder %s20, 1
      %p111 = por %p109, %p110
      %p113 = scmp.ne.s32.totalorder %s96, %s112
      %p114 = scmp.eq.s32.totalorder %s20, 0
      %p115 = por %p113, %p114
      %s116 = ssub.s32 %s14, %s21
      %p117 = scmp.eq.s32.totalorder %s116, 0
      %s119 = sadd.s32 %s118, 1
      %s120 = scalar_select %p117, %s118, %s119
      %p123 = pneg %p117
      %p124 = scmp.eq.s32.totalorder %s14, 1
      %p125 = por %p123, %p124
      %p126 = scmp.ne.s32.totalorder %s118, %s121
      %p127 = scmp.eq.s32.totalorder %s14, 0
      %p128 = por %p126, %p127
      %p129 = scmp.ne.s32.totalorder %s118, %s121
      %p130 = scmp.eq.s32.totalorder %s19, 1
      %p131 = por %p129, %p130
      %p132 = scmp.ne.s32.totalorder %s121, %s122
      %p133 = scmp.eq.s32.totalorder %s19, 0
      %p134 = por %p132, %p133
      %p135 = scmp.ne.s32.totalorder %s121, %s122
      %p136 = scmp.eq.s32.totalorder %s20, 1
      %p137 = por %p135, %p136
      %p139 = scmp.ne.s32.totalorder %s122, %s138
      %p140 = scmp.eq.s32.totalorder %s20, 0
      %p141 = por %p139, %p140
      %p142 = scmp.le.s32.totalorder 1, %s14
      %p143 = scmp.lt.s32.totalorder %s14, 3
      %p144 = pnand %p142, %p143
      %p145 = pneg %p144
      // Predicated region
      $region9: #{tpu_custom_call.1} parent=5 // pred_check
        _
      $region10: #{tpu_custom_call.1} parent=5 // pred_check_branch
        %147 = sbr.rel (%p144) target = $region12
      $region11: #{tpu_custom_call.1} parent=5 // pred_region
        %s148 = ssub.s32 %s14, 1
        // Predicated region
        $region13: #{tpu_custom_call.1} parent=11 // pred_check
          %p149 = pneg %p61
        $region14: #{tpu_custom_call.1} parent=11 // pred_check_branch
          %151 = sbr.rel (%p149) target = $region16
        $region15: #{tpu_custom_call.1} parent=11 // pred_region
          _
        $region16: #{tpu_custom_call.1} parent=11 // pred_fallthru
          _
        // Predicated region
        $region17: #{tpu_custom_call.1} parent=11 // pred_check
          %p152 = pneg %p82
        $region18: #{tpu_custom_call.1} parent=11 // pred_check_branch
          %154 = sbr.rel (%p152) target = $region20
        $region19: #{tpu_custom_call.1} parent=11 // pred_region
          _
        $region20: #{tpu_custom_call.1} parent=11 // pred_fallthru
          _
      $region12: #{tpu_custom_call.1} parent=5 // pred_fallthru
        _
      %p155 = scmp.lt.s32.totalorder %s14, 2
      // Predicated region
      $region21: #{tpu_custom_call.1} parent=5 // pred_check
        %p156 = pneg %p155
      $region22: #{tpu_custom_call.1} parent=5 // pred_check_branch
        %158 = sbr.rel (%p156) target = $region24
      $region23: #{tpu_custom_call.1} parent=5 // pred_region
        // Predicated region
        $region25: #{tpu_custom_call.1} parent=23 // pred_check
          %p159 = pneg %p34
        $region26: #{tpu_custom_call.1} parent=23 // pred_check_branch
          %161 = sbr.rel (%p159) target = $region28
        $region27: #{tpu_custom_call.1} parent=23 // pred_region
          %s162 = sand.u32 %s24, 1
          %s163 = scalar_lea.sflag [#allocation3], %s162
          %s164 = sand.u32 %s24, 1
          %s165 = smul.addr %s164, 64
          %s166 = scalar_lea.vmem [#allocation2], %s165
          %s167 = smul.u32 4, %s14
          %s169 = ssub.s32 1024, 1024
          %170 = vsyncadd %s163, %s169
          %s171 = smul.addr %s167, 2
          %s172 = smul.addr %s171, 128
          %s173 = scalar_lea.hbm %s0, %s172
          %s174 = sshll.u32 %s166, 4
          %s175 = int_to_ptr.vmem [resolvable:$true] %s174
          %180 = dma.hbm_to_vmem [thread:$0]  %s173, 1024, %s175, %s163, 128, 128, 8
        $region28: #{tpu_custom_call.1} parent=23 // pred_fallthru
          _
      $region24: #{tpu_custom_call.1} parent=5 // pred_fallthru
        _
      %p181 = scmp.le.s32.totalorder 1, %s14
      %p182 = scmp.lt.s32.totalorder %s14, 3
      %p183 = pnand %p181, %p182
      %p184 = pneg %p183
      // Predicated region
      $region29: #{tpu_custom_call.1} parent=5 // pred_check
        _
      $region30: #{tpu_custom_call.1} parent=5 // pred_check_branch
        %186 = sbr.rel (%p183) target = $region32
      $region31: #{tpu_custom_call.1} parent=5 // pred_region
        %s187 = ssub.s32 %s14, 1
        %s188 = sand.u32 %s27, 1
        %s189 = scalar_lea.sflag [#allocation3], %s188
        %s190 = sand.u32 %s27, 1
        %s191 = smul.addr %s190, 64
        %s192 = scalar_lea.vmem [#allocation2], %s191
        // Predicated region
        $region33: #{tpu_custom_call.1} parent=31 // pred_check
          %p193 = pneg %p40
        $region34: #{tpu_custom_call.1} parent=31 // pred_check_branch
          %195 = sbr.rel (%p193) target = $region36
        $region35: #{tpu_custom_call.1} parent=31 // pred_region
          %196 = dma.done %s189, 1024
        $region36: #{tpu_custom_call.1} parent=31 // pred_fallthru
          _
        %s197 = sand.u32 %s27, 1
        %s198 = scalar_lea.sflag [#allocation3], %s197
        %s199 = sand.u32 %s27, 1
        %s200 = smul.addr %s199, 64
        %s201 = scalar_lea.vmem [#allocation2], %s200
        %p202 = pneg %p40
        %p203 = pneg %p37
        %p204 = pneg %p61
        %p205 = pneg %p58
        %p206 = pneg %p82
        %p207 = pneg %p79
        %p208 = pneg %p108
        %p209 = pneg %p105
        %s210 = smul.u32 4, %s19
        %p211 = scmp.lt.s32.totalorder %s210, 7
        %s212 = scalar_select %p211, %s210, 7
        %s213 = smul.addr %s212, 2
        %s214 = smul.addr %s213, 8
        %s215 = scalar_lea.vmem %s3, %s214
        %p216 = pneg %p134
        %p217 = pneg %p131
        %s218 = smul.u32 4, %s19
        %p219 = scmp.lt.s32.totalorder %s218, 7
        %s220 = scalar_select %p219, %s218, 7
        %s221 = smul.addr %s220, 2
        %s222 = smul.addr %s221, 8
        %s223 = scalar_lea.vmem %s4, %s222
        %s224 = smul.u32 4, %s19
        %s225 = smul.u32 4, %s19
        %p226 = scmp.lt.s32.totalorder %s225, 7
        %s227 = scalar_select %p226, %s225, 7
        %s228 = smul.addr %s227, 2
        %s229 = smul.addr %s228, 8
        %s230 = scalar_lea.vmem %s3, %s229
        %s231 = smul.u32 4, %s19
        %s232 = smul.u32 4, %s19
        %p233 = scmp.lt.s32.totalorder %s232, 7
        %s234 = scalar_select %p233, %s232, 7
        %s235 = smul.addr %s234, 2
        %s236 = smul.addr %s235, 8
        %s237 = scalar_lea.vmem %s4, %s236
        %s238 = smul.u32 4, %s19
        %v239 = vld [vmem:[%s192] sm:$0xff]
        %v240 = vld [vmem:[%s192 + $0x8] sm:$0xff]
        %v241 = vld [vmem:[%s192 + $0x10] sm:$0xff]
        %v242 = vld [vmem:[%s192 + $0x18] sm:$0xff]
        %v243 = vld [vmem:[%s192 + $0x20] sm:$0xff]
        %v244 = vld [vmem:[%s192 + $0x28] sm:$0xff]
        %v245 = vld [vmem:[%s192 + $0x30] sm:$0xff]
        %v246 = vld [vmem:[%s192 + $0x38] sm:$0xff]
        %v247 = vld [vmem:[%s1] sm:$0xff]
        %v248 = vld [vmem:[%s1 + $0x8] sm:$0xff]
        %vm249 = vcmask 130048
        %v251 = vsel %vm249, %v239, 0
        %v254 = vsel %vm249, %v240, 0
        %v257 = vsel %vm249, %v241, 0
        %v260 = vsel %vm249, %v242, 0
        %v263 = vsel %vm249, %v243, 0
        %v266 = vsel %vm249, %v244, 0
        %v269 = vsel %vm249, %v245, 0
        %v272 = vsel %vm249, %v246, 0
        %274 = vmatprep.subr.mxu0 0.0
        %v275 = vand.u32 %v247, 4294901760
        %276 = vmatpush1.msra.mxu0 %v275
        %277 = vmatprep.subr.mxu0 0.0
        %v278 = vand.u32 %v248, 4294901760
        %279 = vmatpush1.msra.mxu0 %v278
        %280 = vmatprep.subr.mxu0 0.0
        %281 = vmatpush1.msra.mxu0 0.0
        %282 = vmatprep.subr.mxu0 0.0
        %283 = vmatpush1.msra.mxu0 0.0
        %284 = vmatprep.subr.mxu0 0.0
        %285 = vmatpush1.msra.mxu0 0.0
        %286 = vmatprep.subr.mxu0 0.0
        %287 = vmatpush1.msra.mxu0 0.0
        %288 = vmatprep.subr.mxu0 0.0
        %289 = vmatpush1.msra.mxu0 0.0
        %290 = vmatprep.subr.mxu0 0.0
        %291 = vmatpush1.msra.mxu0 0.0
        %292 = vmatprep.subr.mxu0 0.0
        %293 = vmatpush1.msra.mxu0 0.0
        %294 = vmatprep.subr.mxu0 0.0
        %295 = vmatpush1.msra.mxu0 0.0
        %296 = vmatprep.subr.mxu0 0.0
        %297 = vmatpush1.msra.mxu0 0.0
        %298 = vmatprep.subr.mxu0 0.0
        %299 = vmatpush1.msra.mxu0 0.0
        %300 = vmatprep.subr.mxu0 0.0
        %301 = vmatpush1.msra.mxu0 0.0
        %302 = vmatprep.subr.mxu0 0.0
        %303 = vmatpush1.msra.mxu0 0.0
        %304 = vmatprep.subr.mxu0 0.0
        %305 = vmatpush1.msra.mxu0 0.0
        %306 = vmatprep.subr.mxu0 0.0
        %307 = vmatpush1.msra.mxu0 0.0
        %308 = vmatprep.subr.mxu0 0.0
        %309 = vmatpush1.msra.mxu0 0.0
        %310 = vmatprep.subr.mxu0 0.0
        %311 = vmatpush1.msra.mxu0 0.0
        %312 = vmatprep.subr.mxu0 0.0
        %313 = vmatpush1.msra.mxu0 0.0
        %314 = vmatprep.subr.mxu0 0.0
        %315 = vmatpush1.msra.mxu0 0.0
        %316 = vmatprep.subr.mxu0 0.0
        %317 = vmatpush1.msra.mxu0 0.0
        %318 = vmatprep.subr.mxu0 0.0
        %319 = vmatpush1.msra.mxu0 0.0
        %320 = vmatprep.subr.mxu0 0.0
        %321 = vmatpush1.msra.mxu0 0.0
        %322 = vmatprep.subr.mxu0 0.0
        %323 = vmatpush1.msra.mxu0 0.0
        %324 = vmatprep.subr.mxu0 0.0
        %325 = vmatpush1.msra.mxu0 0.0
        %326 = vmatprep.subr.mxu0 0.0
        %327 = vmatpush1.msra.mxu0 0.0
        %328 = vmatprep.subr.mxu0 0.0
        %329 = vmatpush1.msra.mxu0 0.0
        %330 = vmatprep.subr.mxu0 0.0
        %331 = vmatpush1.msra.mxu0 0.0
        %332 = vmatprep.subr.mxu0 0.0
        %333 = vmatpush1.msra.mxu0 0.0
        %334 = vmatprep.subr.mxu0 0.0
        %335 = vmatpush1.msra.mxu0 0.0
        %336 = vmatprep.subr.mxu0 0.0
        %337 = vmatpush1.msra.mxu0 0.0
        %338 = vmatprep.subr.mxu0 0.0
        %339 = vmatpush1.msra.mxu0 0.0
        %340 = vmatprep.mubr.f32.mxu0 0.0
        %v341 = vand.u32 %v251, 4294901760
        %v342 = vsub.f32 %v251, %v341
        %v343 = vand.u32 %v342, 4294901760
        %v344 = vsub.f32 %v342, %v343
        %v345 = vand.u32 %v344, 4294901760
        %346 = vmatmul.mubr.f32.gmra.mrb[0].mxu0 %v345
        %v347 = vpop.f32.mrb[0].mxu0
        %v348 = vadd.f32 0.0, %v347
        %v349 = vpop.f32.mrb[0].mxu0
        %350 = vmatprep.mubr.f32.mxu0 0.0
        %v351 = vand.u32 %v254, 4294901760
        %v352 = vsub.f32 %v254, %v351
        %v353 = vand.u32 %v352, 4294901760
        %v354 = vsub.f32 %v352, %v353
        %v355 = vand.u32 %v354, 4294901760
        %356 = vmatmul.mubr.f32.gmra.mrb[0].mxu0 %v355
        %v357 = vpop.f32.mrb[0].mxu0
        %v358 = vadd.f32 0.0, %v357
        %v359 = vpop.f32.mrb[0].mxu0
        %360 = vmatprep.mubr.f32.mxu0 0.0
        %v361 = vand.u32 %v257, 4294901760
        %v362 = vsub.f32 %v257, %v361
        %v363 = vand.u32 %v362, 4294901760
        %v364 = vsub.f32 %v362, %v363
        %v365 = vand.u32 %v364, 4294901760
        %366 = vmatmul.mubr.f32.gmra.mrb[0].mxu0 %v365
        %v367 = vpop.f32.mrb[0].mxu0
        %v368 = vadd.f32 0.0, %v367
        %v369 = vpop.f32.mrb[0].mxu0
        %370 = vmatprep.mubr.f32.mxu0 0.0
        %v371 = vand.u32 %v260, 4294901760
        %v372 = vsub.f32 %v260, %v371
        %v373 = vand.u32 %v372, 4294901760
        %v374 = vsub.f32 %v372, %v373
        %v375 = vand.u32 %v374, 4294901760
        %376 = vmatmul.mubr.f32.gmra.mrb[0].mxu0 %v375
        %v377 = vpop.f32.mrb[0].mxu0
        %v378 = vadd.f32 0.0, %v377
        %v379 = vpop.f32.mrb[0].mxu0
        %380 = vmatprep.mubr.f32.mxu0 0.0
        %v381 = vand.u32 %v263, 4294901760
        %v382 = vsub.f32 %v263, %v381
        %v383 = vand.u32 %v382, 4294901760
        %v384 = vsub.f32 %v382, %v383
        %v385 = vand.u32 %v384, 4294901760
        %386 = vmatmul.mubr.f32.gmra.mrb[0].mxu0 %v385
        %v387 = vpop.f32.mrb[0].mxu0
        %v388 = vadd.f32 0.0, %v387
        %v389 = vpop.f32.mrb[0].mxu0
        %390 = vmatprep.mubr.f32.mxu0 0.0
        %v391 = vand.u32 %v266, 4294901760
        %v392 = vsub.f32 %v266, %v391
        %v393 = vand.u32 %v392, 4294901760
        %v394 = vsub.f32 %v392, %v393
        %v395 = vand.u32 %v394, 4294901760
        %396 = vmatmul.mubr.f32.gmra.mrb[0].mxu0 %v395
        %v397 = vpop.f32.mrb[0].mxu0
        %v398 = vadd.f32 0.0, %v397
        %v399 = vpop.f32.mrb[0].mxu0
        %400 = vmatprep.mubr.f32.mxu0 0.0
        %v401 = vand.u32 %v269, 4294901760
        %v402 = vsub.f32 %v269, %v401
        %v403 = vand.u32 %v402, 4294901760
        %v404 = vsub.f32 %v402, %v403
        %v405 = vand.u32 %v404, 4294901760
        %406 = vmatmul.mubr.f32.gmra.mrb[0].mxu0 %v405
        %v407 = vpop.f32.mrb[0].mxu0
        %v408 = vadd.f32 0.0, %v407
        %v409 = vpop.f32.mrb[0].mxu0
        %410 = vmatprep.mubr.f32.mxu0 0.0
        %v411 = vand.u32 %v272, 4294901760
        %v412 = vsub.f32 %v272, %v411
        %v413 = vand.u32 %v412, 4294901760
        %v414 = vsub.f32 %v412, %v413
        %v415 = vand.u32 %v414, 4294901760
        %416 = vmatmul.mubr.f32.gmra.mrb[0].mxu0 %v415
        %v417 = vpop.f32.mrb[0].mxu0
        %v418 = vadd.f32 0.0, %v417
        %v419 = vpop.f32.mrb[0].mxu0
        %420 = vdwg.mxu0
        %421 = vmatprep.subr.mxu0 0.0
        %v422 = vand.u32 %v247, 4294901760
        %v423 = vsub.f32 %v247, %v422
        %v424 = vand.u32 %v423, 4294901760
        %v425 = vsub.f32 %v423, %v424
        %v426 = vand.u32 %v425, 4294901760
        %427 = vmatpush1.msra.mxu0 %v426
        %428 = vmatprep.subr.mxu0 0.0
        %v429 = vand.u32 %v248, 4294901760
        %v430 = vsub.f32 %v248, %v429
        %v431 = vand.u32 %v430, 4294901760
        %v432 = vsub.f32 %v430, %v431
        %v433 = vand.u32 %v432, 4294901760
        %434 = vmatpush1.msra.mxu0 %v433
        %435 = vmatprep.subr.mxu0 0.0
        %436 = vmatpush1.msra.mxu0 0.0
        %437 = vmatprep.subr.mxu0 0.0
        %438 = vmatpush1.msra.mxu0 0.0
        %439 = vmatprep.subr.mxu0 0.0
        %440 = vmatpush1.msra.mxu0 0.0
        %441 = vmatprep.subr.mxu0 0.0
        %442 = vmatpush1.msra.mxu0 0.0
        %443 = vmatprep.subr.mxu0 0.0
        %444 = vmatpush1.msra.mxu0 0.0
        %445 = vmatprep.subr.mxu0 0.0
        %446 = vmatpush1.msra.mxu0 0.0
        %447 = vmatprep.subr.mxu0 0.0
        %448 = vmatpush1.msra.mxu0 0.0
        %449 = vmatprep.subr.mxu0 0.0
        %450 = vmatpush1.msra.mxu0 0.0
        %451 = vmatprep.subr.mxu0 0.0
        %452 = vmatpush1.msra.mxu0 0.0
        %453 = vmatprep.subr.mxu0 0.0
        %454 = vmatpush1.msra.mxu0 0.0
        %455 = vmatprep.subr.mxu0 0.0
        %456 = vmatpush1.msra.mxu0 0.0
        %457 = vmatprep.subr.mxu0 0.0
        %458 = vmatpush1.msra.mxu0 0.0
        %459 = vmatprep.subr.mxu0 0.0
        %460 = vmatpush1.msra.mxu0 0.0
        %461 = vmatprep.subr.mxu0 0.0
        %462 = vmatpush1.msra.mxu0 0.0
        %463 = vmatprep.subr.mxu0 0.0
        %464 = vmatpush1.msra.mxu0 0.0
        %465 = vmatprep.subr.mxu0 0.0
        %466 = vmatpush1.msra.mxu0 0.0
        %467 = vmatprep.subr.mxu0 0.0
        %468 = vmatpush1.msra.mxu0 0.0
        %469 = vmatprep.subr.mxu0 0.0
        %470 = vmatpush1.msra.mxu0 0.0
        %471 = vmatprep.subr.mxu0 0.0
        %472 = vmatpush1.msra.mxu0 0.0
        %473 = vmatprep.subr.mxu0 0.0
        %474 = vmatpush1.msra.mxu0 0.0
        %475 = vmatprep.subr.mxu0 0.0
        %476 = vmatpush1.msra.mxu0 0.0
        %477 = vmatprep.subr.mxu0 0.0
        %478 = vmatpush1.msra.mxu0 0.0
        %479 = vmatprep.subr.mxu0 0.0
        %480 = vmatpush1.msra.mxu0 0.0
        %481 = vmatprep.subr.mxu0 0.0
        %482 = vmatpush1.msra.mxu0 0.0
        %483 = vmatprep.subr.mxu0 0.0
        %484 = vmatpush1.msra.mxu0 0.0
        %485 = vmatprep.subr.mxu0 0.0
        %486 = vmatpush1.msra.mxu0 0.0
        %487 = vmatprep.subr.mxu0 0.0
        %488 = vmatpush1.msra.mxu0 0.0
        %489 = vmatprep.subr.mxu0 0.0
        %490 = vmatpush1.msra.mxu0 0.0
        %491 = vmatprep.subr.mxu0 0.0
        %492 = vmatpush1.msra.mxu0 0.0
        %493 = vmatprep.subr.mxu0 0.0
        %494 = vmatpush1.msra.mxu0 0.0
        %495 = vmatprep.mubr.f32.mxu0 0.0
        %v496 = vand.u32 %v251, 4294901760
        %497 = vmatmul.mubr.f32.gmra.mrb[0].mxu0 %v496
        %v498 = vpop.f32.mrb[0].mxu0
        %v499 = vadd.f32 %v348, %v498
        %v500 = vpop.f32.mrb[0].mxu0
        %501 = vmatprep.mubr.f32.mxu0 0.0
        %v502 = vand.u32 %v254, 4294901760
        %503 = vmatmul.mubr.f32.gmra.mrb[0].mxu0 %v502
        %v504 = vpop.f32.mrb[0].mxu0
        %v505 = vadd.f32 %v358, %v504
        %v506 = vpop.f32.mrb[0].mxu0
        %507 = vmatprep.mubr.f32.mxu0 0.0
        %v508 = vand.u32 %v257, 4294901760
        %509 = vmatmul.mubr.f32.gmra.mrb[0].mxu0 %v508
        %v510 = vpop.f32.mrb[0].mxu0
        %v511 = vadd.f32 %v368, %v510
        %v512 = vpop.f32.mrb[0].mxu0
        %513 = vmatprep.mubr.f32.mxu0 0.0
        %v514 = vand.u32 %v260, 4294901760
        %515 = vmatmul.mubr.f32.gmra.mrb[0].mxu0 %v514
        %v516 = vpop.f32.mrb[0].mxu0
        %v517 = vadd.f32 %v378, %v516
        %v518 = vpop.f32.mrb[0].mxu0
        %519 = vmatprep.mubr.f32.mxu0 0.0
        %v520 = vand.u32 %v263, 4294901760
        %521 = vmatmul.mubr.f32.gmra.mrb[0].mxu0 %v520
        %v522 = vpop.f32.mrb[0].mxu0
        %v523 = vadd.f32 %v388, %v522
        %v524 = vpop.f32.mrb[0].mxu0
        %525 = vmatprep.mubr.f32.mxu0 0.0
        %v526 = vand.u32 %v266, 4294901760
        %527 = vmatmul.mubr.f32.gmra.mrb[0].mxu0 %v526
        %v528 = vpop.f32.mrb[0].mxu0
        %v529 = vadd.f32 %v398, %v528
        %v530 = vpop.f32.mrb[0].mxu0
        %531 = vmatprep.mubr.f32.mxu0 0.0
        %v532 = vand.u32 %v269, 4294901760
        %533 = vmatmul.mubr.f32.gmra.mrb[0].mxu0 %v532
        %v534 = vpop.f32.mrb[0].mxu0
        %v535 = vadd.f32 %v408, %v534
        %v536 = vpop.f32.mrb[0].mxu0
        %537 = vmatprep.mubr.f32.mxu0 0.0
        %v538 = vand.u32 %v272, 4294901760
        %539 = vmatmul.mubr.f32.gmra.mrb[0].mxu0 %v538
        %v540 = vpop.f32.mrb[0].mxu0
        %v541 = vadd.f32 %v418, %v540
        %v542 = vpop.f32.mrb[0].mxu0
        %543 = vdwg.mxu0
        %544 = vmatprep.subr.mxu0 0.0
        %v545 = vand.u32 %v247, 4294901760
        %v546 = vsub.f32 %v247, %v545
        %547 = vmatpush1.msra.mxu0 %v546
        %548 = vmatprep.subr.mxu0 0.0
        %v549 = vand.u32 %v248, 4294901760
        %v550 = vsub.f32 %v248, %v549
        %551 = vmatpush1.msra.mxu0 %v550
        %552 = vmatprep.subr.mxu0 0.0
        %553 = vmatpush1.msra.mxu0 0.0
        %554 = vmatprep.subr.mxu0 0.0
        %555 = vmatpush1.msra.mxu0 0.0
        %556 = vmatprep.subr.mxu0 0.0
        %557 = vmatpush1.msra.mxu0 0.0
        %558 = vmatprep.subr.mxu0 0.0
        %559 = vmatpush1.msra.mxu0 0.0
        %560 = vmatprep.subr.mxu0 0.0
        %561 = vmatpush1.msra.mxu0 0.0
        %562 = vmatprep.subr.mxu0 0.0
        %563 = vmatpush1.msra.mxu0 0.0
        %564 = vmatprep.subr.mxu0 0.0
        %565 = vmatpush1.msra.mxu0 0.0
        %566 = vmatprep.subr.mxu0 0.0
        %567 = vmatpush1.msra.mxu0 0.0
        %568 = vmatprep.subr.mxu0 0.0
        %569 = vmatpush1.msra.mxu0 0.0
        %570 = vmatprep.subr.mxu0 0.0
        %571 = vmatpush1.msra.mxu0 0.0
        %572 = vmatprep.subr.mxu0 0.0
        %573 = vmatpush1.msra.mxu0 0.0
        %574 = vmatprep.subr.mxu0 0.0
        %575 = vmatpush1.msra.mxu0 0.0
        %576 = vmatprep.subr.mxu0 0.0
        %577 = vmatpush1.msra.mxu0 0.0
        %578 = vmatprep.subr.mxu0 0.0
        %579 = vmatpush1.msra.mxu0 0.0
        %580 = vmatprep.subr.mxu0 0.0
        %581 = vmatpush1.msra.mxu0 0.0
        %582 = vmatprep.subr.mxu0 0.0
        %583 = vmatpush1.msra.mxu0 0.0
        %584 = vmatprep.subr.mxu0 0.0
        %585 = vmatpush1.msra.mxu0 0.0
        %586 = vmatprep.subr.mxu0 0.0
        %587 = vmatpush1.msra.mxu0 0.0
        %588 = vmatprep.subr.mxu0 0.0
        %589 = vmatpush1.msra.mxu0 0.0
        %590 = vmatprep.subr.mxu0 0.0
        %591 = vmatpush1.msra.mxu0 0.0
        %592 = vmatprep.subr.mxu0 0.0
        %593 = vmatpush1.msra.mxu0 0.0
        %594 = vmatprep.subr.mxu0 0.0
        %595 = vmatpush1.msra.mxu0 0.0
        %596 = vmatprep.subr.mxu0 0.0
        %597 = vmatpush1.msra.mxu0 0.0
        %598 = vmatprep.subr.mxu0 0.0
        %599 = vmatpush1.msra.mxu0 0.0
        %600 = vmatprep.subr.mxu0 0.0
        %601 = vmatpush1.msra.mxu0 0.0
        %602 = vmatprep.subr.mxu0 0.0
        %603 = vmatpush1.msra.mxu0 0.0
        %604 = vmatprep.subr.mxu0 0.0
        %605 = vmatpush1.msra.mxu0 0.0
        %606 = vmatprep.subr.mxu0 0.0
        %607 = vmatpush1.msra.mxu0 0.0
        %608 = vmatprep.subr.mxu0 0.0
        %609 = vmatpush1.msra.mxu0 0.0
        %610 = vmatprep.subr.mxu0 0.0
        %611 = vmatpush1.msra.mxu0 0.0
        %612 = vmatprep.mubr.f32.mxu0 0.0
        %v613 = vand.u32 %v251, 4294901760
        %v614 = vsub.f32 %v251, %v613
        %615 = vmatmul.mubr.f32.gmra.mrb[0].mxu0 %v614
        %v616 = vpop.f32.mrb[0].mxu0
        %v617 = vadd.f32 %v499, %v616
        %v618 = vpop.f32.mrb[0].mxu0
        %619 = vmatprep.mubr.f32.mxu0 0.0
        %v620 = vand.u32 %v254, 4294901760
        %v621 = vsub.f32 %v254, %v620
        %622 = vmatmul.mubr.f32.gmra.mrb[0].mxu0 %v621
        %v623 = vpop.f32.mrb[0].mxu0
        %v624 = vadd.f32 %v505, %v623
        %v625 = vpop.f32.mrb[0].mxu0
        %626 = vmatprep.mubr.f32.mxu0 0.0
        %v627 = vand.u32 %v257, 4294901760
        %v628 = vsub.f32 %v257, %v627
        %629 = vmatmul.mubr.f32.gmra.mrb[0].mxu0 %v628
        %v630 = vpop.f32.mrb[0].mxu0
        %v631 = vadd.f32 %v511, %v630
        %v632 = vpop.f32.mrb[0].mxu0
        %633 = vmatprep.mubr.f32.mxu0 0.0
        %v634 = vand.u32 %v260, 4294901760
        %v635 = vsub.f32 %v260, %v634
        %636 = vmatmul.mubr.f32.gmra.mrb[0].mxu0 %v635
        %v637 = vpop.f32.mrb[0].mxu0
        %v638 = vadd.f32 %v517, %v637
        %v639 = vpop.f32.mrb[0].mxu0
        %640 = vmatprep.mubr.f32.mxu0 0.0
        %v641 = vand.u32 %v263, 4294901760
        %v642 = vsub.f32 %v263, %v641
        %643 = vmatmul.mubr.f32.gmra.mrb[0].mxu0 %v642
        %v644 = vpop.f32.mrb[0].mxu0
        %v645 = vadd.f32 %v523, %v644
        %v646 = vpop.f32.mrb[0].mxu0
        %647 = vmatprep.mubr.f32.mxu0 0.0
        %v648 = vand.u32 %v266, 4294901760
        %v649 = vsub.f32 %v266, %v648
        %650 = vmatmul.mubr.f32.gmra.mrb[0].mxu0 %v649
        %v651 = vpop.f32.mrb[0].mxu0
        %v652 = vadd.f32 %v529, %v651
        %v653 = vpop.f32.mrb[0].mxu0
        %654 = vmatprep.mubr.f32.mxu0 0.0
        %v655 = vand.u32 %v269, 4294901760
        %v656 = vsub.f32 %v269, %v655
        %657 = vmatmul.mubr.f32.gmra.mrb[0].mxu0 %v656
        %v658 = vpop.f32.mrb[0].mxu0
        %v659 = vadd.f32 %v535, %v658
        %v660 = vpop.f32.mrb[0].mxu0
        %661 = vmatprep.mubr.f32.mxu0 0.0
        %v662 = vand.u32 %v272, 4294901760
        %v663 = vsub.f32 %v272, %v662
        %664 = vmatmul.mubr.f32.gmra.mrb[0].mxu0 %v663
        %v665 = vpop.f32.mrb[0].mxu0
        %v666 = vadd.f32 %v541, %v665
        %v667 = vpop.f32.mrb[0].mxu0
        %668 = vdwg.mxu0
        %669 = vmatprep.subr.mxu0 0.0
        %v670 = vand.u32 %v247, 4294901760
        %671 = vmatpush1.msra.mxu0 %v670
        %672 = vmatprep.subr.mxu0 0.0
        %v673 = vand.u32 %v248, 4294901760
        %674 = vmatpush1.msra.mxu0 %v673
        %675 = vmatprep.subr.mxu0 0.0
        %676 = vmatpush1.msra.mxu0 0.0
        %677 = vmatprep.subr.mxu0 0.0
        %678 = vmatpush1.msra.mxu0 0.0
        %679 = vmatprep.subr.mxu0 0.0
        %680 = vmatpush1.msra.mxu0 0.0
        %681 = vmatprep.subr.mxu0 0.0
        %682 = vmatpush1.msra.mxu0 0.0
        %683 = vmatprep.subr.mxu0 0.0
        %684 = vmatpush1.msra.mxu0 0.0
        %685 = vmatprep.subr.mxu0 0.0
        %686 = vmatpush1.msra.mxu0 0.0
        %687 = vmatprep.subr.mxu0 0.0
        %688 = vmatpush1.msra.mxu0 0.0
        %689 = vmatprep.subr.mxu0 0.0
        %690 = vmatpush1.msra.mxu0 0.0
        %691 = vmatprep.subr.mxu0 0.0
        %692 = vmatpush1.msra.mxu0 0.0
        %693 = vmatprep.subr.mxu0 0.0
        %694 = vmatpush1.msra.mxu0 0.0
        %695 = vmatprep.subr.mxu0 0.0
        %696 = vmatpush1.msra.mxu0 0.0
        %697 = vmatprep.subr.mxu0 0.0
        %698 = vmatpush1.msra.mxu0 0.0
        %699 = vmatprep.subr.mxu0 0.0
        %700 = vmatpush1.msra.mxu0 0.0
        %701 = vmatprep.subr.mxu0 0.0
        %702 = vmatpush1.msra.mxu0 0.0
        %703 = vmatprep.subr.mxu0 0.0
        %704 = vmatpush1.msra.mxu0 0.0
        %705 = vmatprep.subr.mxu0 0.0
        %706 = vmatpush1.msra.mxu0 0.0
        %707 = vmatprep.subr.mxu0 0.0
        %708 = vmatpush1.msra.mxu0 0.0
        %709 = vmatprep.subr.mxu0 0.0
        %710 = vmatpush1.msra.mxu0 0.0
        %711 = vmatprep.subr.mxu0 0.0
        %712 = vmatpush1.msra.mxu0 0.0
        %713 = vmatprep.subr.mxu0 0.0
        %714 = vmatpush1.msra.mxu0 0.0
        %715 = vmatprep.subr.mxu0 0.0
        %716 = vmatpush1.msra.mxu0 0.0
        %717 = vmatprep.subr.mxu0 0.0
        %718 = vmatpush1.msra.mxu0 0.0
        %719 = vmatprep.subr.mxu0 0.0
        %720 = vmatpush1.msra.mxu0 0.0
        %721 = vmatprep.subr.mxu0 0.0
        %722 = vmatpush1.msra.mxu0 0.0
        %723 = vmatprep.subr.mxu0 0.0
        %724 = vmatpush1.msra.mxu0 0.0
        %725 = vmatprep.subr.mxu0 0.0
        %726 = vmatpush1.msra.mxu0 0.0
        %727 = vmatprep.subr.mxu0 0.0
        %728 = vmatpush1.msra.mxu0 0.0
        %729 = vmatprep.subr.mxu0 0.0
        %730 = vmatpush1.msra.mxu0 0.0
        %731 = vmatprep.subr.mxu0 0.0
        %732 = vmatpush1.msra.mxu0 0.0
        %733 = vmatprep.subr.mxu0 0.0
        %734 = vmatpush1.msra.mxu0 0.0
        %735 = vmatprep.mubr.f32.mxu0 0.0
        %v736 = vand.u32 %v251, 4294901760
        %v737 = vsub.f32 %v251, %v736
        %v738 = vand.u32 %v737, 4294901760
        %739 = vmatmul.mubr.f32.gmra.mrb[0].mxu0 %v738
        %v740 = vpop.f32.mrb[0].mxu0
        %v741 = vadd.f32 %v617, %v740
        %v742 = vpop.f32.mrb[0].mxu0
        %743 = vmatprep.mubr.f32.mxu0 0.0
        %v744 = vand.u32 %v254, 4294901760
        %v745 = vsub.f32 %v254, %v744
        %v746 = vand.u32 %v745, 4294901760
        %747 = vmatmul.mubr.f32.gmra.mrb[0].mxu0 %v746
        %v748 = vpop.f32.mrb[0].mxu0
        %v749 = vadd.f32 %v624, %v748
        %v750 = vpop.f32.mrb[0].mxu0
        %751 = vmatprep.mubr.f32.mxu0 0.0
        %v752 = vand.u32 %v257, 4294901760
        %v753 = vsub.f32 %v257, %v752
        %v754 = vand.u32 %v753, 4294901760
        %755 = vmatmul.mubr.f32.gmra.mrb[0].mxu0 %v754
        %v756 = vpop.f32.mrb[0].mxu0
        %v757 = vadd.f32 %v631, %v756
        %v758 = vpop.f32.mrb[0].mxu0
        %759 = vmatprep.mubr.f32.mxu0 0.0
        %v760 = vand.u32 %v260, 4294901760
        %v761 = vsub.f32 %v260, %v760
        %v762 = vand.u32 %v761, 4294901760
        %763 = vmatmul.mubr.f32.gmra.mrb[0].mxu0 %v762
        %v764 = vpop.f32.mrb[0].mxu0
        %v765 = vadd.f32 %v638, %v764
        %v766 = vpop.f32.mrb[0].mxu0
        %767 = vmatprep.mubr.f32.mxu0 0.0
        %v768 = vand.u32 %v263, 4294901760
        %v769 = vsub.f32 %v263, %v768
        %v770 = vand.u32 %v769, 4294901760
        %771 = vmatmul.mubr.f32.gmra.mrb[0].mxu0 %v770
        %v772 = vpop.f32.mrb[0].mxu0
        %v773 = vadd.f32 %v645, %v772
        %v774 = vpop.f32.mrb[0].mxu0
        %775 = vmatprep.mubr.f32.mxu0 0.0
        %v776 = vand.u32 %v266, 4294901760
        %v777 = vsub.f32 %v266, %v776
        %v778 = vand.u32 %v777, 4294901760
        %779 = vmatmul.mubr.f32.gmra.mrb[0].mxu0 %v778
        %v780 = vpop.f32.mrb[0].mxu0
        %v781 = vadd.f32 %v652, %v780
        %v782 = vpop.f32.mrb[0].mxu0
        %783 = vmatprep.mubr.f32.mxu0 0.0
        %v784 = vand.u32 %v269, 4294901760
        %v785 = vsub.f32 %v269, %v784
        %v786 = vand.u32 %v785, 4294901760
        %787 = vmatmul.mubr.f32.gmra.mrb[0].mxu0 %v786
        %v788 = vpop.f32.mrb[0].mxu0
        %v789 = vadd.f32 %v659, %v788
        %v790 = vpop.f32.mrb[0].mxu0
        %791 = vmatprep.mubr.f32.mxu0 0.0
        %v792 = vand.u32 %v272, 4294901760
        %v793 = vsub.f32 %v272, %v792
        %v794 = vand.u32 %v793, 4294901760
        %795 = vmatmul.mubr.f32.gmra.mrb[0].mxu0 %v794
        %v796 = vpop.f32.mrb[0].mxu0
        %v797 = vadd.f32 %v666, %v796
        %v798 = vpop.f32.mrb[0].mxu0
        %799 = vdwg.mxu0
        %800 = vmatprep.subr.mxu0 0.0
        %v801 = vand.u32 %v247, 4294901760
        %v802 = vsub.f32 %v247, %v801
        %v803 = vand.u32 %v802, 4294901760
        %804 = vmatpush1.msra.mxu0 %v803
        %805 = vmatprep.subr.mxu0 0.0
        %v806 = vand.u32 %v248, 4294901760
        %v807 = vsub.f32 %v248, %v806
        %v808 = vand.u32 %v807, 4294901760
        %809 = vmatpush1.msra.mxu0 %v808
        %810 = vmatprep.subr.mxu0 0.0
        %811 = vmatpush1.msra.mxu0 0.0
        %812 = vmatprep.subr.mxu0 0.0
        %813 = vmatpush1.msra.mxu0 0.0
        %814 = vmatprep.subr.mxu0 0.0
        %815 = vmatpush1.msra.mxu0 0.0
        %816 = vmatprep.subr.mxu0 0.0
        %817 = vmatpush1.msra.mxu0 0.0
        %818 = vmatprep.subr.mxu0 0.0
        %819 = vmatpush1.msra.mxu0 0.0
        %820 = vmatprep.subr.mxu0 0.0
        %821 = vmatpush1.msra.mxu0 0.0
        %822 = vmatprep.subr.mxu0 0.0
        %823 = vmatpush1.msra.mxu0 0.0
        %824 = vmatprep.subr.mxu0 0.0
        %825 = vmatpush1.msra.mxu0 0.0
        %826 = vmatprep.subr.mxu0 0.0
        %827 = vmatpush1.msra.mxu0 0.0
        %828 = vmatprep.subr.mxu0 0.0
        %829 = vmatpush1.msra.mxu0 0.0
        %830 = vmatprep.subr.mxu0 0.0
        %831 = vmatpush1.msra.mxu0 0.0
        %832 = vmatprep.subr.mxu0 0.0
        %833 = vmatpush1.msra.mxu0 0.0
        %834 = vmatprep.subr.mxu0 0.0
        %835 = vmatpush1.msra.mxu0 0.0
        %836 = vmatprep.subr.mxu0 0.0
        %837 = vmatpush1.msra.mxu0 0.0
        %838 = vmatprep.subr.mxu0 0.0
        %839 = vmatpush1.msra.mxu0 0.0
        %840 = vmatprep.subr.mxu0 0.0
        %841 = vmatpush1.msra.mxu0 0.0
        %842 = vmatprep.subr.mxu0 0.0
        %843 = vmatpush1.msra.mxu0 0.0
        %844 = vmatprep.subr.mxu0 0.0
        %845 = vmatpush1.msra.mxu0 0.0
        %846 = vmatprep.subr.mxu0 0.0
        %847 = vmatpush1.msra.mxu0 0.0
        %848 = vmatprep.subr.mxu0 0.0
        %849 = vmatpush1.msra.mxu0 0.0
        %850 = vmatprep.subr.mxu0 0.0
        %851 = vmatpush1.msra.mxu0 0.0
        %852 = vmatprep.subr.mxu0 0.0
        %853 = vmatpush1.msra.mxu0 0.0
        %854 = vmatprep.subr.mxu0 0.0
        %855 = vmatpush1.msra.mxu0 0.0
        %856 = vmatprep.subr.mxu0 0.0
        %857 = vmatpush1.msra.mxu0 0.0
        %858 = vmatprep.subr.mxu0 0.0
        %859 = vmatpush1.msra.mxu0 0.0
        %860 = vmatprep.subr.mxu0 0.0
        %861 = vmatpush1.msra.mxu0 0.0
        %862 = vmatprep.subr.mxu0 0.0
        %863 = vmatpush1.msra.mxu0 0.0
        %864 = vmatprep.subr.mxu0 0.0
        %865 = vmatpush1.msra.mxu0 0.0
        %866 = vmatprep.subr.mxu0 0.0
        %867 = vmatpush1.msra.mxu0 0.0
        %868 = vmatprep.subr.mxu0 0.0
        %869 = vmatpush1.msra.mxu0 0.0
        %870 = vmatprep.mubr.f32.mxu0 0.0
        %v871 = vand.u32 %v251, 4294901760
        %872 = vmatmul.mubr.f32.gmra.mrb[0].mxu0 %v871
        %v873 = vpop.f32.mrb[0].mxu0
        %v874 = vadd.f32 %v741, %v873
        %v875 = vpop.f32.mrb[0].mxu0
        %876 = vmatprep.mubr.f32.mxu0 0.0
        %v877 = vand.u32 %v254, 4294901760
        %878 = vmatmul.mubr.f32.gmra.mrb[0].mxu0 %v877
        %v879 = vpop.f32.mrb[0].mxu0
        %v880 = vadd.f32 %v749, %v879
        %v881 = vpop.f32.mrb[0].mxu0
        %882 = vmatprep.mubr.f32.mxu0 0.0
        %v883 = vand.u32 %v257, 4294901760
        %884 = vmatmul.mubr.f32.gmra.mrb[0].mxu0 %v883
        %v885 = vpop.f32.mrb[0].mxu0
        %v886 = vadd.f32 %v757, %v885
        %v887 = vpop.f32.mrb[0].mxu0
        %888 = vmatprep.mubr.f32.mxu0 0.0
        %v889 = vand.u32 %v260, 4294901760
        %890 = vmatmul.mubr.f32.gmra.mrb[0].mxu0 %v889
        %v891 = vpop.f32.mrb[0].mxu0
        %v892 = vadd.f32 %v765, %v891
        %v893 = vpop.f32.mrb[0].mxu0
        %894 = vmatprep.mubr.f32.mxu0 0.0
        %v895 = vand.u32 %v263, 4294901760
        %896 = vmatmul.mubr.f32.gmra.mrb[0].mxu0 %v895
        %v897 = vpop.f32.mrb[0].mxu0
        %v898 = vadd.f32 %v773, %v897
        %v899 = vpop.f32.mrb[0].mxu0
        %900 = vmatprep.mubr.f32.mxu0 0.0
        %v901 = vand.u32 %v266, 4294901760
        %902 = vmatmul.mubr.f32.gmra.mrb[0].mxu0 %v901
        %v903 = vpop.f32.mrb[0].mxu0
        %v904 = vadd.f32 %v781, %v903
        %v905 = vpop.f32.mrb[0].mxu0
        %906 = vmatprep.mubr.f32.mxu0 0.0
        %v907 = vand.u32 %v269, 4294901760
        %908 = vmatmul.mubr.f32.gmra.mrb[0].mxu0 %v907
        %v909 = vpop.f32.mrb[0].mxu0
        %v910 = vadd.f32 %v789, %v909
        %v911 = vpop.f32.mrb[0].mxu0
        %912 = vmatprep.mubr.f32.mxu0 0.0
        %v913 = vand.u32 %v272, 4294901760
        %914 = vmatmul.mubr.f32.gmra.mrb[0].mxu0 %v913
        %v915 = vpop.f32.mrb[0].mxu0
        %v916 = vadd.f32 %v797, %v915
        %v917 = vpop.f32.mrb[0].mxu0
        %918 = vdwg.mxu0
        %919 = vmatprep.subr.mxu0 0.0
        %v920 = vand.u32 %v247, 4294901760
        %921 = vmatpush1.msra.mxu0 %v920
        %922 = vmatprep.subr.mxu0 0.0
        %v923 = vand.u32 %v248, 4294901760
        %924 = vmatpush1.msra.mxu0 %v923
        %925 = vmatprep.subr.mxu0 0.0
        %926 = vmatpush1.msra.mxu0 0.0
        %927 = vmatprep.subr.mxu0 0.0
        %928 = vmatpush1.msra.mxu0 0.0
        %929 = vmatprep.subr.mxu0 0.0
        %930 = vmatpush1.msra.mxu0 0.0
        %931 = vmatprep.subr.mxu0 0.0
        %932 = vmatpush1.msra.mxu0 0.0
        %933 = vmatprep.subr.mxu0 0.0
        %934 = vmatpush1.msra.mxu0 0.0
        %935 = vmatprep.subr.mxu0 0.0
        %936 = vmatpush1.msra.mxu0 0.0
        %937 = vmatprep.subr.mxu0 0.0
        %938 = vmatpush1.msra.mxu0 0.0
        %939 = vmatprep.subr.mxu0 0.0
        %940 = vmatpush1.msra.mxu0 0.0
        %941 = vmatprep.subr.mxu0 0.0
        %942 = vmatpush1.msra.mxu0 0.0
        %943 = vmatprep.subr.mxu0 0.0
        %944 = vmatpush1.msra.mxu0 0.0
        %945 = vmatprep.subr.mxu0 0.0
        %946 = vmatpush1.msra.mxu0 0.0
        %947 = vmatprep.subr.mxu0 0.0
        %948 = vmatpush1.msra.mxu0 0.0
        %949 = vmatprep.subr.mxu0 0.0
        %950 = vmatpush1.msra.mxu0 0.0
        %951 = vmatprep.subr.mxu0 0.0
        %952 = vmatpush1.msra.mxu0 0.0
        %953 = vmatprep.subr.mxu0 0.0
        %954 = vmatpush1.msra.mxu0 0.0
        %955 = vmatprep.subr.mxu0 0.0
        %956 = vmatpush1.msra.mxu0 0.0
        %957 = vmatprep.subr.mxu0 0.0
        %958 = vmatpush1.msra.mxu0 0.0
        %959 = vmatprep.subr.mxu0 0.0
        %960 = vmatpush1.msra.mxu0 0.0
        %961 = vmatprep.subr.mxu0 0.0
        %962 = vmatpush1.msra.mxu0 0.0
        %963 = vmatprep.subr.mxu0 0.0
        %964 = vmatpush1.msra.mxu0 0.0
        %965 = vmatprep.subr.mxu0 0.0
        %966 = vmatpush1.msra.mxu0 0.0
        %967 = vmatprep.subr.mxu0 0.0
        %968 = vmatpush1.msra.mxu0 0.0
        %969 = vmatprep.subr.mxu0 0.0
        %970 = vmatpush1.msra.mxu0 0.0
        %971 = vmatprep.subr.mxu0 0.0
        %972 = vmatpush1.msra.mxu0 0.0
        %973 = vmatprep.subr.mxu0 0.0
        %974 = vmatpush1.msra.mxu0 0.0
        %975 = vmatprep.subr.mxu0 0.0
        %976 = vmatpush1.msra.mxu0 0.0
        %977 = vmatprep.subr.mxu0 0.0
        %978 = vmatpush1.msra.mxu0 0.0
        %979 = vmatprep.subr.mxu0 0.0
        %980 = vmatpush1.msra.mxu0 0.0
        %981 = vmatprep.subr.mxu0 0.0
        %982 = vmatpush1.msra.mxu0 0.0
        %983 = vmatprep.subr.mxu0 0.0
        %984 = vmatpush1.msra.mxu0 0.0
        %985 = vmatprep.mubr.f32.mxu0 0.0
        %v986 = vand.u32 %v251, 4294901760
        %987 = vmatmul.mubr.f32.gmra.mrb[0].mxu0 %v986
        %v988 = vpop.f32.mrb[0].mxu0
        %v989 = vadd.f32 %v874, %v988
        %v990 = vpop.f32.mrb[0].mxu0
        %991 = vmatprep.mubr.f32.mxu0 0.0
        %v992 = vand.u32 %v254, 4294901760
        %993 = vmatmul.mubr.f32.gmra.mrb[0].mxu0 %v992
        %v994 = vpop.f32.mrb[0].mxu0
        %v995 = vadd.f32 %v880, %v994
        %v996 = vpop.f32.mrb[0].mxu0
        %997 = vmatprep.mubr.f32.mxu0 0.0
        %v998 = vand.u32 %v257, 4294901760
        %999 = vmatmul.mubr.f32.gmra.mrb[0].mxu0 %v998
        %v1000 = vpop.f32.mrb[0].mxu0
        %v1001 = vadd.f32 %v886, %v1000
        %v1002 = vpop.f32.mrb[0].mxu0
        %1003 = vmatprep.mubr.f32.mxu0 0.0
        %v1004 = vand.u32 %v260, 4294901760
        %1005 = vmatmul.mubr.f32.gmra.mrb[0].mxu0 %v1004
        %v1006 = vpop.f32.mrb[0].mxu0
        %v1007 = vadd.f32 %v892, %v1006
        %v1008 = vpop.f32.mrb[0].mxu0
        %1009 = vmatprep.mubr.f32.mxu0 0.0
        %v1010 = vand.u32 %v263, 4294901760
        %1011 = vmatmul.mubr.f32.gmra.mrb[0].mxu0 %v1010
        %v1012 = vpop.f32.mrb[0].mxu0
        %v1013 = vadd.f32 %v898, %v1012
        %v1014 = vpop.f32.mrb[0].mxu0
        %1015 = vmatprep.mubr.f32.mxu0 0.0
        %v1016 = vand.u32 %v266, 4294901760
        %1017 = vmatmul.mubr.f32.gmra.mrb[0].mxu0 %v1016
        %v1018 = vpop.f32.mrb[0].mxu0
        %v1019 = vadd.f32 %v904, %v1018
        %v1020 = vpop.f32.mrb[0].mxu0
        %1021 = vmatprep.mubr.f32.mxu0 0.0
        %v1022 = vand.u32 %v269, 4294901760
        %1023 = vmatmul.mubr.f32.gmra.mrb[0].mxu0 %v1022
        %v1024 = vpop.f32.mrb[0].mxu0
        %v1025 = vadd.f32 %v910, %v1024
        %v1026 = vpop.f32.mrb[0].mxu0
        %1027 = vmatprep.mubr.f32.mxu0 0.0
        %v1028 = vand.u32 %v272, 4294901760
        %1029 = vmatmul.mubr.f32.gmra.mrb[0].mxu0 %v1028
        %v1030 = vpop.f32.mrb[0].mxu0
        %v1031 = vadd.f32 %v916, %v1030
        %v1032 = vpop.f32.mrb[0].mxu0
        %1033 = vdwg.mxu0
        %v1034 = vld [vmem:[%s2] sm:$0xff]
        %v1035 = vld [vmem:[%s2 + $0x8] sm:$0xff]
        %v1036 = vld [vmem:[%s2 + $0x10] sm:$0xff]
        %v1037 = vld [vmem:[%s2 + $0x18] sm:$0xff]
        %v1039 = vsel %vm249, %v1034, 0
        %v1042 = vsel %vm249, %v1035, 0
        %v1045 = vsel %vm249, %v1036, 0
        %v1048 = vsel %vm249, %v1037, 0
        %1050 = vmatprep.subr.mxu0 0.0
        %v1051 = vand.u32 %v989, 4294901760
        %1052 = vmatpush1.msra.mxu0 %v1051
        %1053 = vmatprep.subr.mxu0 0.0
        %v1054 = vand.u32 %v995, 4294901760
        %1055 = vmatpush1.msra.mxu0 %v1054
        %1056 = vmatprep.subr.mxu0 0.0
        %1057 = vmatpush1.msra.mxu0 0.0
        %1058 = vmatprep.subr.mxu0 0.0
        %1059 = vmatpush1.msra.mxu0 0.0
        %1060 = vmatprep.subr.mxu0 0.0
        %1061 = vmatpush1.msra.mxu0 0.0
        %1062 = vmatprep.subr.mxu0 0.0
        %1063 = vmatpush1.msra.mxu0 0.0
        %1064 = vmatprep.subr.mxu0 0.0
        %1065 = vmatpush1.msra.mxu0 0.0
        %1066 = vmatprep.subr.mxu0 0.0
        %1067 = vmatpush1.msra.mxu0 0.0
        %1068 = vmatprep.subr.mxu0 0.0
        %1069 = vmatpush1.msra.mxu0 0.0
        %1070 = vmatprep.subr.mxu0 0.0
        %1071 = vmatpush1.msra.mxu0 0.0
        %1072 = vmatprep.subr.mxu0 0.0
        %1073 = vmatpush1.msra.mxu0 0.0
        %1074 = vmatprep.subr.mxu0 0.0
        %1075 = vmatpush1.msra.mxu0 0.0
        %1076 = vmatprep.subr.mxu0 0.0
        %1077 = vmatpush1.msra.mxu0 0.0
        %1078 = vmatprep.subr.mxu0 0.0
        %1079 = vmatpush1.msra.mxu0 0.0
        %1080 = vmatprep.subr.mxu0 0.0
        %1081 = vmatpush1.msra.mxu0 0.0
        %1082 = vmatprep.subr.mxu0 0.0
        %1083 = vmatpush1.msra.mxu0 0.0
        %1084 = vmatprep.subr.mxu0 0.0
        %1085 = vmatpush1.msra.mxu0 0.0
        %1086 = vmatprep.subr.mxu0 0.0
        %1087 = vmatpush1.msra.mxu0 0.0
        %1088 = vmatprep.subr.mxu0 0.0
        %1089 = vmatpush1.msra.mxu0 0.0
        %1090 = vmatprep.subr.mxu0 0.0
        %1091 = vmatpush1.msra.mxu0 0.0
        %1092 = vmatprep.subr.mxu0 0.0
        %1093 = vmatpush1.msra.mxu0 0.0
        %1094 = vmatprep.subr.mxu0 0.0
        %1095 = vmatpush1.msra.mxu0 0.0
        %1096 = vmatprep.subr.mxu0 0.0
        %1097 = vmatpush1.msra.mxu0 0.0
        %1098 = vmatprep.subr.mxu0 0.0
        %1099 = vmatpush1.msra.mxu0 0.0
        %1100 = vmatprep.subr.mxu0 0.0
        %1101 = vmatpush1.msra.mxu0 0.0
        %1102 = vmatprep.subr.mxu0 0.0
        %1103 = vmatpush1.msra.mxu0 0.0
        %1104 = vmatprep.subr.mxu0 0.0
        %1105 = vmatpush1.msra.mxu0 0.0
        %1106 = vmatprep.subr.mxu0 0.0
        %1107 = vmatpush1.msra.mxu0 0.0
        %1108 = vmatprep.subr.mxu0 0.0
        %1109 = vmatpush1.msra.mxu0 0.0
        %1110 = vmatprep.subr.mxu0 0.0
        %1111 = vmatpush1.msra.mxu0 0.0
        %1112 = vmatprep.subr.mxu0 0.0
        %1113 = vmatpush1.msra.mxu0 0.0
        %1114 = vmatprep.subr.mxu0 0.0
        %1115 = vmatpush1.msra.mxu0 0.0
        %1116 = vmatprep.mubr.f32.mxu0 0.0
        %v1117 = vand.u32 %v1039, 4294901760
        %v1118 = vsub.f32 %v1039, %v1117
        %v1119 = vand.u32 %v1118, 4294901760
        %v1120 = vsub.f32 %v1118, %v1119
        %v1121 = vand.u32 %v1120, 4294901760
        %1122 = vmatmul.mubr.f32.gmra.mrb[0].mxu0 %v1121
        %v1123 = vpop.f32.mrb[0].mxu0
        %v1124 = vadd.f32 0.0, %v1123
        %v1125 = vpop.f32.mrb[0].mxu0
        %1126 = vmatprep.mubr.f32.mxu0 0.0
        %v1127 = vand.u32 %v1042, 4294901760
        %v1128 = vsub.f32 %v1042, %v1127
        %v1129 = vand.u32 %v1128, 4294901760
        %v1130 = vsub.f32 %v1128, %v1129
        %v1131 = vand.u32 %v1130, 4294901760
        %1132 = vmatmul.mubr.f32.gmra.mrb[0].mxu0 %v1131
        %v1133 = vpop.f32.mrb[0].mxu0
        %v1134 = vadd.f32 0.0, %v1133
        %v1135 = vpop.f32.mrb[0].mxu0
        %1136 = vmatprep.mubr.f32.mxu0 0.0
        %v1137 = vand.u32 %v1045, 4294901760
        %v1138 = vsub.f32 %v1045, %v1137
        %v1139 = vand.u32 %v1138, 4294901760
        %v1140 = vsub.f32 %v1138, %v1139
        %v1141 = vand.u32 %v1140, 4294901760
        %1142 = vmatmul.mubr.f32.gmra.mrb[0].mxu0 %v1141
        %v1143 = vpop.f32.mrb[0].mxu0
        %v1144 = vadd.f32 0.0, %v1143
        %v1145 = vpop.f32.mrb[0].mxu0
        %1146 = vmatprep.mubr.f32.mxu0 0.0
        %v1147 = vand.u32 %v1048, 4294901760
        %v1148 = vsub.f32 %v1048, %v1147
        %v1149 = vand.u32 %v1148, 4294901760
        %v1150 = vsub.f32 %v1148, %v1149
        %v1151 = vand.u32 %v1150, 4294901760
        %1152 = vmatmul.mubr.f32.gmra.mrb[0].mxu0 %v1151
        %v1153 = vpop.f32.mrb[0].mxu0
        %v1154 = vadd.f32 0.0, %v1153
        %v1155 = vpop.f32.mrb[0].mxu0
        %1156 = vdwg.mxu0
        %1157 = vmatprep.subr.mxu0 0.0
        %v1158 = vand.u32 %v989, 4294901760
        %v1159 = vsub.f32 %v989, %v1158
        %v1160 = vand.u32 %v1159, 4294901760
        %v1161 = vsub.f32 %v1159, %v1160
        %v1162 = vand.u32 %v1161, 4294901760
        %1163 = vmatpush1.msra.mxu0 %v1162
        %1164 = vmatprep.subr.mxu0 0.0
        %v1165 = vand.u32 %v995, 4294901760
        %v1166 = vsub.f32 %v995, %v1165
        %v1167 = vand.u32 %v1166, 4294901760
        %v1168 = vsub.f32 %v1166, %v1167
        %v1169 = vand.u32 %v1168, 4294901760
        %1170 = vmatpush1.msra.mxu0 %v1169
        %1171 = vmatprep.subr.mxu0 0.0
        %1172 = vmatpush1.msra.mxu0 0.0
        %1173 = vmatprep.subr.mxu0 0.0
        %1174 = vmatpush1.msra.mxu0 0.0
        %1175 = vmatprep.subr.mxu0 0.0
        %1176 = vmatpush1.msra.mxu0 0.0
        %1177 = vmatprep.subr.mxu0 0.0
        %1178 = vmatpush1.msra.mxu0 0.0
        %1179 = vmatprep.subr.mxu0 0.0
        %1180 = vmatpush1.msra.mxu0 0.0
        %1181 = vmatprep.subr.mxu0 0.0
        %1182 = vmatpush1.msra.mxu0 0.0
        %1183 = vmatprep.subr.mxu0 0.0
        %1184 = vmatpush1.msra.mxu0 0.0
        %1185 = vmatprep.subr.mxu0 0.0
        %1186 = vmatpush1.msra.mxu0 0.0
        %1187 = vmatprep.subr.mxu0 0.0
        %1188 = vmatpush1.msra.mxu0 0.0
        %1189 = vmatprep.subr.mxu0 0.0
        %1190 = vmatpush1.msra.mxu0 0.0
        %1191 = vmatprep.subr.mxu0 0.0
        %1192 = vmatpush1.msra.mxu0 0.0
        %1193 = vmatprep.subr.mxu0 0.0
        %1194 = vmatpush1.msra.mxu0 0.0
        %1195 = vmatprep.subr.mxu0 0.0
        %1196 = vmatpush1.msra.mxu0 0.0
        %1197 = vmatprep.subr.mxu0 0.0
        %1198 = vmatpush1.msra.mxu0 0.0
        %1199 = vmatprep.subr.mxu0 0.0
        %1200 = vmatpush1.msra.mxu0 0.0
        %1201 = vmatprep.subr.mxu0 0.0
        %1202 = vmatpush1.msra.mxu0 0.0
        %1203 = vmatprep.subr.mxu0 0.0
        %1204 = vmatpush1.msra.mxu0 0.0
        %1205 = vmatprep.subr.mxu0 0.0
        %1206 = vmatpush1.msra.mxu0 0.0
        %1207 = vmatprep.subr.mxu0 0.0
        %1208 = vmatpush1.msra.mxu0 0.0
        %1209 = vmatprep.subr.mxu0 0.0
        %1210 = vmatpush1.msra.mxu0 0.0
        %1211 = vmatprep.subr.mxu0 0.0
        %1212 = vmatpush1.msra.mxu0 0.0
        %1213 = vmatprep.subr.mxu0 0.0
        %1214 = vmatpush1.msra.mxu0 0.0
        %1215 = vmatprep.subr.mxu0 0.0
        %1216 = vmatpush1.msra.mxu0 0.0
        %1217 = vmatprep.subr.mxu0 0.0
        %1218 = vmatpush1.msra.mxu0 0.0
        %1219 = vmatprep.subr.mxu0 0.0
        %1220 = vmatpush1.msra.mxu0 0.0
        %1221 = vmatprep.subr.mxu0 0.0
        %1222 = vmatpush1.msra.mxu0 0.0
        %1223 = vmatprep.subr.mxu0 0.0
        %1224 = vmatpush1.msra.mxu0 0.0
        %1225 = vmatprep.subr.mxu0 0.0
        %1226 = vmatpush1.msra.mxu0 0.0
        %1227 = vmatprep.subr.mxu0 0.0
        %1228 = vmatpush1.msra.mxu0 0.0
        %1229 = vmatprep.subr.mxu0 0.0
        %1230 = vmatpush1.msra.mxu0 0.0
        %1231 = vmatprep.mubr.f32.mxu0 0.0
        %v1232 = vand.u32 %v1039, 4294901760
        %1233 = vmatmul.mubr.f32.gmra.mrb[0].mxu0 %v1232
        %v1234 = vpop.f32.mrb[0].mxu0
        %v1235 = vadd.f32 %v1124, %v1234
        %v1236 = vpop.f32.mrb[0].mxu0
        %1237 = vmatprep.mubr.f32.mxu0 0.0
        %v1238 = vand.u32 %v1042, 4294901760
        %1239 = vmatmul.mubr.f32.gmra.mrb[0].mxu0 %v1238
        %v1240 = vpop.f32.mrb[0].mxu0
        %v1241 = vadd.f32 %v1134, %v1240
        %v1242 = vpop.f32.mrb[0].mxu0
        %1243 = vmatprep.mubr.f32.mxu0 0.0
        %v1244 = vand.u32 %v1045, 4294901760
        %1245 = vmatmul.mubr.f32.gmra.mrb[0].mxu0 %v1244
        %v1246 = vpop.f32.mrb[0].mxu0
        %v1247 = vadd.f32 %v1144, %v1246
        %v1248 = vpop.f32.mrb[0].mxu0
        %1249 = vmatprep.mubr.f32.mxu0 0.0
        %v1250 = vand.u32 %v1048, 4294901760
        %1251 = vmatmul.mubr.f32.gmra.mrb[0].mxu0 %v1250
        %v1252 = vpop.f32.mrb[0].mxu0
        %v1253 = vadd.f32 %v1154, %v1252
        %v1254 = vpop.f32.mrb[0].mxu0
        %1255 = vdwg.mxu0
        %1256 = vmatprep.subr.mxu0 0.0
        %v1257 = vand.u32 %v989, 4294901760
        %v1258 = vsub.f32 %v989, %v1257
        %1259 = vmatpush1.msra.mxu0 %v1258
        %1260 = vmatprep.subr.mxu0 0.0
        %v1261 = vand.u32 %v995, 4294901760
        %v1262 = vsub.f32 %v995, %v1261
        %1263 = vmatpush1.msra.mxu0 %v1262
        %1264 = vmatprep.subr.mxu0 0.0
        %1265 = vmatpush1.msra.mxu0 0.0
        %1266 = vmatprep.subr.mxu0 0.0
        %1267 = vmatpush1.msra.mxu0 0.0
        %1268 = vmatprep.subr.mxu0 0.0
        %1269 = vmatpush1.msra.mxu0 0.0
        %1270 = vmatprep.subr.mxu0 0.0
        %1271 = vmatpush1.msra.mxu0 0.0
        %1272 = vmatprep.subr.mxu0 0.0
        %1273 = vmatpush1.msra.mxu0 0.0
        %1274 = vmatprep.subr.mxu0 0.0
        %1275 = vmatpush1.msra.mxu0 0.0
        %1276 = vmatprep.subr.mxu0 0.0
        %1277 = vmatpush1.msra.mxu0 0.0
        %1278 = vmatprep.subr.mxu0 0.0
        %1279 = vmatpush1.msra.mxu0 0.0
        %1280 = vmatprep.subr.mxu0 0.0
        %1281 = vmatpush1.msra.mxu0 0.0
        %1282 = vmatprep.subr.mxu0 0.0
        %1283 = vmatpush1.msra.mxu0 0.0
        %1284 = vmatprep.subr.mxu0 0.0
        %1285 = vmatpush1.msra.mxu0 0.0
        %1286 = vmatprep.subr.mxu0 0.0
        %1287 = vmatpush1.msra.mxu0 0.0
        %1288 = vmatprep.subr.mxu0 0.0
        %1289 = vmatpush1.msra.mxu0 0.0
        %1290 = vmatprep.subr.mxu0 0.0
        %1291 = vmatpush1.msra.mxu0 0.0
        %1292 = vmatprep.subr.mxu0 0.0
        %1293 = vmatpush1.msra.mxu0 0.0
        %1294 = vmatprep.subr.mxu0 0.0
        %1295 = vmatpush1.msra.mxu0 0.0
        %1296 = vmatprep.subr.mxu0 0.0
        %1297 = vmatpush1.msra.mxu0 0.0
        %1298 = vmatprep.subr.mxu0 0.0
        %1299 = vmatpush1.msra.mxu0 0.0
        %1300 = vmatprep.subr.mxu0 0.0
        %1301 = vmatpush1.msra.mxu0 0.0
        %1302 = vmatprep.subr.mxu0 0.0
        %1303 = vmatpush1.msra.mxu0 0.0
        %1304 = vmatprep.subr.mxu0 0.0
        %1305 = vmatpush1.msra.mxu0 0.0
        %1306 = vmatprep.subr.mxu0 0.0
        %1307 = vmatpush1.msra.mxu0 0.0
        %1308 = vmatprep.subr.mxu0 0.0
        %1309 = vmatpush1.msra.mxu0 0.0
        %1310 = vmatprep.subr.mxu0 0.0
        %1311 = vmatpush1.msra.mxu0 0.0
        %1312 = vmatprep.subr.mxu0 0.0
        %1313 = vmatpush1.msra.mxu0 0.0
        %1314 = vmatprep.subr.mxu0 0.0
        %1315 = vmatpush1.msra.mxu0 0.0
        %1316 = vmatprep.subr.mxu0 0.0
        %1317 = vmatpush1.msra.mxu0 0.0
        %1318 = vmatprep.subr.mxu0 0.0
        %1319 = vmatpush1.msra.mxu0 0.0
        %1320 = vmatprep.subr.mxu0 0.0
        %1321 = vmatpush1.msra.mxu0 0.0
        %1322 = vmatprep.subr.mxu0 0.0
        %1323 = vmatpush1.msra.mxu0 0.0
        %1324 = vmatprep.mubr.f32.mxu0 0.0
        %v1325 = vand.u32 %v1039, 4294901760
        %v1326 = vsub.f32 %v1039, %v1325
        %1327 = vmatmul.mubr.f32.gmra.mrb[0].mxu0 %v1326
        %v1328 = vpop.f32.mrb[0].mxu0
        %v1329 = vadd.f32 %v1235, %v1328
        %v1330 = vpop.f32.mrb[0].mxu0
        %1331 = vmatprep.mubr.f32.mxu0 0.0
        %v1332 = vand.u32 %v1042, 4294901760
        %v1333 = vsub.f32 %v1042, %v1332
        %1334 = vmatmul.mubr.f32.gmra.mrb[0].mxu0 %v1333
        %v1335 = vpop.f32.mrb[0].mxu0
        %v1336 = vadd.f32 %v1241, %v1335
        %v1337 = vpop.f32.mrb[0].mxu0
        %1338 = vmatprep.mubr.f32.mxu0 0.0
        %v1339 = vand.u32 %v1045, 4294901760
        %v1340 = vsub.f32 %v1045, %v1339
        %1341 = vmatmul.mubr.f32.gmra.mrb[0].mxu0 %v1340
        %v1342 = vpop.f32.mrb[0].mxu0
        %v1343 = vadd.f32 %v1247, %v1342
        %v1344 = vpop.f32.mrb[0].mxu0
        %1345 = vmatprep.mubr.f32.mxu0 0.0
        %v1346 = vand.u32 %v1048, 4294901760
        %v1347 = vsub.f32 %v1048, %v1346
        %1348 = vmatmul.mubr.f32.gmra.mrb[0].mxu0 %v1347
        %v1349 = vpop.f32.mrb[0].mxu0
        %v1350 = vadd.f32 %v1253, %v1349
        %v1351 = vpop.f32.mrb[0].mxu0
        %1352 = vdwg.mxu0
        %1353 = vmatprep.subr.mxu0 0.0
        %v1354 = vand.u32 %v989, 4294901760
        %1355 = vmatpush1.msra.mxu0 %v1354
        %1356 = vmatprep.subr.mxu0 0.0
        %v1357 = vand.u32 %v995, 4294901760
        %1358 = vmatpush1.msra.mxu0 %v1357
        %1359 = vmatprep.subr.mxu0 0.0
        %1360 = vmatpush1.msra.mxu0 0.0
        %1361 = vmatprep.subr.mxu0 0.0
        %1362 = vmatpush1.msra.mxu0 0.0
        %1363 = vmatprep.subr.mxu0 0.0
        %1364 = vmatpush1.msra.mxu0 0.0
        %1365 = vmatprep.subr.mxu0 0.0
        %1366 = vmatpush1.msra.mxu0 0.0
        %1367 = vmatprep.subr.mxu0 0.0
        %1368 = vmatpush1.msra.mxu0 0.0
        %1369 = vmatprep.subr.mxu0 0.0
        %1370 = vmatpush1.msra.mxu0 0.0
        %1371 = vmatprep.subr.mxu0 0.0
        %1372 = vmatpush1.msra.mxu0 0.0
        %1373 = vmatprep.subr.mxu0 0.0
        %1374 = vmatpush1.msra.mxu0 0.0
        %1375 = vmatprep.subr.mxu0 0.0
        %1376 = vmatpush1.msra.mxu0 0.0
        %1377 = vmatprep.subr.mxu0 0.0
        %1378 = vmatpush1.msra.mxu0 0.0
        %1379 = vmatprep.subr.mxu0 0.0
        %1380 = vmatpush1.msra.mxu0 0.0
        %1381 = vmatprep.subr.mxu0 0.0
        %1382 = vmatpush1.msra.mxu0 0.0
        %1383 = vmatprep.subr.mxu0 0.0
        %1384 = vmatpush1.msra.mxu0 0.0
        %1385 = vmatprep.subr.mxu0 0.0
        %1386 = vmatpush1.msra.mxu0 0.0
        %1387 = vmatprep.subr.mxu0 0.0
        %1388 = vmatpush1.msra.mxu0 0.0
        %1389 = vmatprep.subr.mxu0 0.0
        %1390 = vmatpush1.msra.mxu0 0.0
        %1391 = vmatprep.subr.mxu0 0.0
        %1392 = vmatpush1.msra.mxu0 0.0
        %1393 = vmatprep.subr.mxu0 0.0
        %1394 = vmatpush1.msra.mxu0 0.0
        %1395 = vmatprep.subr.mxu0 0.0
        %1396 = vmatpush1.msra.mxu0 0.0
        %1397 = vmatprep.subr.mxu0 0.0
        %1398 = vmatpush1.msra.mxu0 0.0
        %1399 = vmatprep.subr.mxu0 0.0
        %1400 = vmatpush1.msra.mxu0 0.0
        %1401 = vmatprep.subr.mxu0 0.0
        %1402 = vmatpush1.msra.mxu0 0.0
        %1403 = vmatprep.subr.mxu0 0.0
        %1404 = vmatpush1.msra.mxu0 0.0
        %1405 = vmatprep.subr.mxu0 0.0
        %1406 = vmatpush1.msra.mxu0 0.0
        %1407 = vmatprep.subr.mxu0 0.0
        %1408 = vmatpush1.msra.mxu0 0.0
        %1409 = vmatprep.subr.mxu0 0.0
        %1410 = vmatpush1.msra.mxu0 0.0
        %1411 = vmatprep.subr.mxu0 0.0
        %1412 = vmatpush1.msra.mxu0 0.0
        %1413 = vmatprep.subr.mxu0 0.0
        %1414 = vmatpush1.msra.mxu0 0.0
        %1415 = vmatprep.subr.mxu0 0.0
        %1416 = vmatpush1.msra.mxu0 0.0
        %1417 = vmatprep.subr.mxu0 0.0
        %1418 = vmatpush1.msra.mxu0 0.0
        %1419 = vmatprep.mubr.f32.mxu0 0.0
        %v1420 = vand.u32 %v1039, 4294901760
        %v1421 = vsub.f32 %v1039, %v1420
        %v1422 = vand.u32 %v1421, 4294901760
        %1423 = vmatmul.mubr.f32.gmra.mrb[0].mxu0 %v1422
        %v1424 = vpop.f32.mrb[0].mxu0
        %v1425 = vadd.f32 %v1329, %v1424
        %v1426 = vpop.f32.mrb[0].mxu0
        %1427 = vmatprep.mubr.f32.mxu0 0.0
        %v1428 = vand.u32 %v1042, 4294901760
        %v1429 = vsub.f32 %v1042, %v1428
        %v1430 = vand.u32 %v1429, 4294901760
        %1431 = vmatmul.mubr.f32.gmra.mrb[0].mxu0 %v1430
        %v1432 = vpop.f32.mrb[0].mxu0
        %v1433 = vadd.f32 %v1336, %v1432
        %v1434 = vpop.f32.mrb[0].mxu0
        %1435 = vmatprep.mubr.f32.mxu0 0.0
        %v1436 = vand.u32 %v1045, 4294901760
        %v1437 = vsub.f32 %v1045, %v1436
        %v1438 = vand.u32 %v1437, 4294901760
        %1439 = vmatmul.mubr.f32.gmra.mrb[0].mxu0 %v1438
        %v1440 = vpop.f32.mrb[0].mxu0
        %v1441 = vadd.f32 %v1343, %v1440
        %v1442 = vpop.f32.mrb[0].mxu0
        %1443 = vmatprep.mubr.f32.mxu0 0.0
        %v1444 = vand.u32 %v1048, 4294901760
        %v1445 = vsub.f32 %v1048, %v1444
        %v1446 = vand.u32 %v1445, 4294901760
        %1447 = vmatmul.mubr.f32.gmra.mrb[0].mxu0 %v1446
        %v1448 = vpop.f32.mrb[0].mxu0
        %v1449 = vadd.f32 %v1350, %v1448
        %v1450 = vpop.f32.mrb[0].mxu0
        %1451 = vdwg.mxu0
        %1452 = vmatprep.subr.mxu0 0.0
        %v1453 = vand.u32 %v989, 4294901760
        %v1454 = vsub.f32 %v989, %v1453
        %v1455 = vand.u32 %v1454, 4294901760
        %1456 = vmatpush1.msra.mxu0 %v1455
        %1457 = vmatprep.subr.mxu0 0.0
        %v1458 = vand.u32 %v995, 4294901760
        %v1459 = vsub.f32 %v995, %v1458
        %v1460 = vand.u32 %v1459, 4294901760
        %1461 = vmatpush1.msra.mxu0 %v1460
        %1462 = vmatprep.subr.mxu0 0.0
        %1463 = vmatpush1.msra.mxu0 0.0
        %1464 = vmatprep.subr.mxu0 0.0
        %1465 = vmatpush1.msra.mxu0 0.0
        %1466 = vmatprep.subr.mxu0 0.0
        %1467 = vmatpush1.msra.mxu0 0.0
        %1468 = vmatprep.subr.mxu0 0.0
        %1469 = vmatpush1.msra.mxu0 0.0
        %1470 = vmatprep.subr.mxu0 0.0
        %1471 = vmatpush1.msra.mxu0 0.0
        %1472 = vmatprep.subr.mxu0 0.0
        %1473 = vmatpush1.msra.mxu0 0.0
        %1474 = vmatprep.subr.mxu0 0.0
        %1475 = vmatpush1.msra.mxu0 0.0
        %1476 = vmatprep.subr.mxu0 0.0
        %1477 = vmatpush1.msra.mxu0 0.0
        %1478 = vmatprep.subr.mxu0 0.0
        %1479 = vmatpush1.msra.mxu0 0.0
        %1480 = vmatprep.subr.mxu0 0.0
        %1481 = vmatpush1.msra.mxu0 0.0
        %1482 = vmatprep.subr.mxu0 0.0
        %1483 = vmatpush1.msra.mxu0 0.0
        %1484 = vmatprep.subr.mxu0 0.0
        %1485 = vmatpush1.msra.mxu0 0.0
        %1486 = vmatprep.subr.mxu0 0.0
        %1487 = vmatpush1.msra.mxu0 0.0
        %1488 = vmatprep.subr.mxu0 0.0
        %1489 = vmatpush1.msra.mxu0 0.0
        %1490 = vmatprep.subr.mxu0 0.0
        %1491 = vmatpush1.msra.mxu0 0.0
        %1492 = vmatprep.subr.mxu0 0.0
        %1493 = vmatpush1.msra.mxu0 0.0
        %1494 = vmatprep.subr.mxu0 0.0
        %1495 = vmatpush1.msra.mxu0 0.0
        %1496 = vmatprep.subr.mxu0 0.0
        %1497 = vmatpush1.msra.mxu0 0.0
        %1498 = vmatprep.subr.mxu0 0.0
        %1499 = vmatpush1.msra.mxu0 0.0
        %1500 = vmatprep.subr.mxu0 0.0
        %1501 = vmatpush1.msra.mxu0 0.0
        %1502 = vmatprep.subr.mxu0 0.0
        %1503 = vmatpush1.msra.mxu0 0.0
        %1504 = vmatprep.subr.mxu0 0.0
        %1505 = vmatpush1.msra.mxu0 0.0
        %1506 = vmatprep.subr.mxu0 0.0
        %1507 = vmatpush1.msra.mxu0 0.0
        %1508 = vmatprep.subr.mxu0 0.0
        %1509 = vmatpush1.msra.mxu0 0.0
        %1510 = vmatprep.subr.mxu0 0.0
        %1511 = vmatpush1.msra.mxu0 0.0
        %1512 = vmatprep.subr.mxu0 0.0
        %1513 = vmatpush1.msra.mxu0 0.0
        %1514 = vmatprep.subr.mxu0 0.0
        %1515 = vmatpush1.msra.mxu0 0.0
        %1516 = vmatprep.subr.mxu0 0.0
        %1517 = vmatpush1.msra.mxu0 0.0
        %1518 = vmatprep.subr.mxu0 0.0
        %1519 = vmatpush1.msra.mxu0 0.0
        %1520 = vmatprep.subr.mxu0 0.0
        %1521 = vmatpush1.msra.mxu0 0.0
        %1522 = vmatprep.mubr.f32.mxu0 0.0
        %v1523 = vand.u32 %v1039, 4294901760
        %1524 = vmatmul.mubr.f32.gmra.mrb[0].mxu0 %v1523
        %v1525 = vpop.f32.mrb[0].mxu0
        %v1526 = vadd.f32 %v1425, %v1525
        %v1527 = vpop.f32.mrb[0].mxu0
        %1528 = vmatprep.mubr.f32.mxu0 0.0
        %v1529 = vand.u32 %v1042, 4294901760
        %1530 = vmatmul.mubr.f32.gmra.mrb[0].mxu0 %v1529
        %v1531 = vpop.f32.mrb[0].mxu0
        %v1532 = vadd.f32 %v1433, %v1531
        %v1533 = vpop.f32.mrb[0].mxu0
        %1534 = vmatprep.mubr.f32.mxu0 0.0
        %v1535 = vand.u32 %v1045, 4294901760
        %1536 = vmatmul.mubr.f32.gmra.mrb[0].mxu0 %v1535
        %v1537 = vpop.f32.mrb[0].mxu0
        %v1538 = vadd.f32 %v1441, %v1537
        %v1539 = vpop.f32.mrb[0].mxu0
        %1540 = vmatprep.mubr.f32.mxu0 0.0
        %v1541 = vand.u32 %v1048, 4294901760
        %1542 = vmatmul.mubr.f32.gmra.mrb[0].mxu0 %v1541
        %v1543 = vpop.f32.mrb[0].mxu0
        %v1544 = vadd.f32 %v1449, %v1543
        %v1545 = vpop.f32.mrb[0].mxu0
        %1546 = vdwg.mxu0
        %1547 = vmatprep.subr.mxu0 0.0
        %v1548 = vand.u32 %v989, 4294901760
        %1549 = vmatpush1.msra.mxu0 %v1548
        %1550 = vmatprep.subr.mxu0 0.0
        %v1551 = vand.u32 %v995, 4294901760
        %1552 = vmatpush1.msra.mxu0 %v1551
        %1553 = vmatprep.subr.mxu0 0.0
        %1554 = vmatpush1.msra.mxu0 0.0
        %1555 = vmatprep.subr.mxu0 0.0
        %1556 = vmatpush1.msra.mxu0 0.0
        %1557 = vmatprep.subr.mxu0 0.0
        %1558 = vmatpush1.msra.mxu0 0.0
        %1559 = vmatprep.subr.mxu0 0.0
        %1560 = vmatpush1.msra.mxu0 0.0
        %1561 = vmatprep.subr.mxu0 0.0
        %1562 = vmatpush1.msra.mxu0 0.0
        %1563 = vmatprep.subr.mxu0 0.0
        %1564 = vmatpush1.msra.mxu0 0.0
        %1565 = vmatprep.subr.mxu0 0.0
        %1566 = vmatpush1.msra.mxu0 0.0
        %1567 = vmatprep.subr.mxu0 0.0
        %1568 = vmatpush1.msra.mxu0 0.0
        %1569 = vmatprep.subr.mxu0 0.0
        %1570 = vmatpush1.msra.mxu0 0.0
        %1571 = vmatprep.subr.mxu0 0.0
        %1572 = vmatpush1.msra.mxu0 0.0
        %1573 = vmatprep.subr.mxu0 0.0
        %1574 = vmatpush1.msra.mxu0 0.0
        %1575 = vmatprep.subr.mxu0 0.0
        %1576 = vmatpush1.msra.mxu0 0.0
        %1577 = vmatprep.subr.mxu0 0.0
        %1578 = vmatpush1.msra.mxu0 0.0
        %1579 = vmatprep.subr.mxu0 0.0
        %1580 = vmatpush1.msra.mxu0 0.0
        %1581 = vmatprep.subr.mxu0 0.0
        %1582 = vmatpush1.msra.mxu0 0.0
        %1583 = vmatprep.subr.mxu0 0.0
        %1584 = vmatpush1.msra.mxu0 0.0
        %1585 = vmatprep.subr.mxu0 0.0
        %1586 = vmatpush1.msra.mxu0 0.0
        %1587 = vmatprep.subr.mxu0 0.0
        %1588 = vmatpush1.msra.mxu0 0.0
        %1589 = vmatprep.subr.mxu0 0.0
        %1590 = vmatpush1.msra.mxu0 0.0
        %1591 = vmatprep.subr.mxu0 0.0
        %1592 = vmatpush1.msra.mxu0 0.0
        %1593 = vmatprep.subr.mxu0 0.0
        %1594 = vmatpush1.msra.mxu0 0.0
        %1595 = vmatprep.subr.mxu0 0.0
        %1596 = vmatpush1.msra.mxu0 0.0
        %1597 = vmatprep.subr.mxu0 0.0
        %1598 = vmatpush1.msra.mxu0 0.0
        %1599 = vmatprep.subr.mxu0 0.0
        %1600 = vmatpush1.msra.mxu0 0.0
        %1601 = vmatprep.subr.mxu0 0.0
        %1602 = vmatpush1.msra.mxu0 0.0
        %1603 = vmatprep.subr.mxu0 0.0
        %1604 = vmatpush1.msra.mxu0 0.0
        %1605 = vmatprep.subr.mxu0 0.0
        %1606 = vmatpush1.msra.mxu0 0.0
        %1607 = vmatprep.subr.mxu0 0.0
        %1608 = vmatpush1.msra.mxu0 0.0
        %1609 = vmatprep.subr.mxu0 0.0
        %1610 = vmatpush1.msra.mxu0 0.0
        %1611 = vmatprep.subr.mxu0 0.0
        %1612 = vmatpush1.msra.mxu0 0.0
        %1613 = vmatprep.mubr.f32.mxu0 0.0
        %v1614 = vand.u32 %v1039, 4294901760
        %1615 = vmatmul.mubr.f32.gmra.mrb[0].mxu0 %v1614
        %v1616 = vpop.f32.mrb[0].mxu0
        %v1617 = vadd.f32 %v1526, %v1616
        %v1618 = vpop.f32.mrb[0].mxu0
        %1619 = vmatprep.mubr.f32.mxu0 0.0
        %v1620 = vand.u32 %v1042, 4294901760
        %1621 = vmatmul.mubr.f32.gmra.mrb[0].mxu0 %v1620
        %v1622 = vpop.f32.mrb[0].mxu0
        %v1623 = vadd.f32 %v1532, %v1622
        %v1624 = vpop.f32.mrb[0].mxu0
        %1625 = vmatprep.mubr.f32.mxu0 0.0
        %v1626 = vand.u32 %v1045, 4294901760
        %1627 = vmatmul.mubr.f32.gmra.mrb[0].mxu0 %v1626
        %v1628 = vpop.f32.mrb[0].mxu0
        %v1629 = vadd.f32 %v1538, %v1628
        %v1630 = vpop.f32.mrb[0].mxu0
        %1631 = vmatprep.mubr.f32.mxu0 0.0
        %v1632 = vand.u32 %v1048, 4294901760
        %1633 = vmatmul.mubr.f32.gmra.mrb[0].mxu0 %v1632
        %v1634 = vpop.f32.mrb[0].mxu0
        %v1635 = vadd.f32 %v1544, %v1634
        %v1636 = vpop.f32.mrb[0].mxu0
        %1637 = vdwg.mxu0
        %1638 = vmatprep.subr.mxu0 0.0
        %v1639 = vand.u32 %v1001, 4294901760
        %1640 = vmatpush1.msra.mxu0 %v1639
        %1641 = vmatprep.subr.mxu0 0.0
        %v1642 = vand.u32 %v1007, 4294901760
        %1643 = vmatpush1.msra.mxu0 %v1642
        %1644 = vmatprep.subr.mxu0 0.0
        %1645 = vmatpush1.msra.mxu0 0.0
        %1646 = vmatprep.subr.mxu0 0.0
        %1647 = vmatpush1.msra.mxu0 0.0
        %1648 = vmatprep.subr.mxu0 0.0
        %1649 = vmatpush1.msra.mxu0 0.0
        %1650 = vmatprep.subr.mxu0 0.0
        %1651 = vmatpush1.msra.mxu0 0.0
        %1652 = vmatprep.subr.mxu0 0.0
        %1653 = vmatpush1.msra.mxu0 0.0
        %1654 = vmatprep.subr.mxu0 0.0
        %1655 = vmatpush1.msra.mxu0 0.0
        %1656 = vmatprep.subr.mxu0 0.0
        %1657 = vmatpush1.msra.mxu0 0.0
        %1658 = vmatprep.subr.mxu0 0.0
        %1659 = vmatpush1.msra.mxu0 0.0
        %1660 = vmatprep.subr.mxu0 0.0
        %1661 = vmatpush1.msra.mxu0 0.0
        %1662 = vmatprep.subr.mxu0 0.0
        %1663 = vmatpush1.msra.mxu0 0.0
        %1664 = vmatprep.subr.mxu0 0.0
        %1665 = vmatpush1.msra.mxu0 0.0
        %1666 = vmatprep.subr.mxu0 0.0
        %1667 = vmatpush1.msra.mxu0 0.0
        %1668 = vmatprep.subr.mxu0 0.0
        %1669 = vmatpush1.msra.mxu0 0.0
        %1670 = vmatprep.subr.mxu0 0.0
        %1671 = vmatpush1.msra.mxu0 0.0
        %1672 = vmatprep.subr.mxu0 0.0
        %1673 = vmatpush1.msra.mxu0 0.0
        %1674 = vmatprep.subr.mxu0 0.0
        %1675 = vmatpush1.msra.mxu0 0.0
        %1676 = vmatprep.subr.mxu0 0.0
        %1677 = vmatpush1.msra.mxu0 0.0
        %1678 = vmatprep.subr.mxu0 0.0
        %1679 = vmatpush1.msra.mxu0 0.0
        %1680 = vmatprep.subr.mxu0 0.0
        %1681 = vmatpush1.msra.mxu0 0.0
        %1682 = vmatprep.subr.mxu0 0.0
        %1683 = vmatpush1.msra.mxu0 0.0
        %1684 = vmatprep.subr.mxu0 0.0
        %1685 = vmatpush1.msra.mxu0 0.0
        %1686 = vmatprep.subr.mxu0 0.0
        %1687 = vmatpush1.msra.mxu0 0.0
        %1688 = vmatprep.subr.mxu0 0.0
        %1689 = vmatpush1.msra.mxu0 0.0
        %1690 = vmatprep.subr.mxu0 0.0
        %1691 = vmatpush1.msra.mxu0 0.0
        %1692 = vmatprep.subr.mxu0 0.0
        %1693 = vmatpush1.msra.mxu0 0.0
        %1694 = vmatprep.subr.mxu0 0.0
        %1695 = vmatpush1.msra.mxu0 0.0
        %1696 = vmatprep.subr.mxu0 0.0
        %1697 = vmatpush1.msra.mxu0 0.0
        %1698 = vmatprep.subr.mxu0 0.0
        %1699 = vmatpush1.msra.mxu0 0.0
        %1700 = vmatprep.subr.mxu0 0.0
        %1701 = vmatpush1.msra.mxu0 0.0
        %1702 = vmatprep.subr.mxu0 0.0
        %1703 = vmatpush1.msra.mxu0 0.0
        %1704 = vmatprep.mubr.f32.mxu0 0.0
        %v1705 = vand.u32 %v1039, 4294901760
        %v1706 = vsub.f32 %v1039, %v1705
        %v1707 = vand.u32 %v1706, 4294901760
        %v1708 = vsub.f32 %v1706, %v1707
        %v1709 = vand.u32 %v1708, 4294901760
        %1710 = vmatmul.mubr.f32.gmra.mrb[0].mxu0 %v1709
        %v1711 = vpop.f32.mrb[0].mxu0
        %v1712 = vadd.f32 0.0, %v1711
        %v1713 = vpop.f32.mrb[0].mxu0
        %1714 = vmatprep.mubr.f32.mxu0 0.0
        %v1715 = vand.u32 %v1042, 4294901760
        %v1716 = vsub.f32 %v1042, %v1715
        %v1717 = vand.u32 %v1716, 4294901760
        %v1718 = vsub.f32 %v1716, %v1717
        %v1719 = vand.u32 %v1718, 4294901760
        %1720 = vmatmul.mubr.f32.gmra.mrb[0].mxu0 %v1719
        %v1721 = vpop.f32.mrb[0].mxu0
        %v1722 = vadd.f32 0.0, %v1721
        %v1723 = vpop.f32.mrb[0].mxu0
        %1724 = vmatprep.mubr.f32.mxu0 0.0
        %v1725 = vand.u32 %v1045, 4294901760
        %v1726 = vsub.f32 %v1045, %v1725
        %v1727 = vand.u32 %v1726, 4294901760
        %v1728 = vsub.f32 %v1726, %v1727
        %v1729 = vand.u32 %v1728, 4294901760
        %1730 = vmatmul.mubr.f32.gmra.mrb[0].mxu0 %v1729
        %v1731 = vpop.f32.mrb[0].mxu0
        %v1732 = vadd.f32 0.0, %v1731
        %v1733 = vpop.f32.mrb[0].mxu0
        %1734 = vmatprep.mubr.f32.mxu0 0.0
        %v1735 = vand.u32 %v1048, 4294901760
        %v1736 = vsub.f32 %v1048, %v1735
        %v1737 = vand.u32 %v1736, 4294901760
        %v1738 = vsub.f32 %v1736, %v1737
        %v1739 = vand.u32 %v1738, 4294901760
        %1740 = vmatmul.mubr.f32.gmra.mrb[0].mxu0 %v1739
        %v1741 = vpop.f32.mrb[0].mxu0
        %v1742 = vadd.f32 0.0, %v1741
        %v1743 = vpop.f32.mrb[0].mxu0
        %1744 = vdwg.mxu0
        %1745 = vmatprep.subr.mxu0 0.0
        %v1746 = vand.u32 %v1001, 4294901760
        %v1747 = vsub.f32 %v1001, %v1746
        %v1748 = vand.u32 %v1747, 4294901760
        %v1749 = vsub.f32 %v1747, %v1748
        %v1750 = vand.u32 %v1749, 4294901760
        %1751 = vmatpush1.msra.mxu0 %v1750
        %1752 = vmatprep.subr.mxu0 0.0
        %v1753 = vand.u32 %v1007, 4294901760
        %v1754 = vsub.f32 %v1007, %v1753
        %v1755 = vand.u32 %v1754, 4294901760
        %v1756 = vsub.f32 %v1754, %v1755
        %v1757 = vand.u32 %v1756, 4294901760
        %1758 = vmatpush1.msra.mxu0 %v1757
        %1759 = vmatprep.subr.mxu0 0.0
        %1760 = vmatpush1.msra.mxu0 0.0
        %1761 = vmatprep.subr.mxu0 0.0
        %1762 = vmatpush1.msra.mxu0 0.0
        %1763 = vmatprep.subr.mxu0 0.0
        %1764 = vmatpush1.msra.mxu0 0.0
        %1765 = vmatprep.subr.mxu0 0.0
        %1766 = vmatpush1.msra.mxu0 0.0
        %1767 = vmatprep.subr.mxu0 0.0
        %1768 = vmatpush1.msra.mxu0 0.0
        %1769 = vmatprep.subr.mxu0 0.0
        %1770 = vmatpush1.msra.mxu0 0.0
        %1771 = vmatprep.subr.mxu0 0.0
        %1772 = vmatpush1.msra.mxu0 0.0
        %1773 = vmatprep.subr.mxu0 0.0
        %1774 = vmatpush1.msra.mxu0 0.0
        %1775 = vmatprep.subr.mxu0 0.0
        %1776 = vmatpush1.msra.mxu0 0.0
        %1777 = vmatprep.subr.mxu0 0.0
        %1778 = vmatpush1.msra.mxu0 0.0
        %1779 = vmatprep.subr.mxu0 0.0
        %1780 = vmatpush1.msra.mxu0 0.0
        %1781 = vmatprep.subr.mxu0 0.0
        %1782 = vmatpush1.msra.mxu0 0.0
        %1783 = vmatprep.subr.mxu0 0.0
        %1784 = vmatpush1.msra.mxu0 0.0
        %1785 = vmatprep.subr.mxu0 0.0
        %1786 = vmatpush1.msra.mxu0 0.0
        %1787 = vmatprep.subr.mxu0 0.0
        %1788 = vmatpush1.msra.mxu0 0.0
        %1789 = vmatprep.subr.mxu0 0.0
        %1790 = vmatpush1.msra.mxu0 0.0
        %1791 = vmatprep.subr.mxu0 0.0
        %1792 = vmatpush1.msra.mxu0 0.0
        %1793 = vmatprep.subr.mxu0 0.0
        %1794 = vmatpush1.msra.mxu0 0.0
        %1795 = vmatprep.subr.mxu0 0.0
        %1796 = vmatpush1.msra.mxu0 0.0
        %1797 = vmatprep.subr.mxu0 0.0
        %1798 = vmatpush1.msra.mxu0 0.0
        %1799 = vmatprep.subr.mxu0 0.0
        %1800 = vmatpush1.msra.mxu0 0.0
        %1801 = vmatprep.subr.mxu0 0.0
        %1802 = vmatpush1.msra.mxu0 0.0
        %1803 = vmatprep.subr.mxu0 0.0
        %1804 = vmatpush1.msra.mxu0 0.0
        %1805 = vmatprep.subr.mxu0 0.0
        %1806 = vmatpush1.msra.mxu0 0.0
        %1807 = vmatprep.subr.mxu0 0.0
        %1808 = vmatpush1.msra.mxu0 0.0
        %1809 = vmatprep.subr.mxu0 0.0
        %1810 = vmatpush1.msra.mxu0 0.0
        %1811 = vmatprep.subr.mxu0 0.0
        %1812 = vmatpush1.msra.mxu0 0.0
        %1813 = vmatprep.subr.mxu0 0.0
        %1814 = vmatpush1.msra.mxu0 0.0
        %1815 = vmatprep.subr.mxu0 0.0
        %1816 = vmatpush1.msra.mxu0 0.0
        %1817 = vmatprep.subr.mxu0 0.0
        %1818 = vmatpush1.msra.mxu0 0.0
        %1819 = vmatprep.mubr.f32.mxu0 0.0
        %v1820 = vand.u32 %v1039, 4294901760
        %1821 = vmatmul.mubr.f32.gmra.mrb[0].mxu0 %v1820
        %v1822 = vpop.f32.mrb[0].mxu0
        %v1823 = vadd.f32 %v1712, %v1822
        %v1824 = vpop.f32.mrb[0].mxu0
        %1825 = vmatprep.mubr.f32.mxu0 0.0
        %v1826 = vand.u32 %v1042, 4294901760
        %1827 = vmatmul.mubr.f32.gmra.mrb[0].mxu0 %v1826
        %v1828 = vpop.f32.mrb[0].mxu0
        %v1829 = vadd.f32 %v1722, %v1828
        %v1830 = vpop.f32.mrb[0].mxu0
        %1831 = vmatprep.mubr.f32.mxu0 0.0
        %v1832 = vand.u32 %v1045, 4294901760
        %1833 = vmatmul.mubr.f32.gmra.mrb[0].mxu0 %v1832
        %v1834 = vpop.f32.mrb[0].mxu0
        %v1835 = vadd.f32 %v1732, %v1834
        %v1836 = vpop.f32.mrb[0].mxu0
        %1837 = vmatprep.mubr.f32.mxu0 0.0
        %v1838 = vand.u32 %v1048, 4294901760
        %1839 = vmatmul.mubr.f32.gmra.mrb[0].mxu0 %v1838
        %v1840 = vpop.f32.mrb[0].mxu0
        %v1841 = vadd.f32 %v1742, %v1840
        %v1842 = vpop.f32.mrb[0].mxu0
        %1843 = vdwg.mxu0
        %1844 = vmatprep.subr.mxu0 0.0
        %v1845 = vand.u32 %v1001, 4294901760
        %v1846 = vsub.f32 %v1001, %v1845
        %1847 = vmatpush1.msra.mxu0 %v1846
        %1848 = vmatprep.subr.mxu0 0.0
        %v1849 = vand.u32 %v1007, 4294901760
        %v1850 = vsub.f32 %v1007, %v1849
        %1851 = vmatpush1.msra.mxu0 %v1850
        %1852 = vmatprep.subr.mxu0 0.0
        %1853 = vmatpush1.msra.mxu0 0.0
        %1854 = vmatprep.subr.mxu0 0.0
        %1855 = vmatpush1.msra.mxu0 0.0
        %1856 = vmatprep.subr.mxu0 0.0
        %1857 = vmatpush1.msra.mxu0 0.0
        %1858 = vmatprep.subr.mxu0 0.0
        %1859 = vmatpush1.msra.mxu0 0.0
        %1860 = vmatprep.subr.mxu0 0.0
        %1861 = vmatpush1.msra.mxu0 0.0
        %1862 = vmatprep.subr.mxu0 0.0
        %1863 = vmatpush1.msra.mxu0 0.0
        %1864 = vmatprep.subr.mxu0 0.0
        %1865 = vmatpush1.msra.mxu0 0.0
        %1866 = vmatprep.subr.mxu0 0.0
        %1867 = vmatpush1.msra.mxu0 0.0
        %1868 = vmatprep.subr.mxu0 0.0
        %1869 = vmatpush1.msra.mxu0 0.0
        %1870 = vmatprep.subr.mxu0 0.0
        %1871 = vmatpush1.msra.mxu0 0.0
        %1872 = vmatprep.subr.mxu0 0.0
        %1873 = vmatpush1.msra.mxu0 0.0
        %1874 = vmatprep.subr.mxu0 0.0
        %1875 = vmatpush1.msra.mxu0 0.0
        %1876 = vmatprep.subr.mxu0 0.0
        %1877 = vmatpush1.msra.mxu0 0.0
        %1878 = vmatprep.subr.mxu0 0.0
        %1879 = vmatpush1.msra.mxu0 0.0
        %1880 = vmatprep.subr.mxu0 0.0
        %1881 = vmatpush1.msra.mxu0 0.0
        %1882 = vmatprep.subr.mxu0 0.0
        %1883 = vmatpush1.msra.mxu0 0.0
        %1884 = vmatprep.subr.mxu0 0.0
        %1885 = vmatpush1.msra.mxu0 0.0
        %1886 = vmatprep.subr.mxu0 0.0
        %1887 = vmatpush1.msra.mxu0 0.0
        %1888 = vmatprep.subr.mxu0 0.0
        %1889 = vmatpush1.msra.mxu0 0.0
        %1890 = vmatprep.subr.mxu0 0.0
        %1891 = vmatpush1.msra.mxu0 0.0
        %1892 = vmatprep.subr.mxu0 0.0
        %1893 = vmatpush1.msra.mxu0 0.0
        %1894 = vmatprep.subr.mxu0 0.0
        %1895 = vmatpush1.msra.mxu0 0.0
        %1896 = vmatprep.subr.mxu0 0.0
        %1897 = vmatpush1.msra.mxu0 0.0
        %1898 = vmatprep.subr.mxu0 0.0
        %1899 = vmatpush1.msra.mxu0 0.0
        %1900 = vmatprep.subr.mxu0 0.0
        %1901 = vmatpush1.msra.mxu0 0.0
        %1902 = vmatprep.subr.mxu0 0.0
        %1903 = vmatpush1.msra.mxu0 0.0
        %1904 = vmatprep.subr.mxu0 0.0
        %1905 = vmatpush1.msra.mxu0 0.0
        %1906 = vmatprep.subr.mxu0 0.0
        %1907 = vmatpush1.msra.mxu0 0.0
        %1908 = vmatprep.subr.mxu0 0.0
        %1909 = vmatpush1.msra.mxu0 0.0
        %1910 = vmatprep.subr.mxu0 0.0
        %1911 = vmatpush1.msra.mxu0 0.0
        %1912 = vmatprep.mubr.f32.mxu0 0.0
        %v1913 = vand.u32 %v1039, 4294901760
        %v1914 = vsub.f32 %v1039, %v1913
        %1915 = vmatmul.mubr.f32.gmra.mrb[0].mxu0 %v1914
        %v1916 = vpop.f32.mrb[0].mxu0
        %v1917 = vadd.f32 %v1823, %v1916
        %v1918 = vpop.f32.mrb[0].mxu0
        %1919 = vmatprep.mubr.f32.mxu0 0.0
        %v1920 = vand.u32 %v1042, 4294901760
        %v1921 = vsub.f32 %v1042, %v1920
        %1922 = vmatmul.mubr.f32.gmra.mrb[0].mxu0 %v1921
        %v1923 = vpop.f32.mrb[0].mxu0
        %v1924 = vadd.f32 %v1829, %v1923
        %v1925 = vpop.f32.mrb[0].mxu0
        %1926 = vmatprep.mubr.f32.mxu0 0.0
        %v1927 = vand.u32 %v1045, 4294901760
        %v1928 = vsub.f32 %v1045, %v1927
        %1929 = vmatmul.mubr.f32.gmra.mrb[0].mxu0 %v1928
        %v1930 = vpop.f32.mrb[0].mxu0
        %v1931 = vadd.f32 %v1835, %v1930
        %v1932 = vpop.f32.mrb[0].mxu0
        %1933 = vmatprep.mubr.f32.mxu0 0.0
        %v1934 = vand.u32 %v1048, 4294901760
        %v1935 = vsub.f32 %v1048, %v1934
        %1936 = vmatmul.mubr.f32.gmra.mrb[0].mxu0 %v1935
        %v1937 = vpop.f32.mrb[0].mxu0
        %v1938 = vadd.f32 %v1841, %v1937
        %v1939 = vpop.f32.mrb[0].mxu0
        %1940 = vdwg.mxu0
        %1941 = vmatprep.subr.mxu0 0.0
        %v1942 = vand.u32 %v1001, 4294901760
        %1943 = vmatpush1.msra.mxu0 %v1942
        %1944 = vmatprep.subr.mxu0 0.0
        %v1945 = vand.u32 %v1007, 4294901760
        %1946 = vmatpush1.msra.mxu0 %v1945
        %1947 = vmatprep.subr.mxu0 0.0
        %1948 = vmatpush1.msra.mxu0 0.0
        %1949 = vmatprep.subr.mxu0 0.0
        %1950 = vmatpush1.msra.mxu0 0.0
        %1951 = vmatprep.subr.mxu0 0.0
        %1952 = vmatpush1.msra.mxu0 0.0
        %1953 = vmatprep.subr.mxu0 0.0
        %1954 = vmatpush1.msra.mxu0 0.0
        %1955 = vmatprep.subr.mxu0 0.0
        %1956 = vmatpush1.msra.mxu0 0.0
        %1957 = vmatprep.subr.mxu0 0.0
        %1958 = vmatpush1.msra.mxu0 0.0
        %1959 = vmatprep.subr.mxu0 0.0
        %1960 = vmatpush1.msra.mxu0 0.0
        %1961 = vmatprep.subr.mxu0 0.0
        %1962 = vmatpush1.msra.mxu0 0.0
        %1963 = vmatprep.subr.mxu0 0.0
        %1964 = vmatpush1.msra.mxu0 0.0
        %1965 = vmatprep.subr.mxu0 0.0
        %1966 = vmatpush1.msra.mxu0 0.0
        %1967 = vmatprep.subr.mxu0 0.0
        %1968 = vmatpush1.msra.mxu0 0.0
        %1969 = vmatprep.subr.mxu0 0.0
        %1970 = vmatpush1.msra.mxu0 0.0
        %1971 = vmatprep.subr.mxu0 0.0
        %1972 = vmatpush1.msra.mxu0 0.0
        %1973 = vmatprep.subr.mxu0 0.0
        %1974 = vmatpush1.msra.mxu0 0.0
        %1975 = vmatprep.subr.mxu0 0.0
        %1976 = vmatpush1.msra.mxu0 0.0
        %1977 = vmatprep.subr.mxu0 0.0
        %1978 = vmatpush1.msra.mxu0 0.0
        %1979 = vmatprep.subr.mxu0 0.0
        %1980 = vmatpush1.msra.mxu0 0.0
        %1981 = vmatprep.subr.mxu0 0.0
        %1982 = vmatpush1.msra.mxu0 0.0
        %1983 = vmatprep.subr.mxu0 0.0
        %1984 = vmatpush1.msra.mxu0 0.0
        %1985 = vmatprep.subr.mxu0 0.0
        %1986 = vmatpush1.msra.mxu0 0.0
        %1987 = vmatprep.subr.mxu0 0.0
        %1988 = vmatpush1.msra.mxu0 0.0
        %1989 = vmatprep.subr.mxu0 0.0
        %1990 = vmatpush1.msra.mxu0 0.0
        %1991 = vmatprep.subr.mxu0 0.0
        %1992 = vmatpush1.msra.mxu0 0.0
        %1993 = vmatprep.subr.mxu0 0.0
        %1994 = vmatpush1.msra.mxu0 0.0
        %1995 = vmatprep.subr.mxu0 0.0
        %1996 = vmatpush1.msra.mxu0 0.0
        %1997 = vmatprep.subr.mxu0 0.0
        %1998 = vmatpush1.msra.mxu0 0.0
        %1999 = vmatprep.subr.mxu0 0.0
        %2000 = vmatpush1.msra.mxu0 0.0
        %2001 = vmatprep.subr.mxu0 0.0
        %2002 = vmatpush1.msra.mxu0 0.0
        %2003 = vmatprep.subr.mxu0 0.0
        %2004 = vmatpush1.msra.mxu0 0.0
        %2005 = vmatprep.subr.mxu0 0.0
        %2006 = vmatpush1.msra.mxu0 0.0
        %2007 = vmatprep.mubr.f32.mxu0 0.0
        %v2008 = vand.u32 %v1039, 4294901760
        %v2009 = vsub.f32 %v1039, %v2008
        %v2010 = vand.u32 %v2009, 4294901760
        %2011 = vmatmul.mubr.f32.gmra.mrb[0].mxu0 %v2010
        %v2012 = vpop.f32.mrb[0].mxu0
        %v2013 = vadd.f32 %v1917, %v2012
        %v2014 = vpop.f32.mrb[0].mxu0
        %2015 = vmatprep.mubr.f32.mxu0 0.0
        %v2016 = vand.u32 %v1042, 4294901760
        %v2017 = vsub.f32 %v1042, %v2016
        %v2018 = vand.u32 %v2017, 4294901760
        %2019 = vmatmul.mubr.f32.gmra.mrb[0].mxu0 %v2018
        %v2020 = vpop.f32.mrb[0].mxu0
        %v2021 = vadd.f32 %v1924, %v2020
        %v2022 = vpop.f32.mrb[0].mxu0
        %2023 = vmatprep.mubr.f32.mxu0 0.0
        %v2024 = vand.u32 %v1045, 4294901760
        %v2025 = vsub.f32 %v1045, %v2024
        %v2026 = vand.u32 %v2025, 4294901760
        %2027 = vmatmul.mubr.f32.gmra.mrb[0].mxu0 %v2026
        %v2028 = vpop.f32.mrb[0].mxu0
        %v2029 = vadd.f32 %v1931, %v2028
        %v2030 = vpop.f32.mrb[0].mxu0
        %2031 = vmatprep.mubr.f32.mxu0 0.0
        %v2032 = vand.u32 %v1048, 4294901760
        %v2033 = vsub.f32 %v1048, %v2032
        %v2034 = vand.u32 %v2033, 4294901760
        %2035 = vmatmul.mubr.f32.gmra.mrb[0].mxu0 %v2034
        %v2036 = vpop.f32.mrb[0].mxu0
        %v2037 = vadd.f32 %v1938, %v2036
        %v2038 = vpop.f32.mrb[0].mxu0
        %2039 = vdwg.mxu0
        %2040 = vmatprep.subr.mxu0 0.0
        %v2041 = vand.u32 %v1001, 4294901760
        %v2042 = vsub.f32 %v1001, %v2041
        %v2043 = vand.u32 %v2042, 4294901760
        %2044 = vmatpush1.msra.mxu0 %v2043
        %2045 = vmatprep.subr.mxu0 0.0
        %v2046 = vand.u32 %v1007, 4294901760
        %v2047 = vsub.f32 %v1007, %v2046
        %v2048 = vand.u32 %v2047, 4294901760
        %2049 = vmatpush1.msra.mxu0 %v2048
        %2050 = vmatprep.subr.mxu0 0.0
        %2051 = vmatpush1.msra.mxu0 0.0
        %2052 = vmatprep.subr.mxu0 0.0
        %2053 = vmatpush1.msra.mxu0 0.0
        %2054 = vmatprep.subr.mxu0 0.0
        %2055 = vmatpush1.msra.mxu0 0.0
        %2056 = vmatprep.subr.mxu0 0.0
        %2057 = vmatpush1.msra.mxu0 0.0
        %2058 = vmatprep.subr.mxu0 0.0
        %2059 = vmatpush1.msra.mxu0 0.0
        %2060 = vmatprep.subr.mxu0 0.0
        %2061 = vmatpush1.msra.mxu0 0.0
        %2062 = vmatprep.subr.mxu0 0.0
        %2063 = vmatpush1.msra.mxu0 0.0
        %2064 = vmatprep.subr.mxu0 0.0
        %2065 = vmatpush1.msra.mxu0 0.0
        %2066 = vmatprep.subr.mxu0 0.0
        %2067 = vmatpush1.msra.mxu0 0.0
        %2068 = vmatprep.subr.mxu0 0.0
        %2069 = vmatpush1.msra.mxu0 0.0
        %2070 = vmatprep.subr.mxu0 0.0
        %2071 = vmatpush1.msra.mxu0 0.0
        %2072 = vmatprep.subr.mxu0 0.0
        %2073 = vmatpush1.msra.mxu0 0.0
        %2074 = vmatprep.subr.mxu0 0.0
        %2075 = vmatpush1.msra.mxu0 0.0
        %2076 = vmatprep.subr.mxu0 0.0
        %2077 = vmatpush1.msra.mxu0 0.0
        %2078 = vmatprep.subr.mxu0 0.0
        %2079 = vmatpush1.msra.mxu0 0.0
        %2080 = vmatprep.subr.mxu0 0.0
        %2081 = vmatpush1.msra.mxu0 0.0
        %2082 = vmatprep.subr.mxu0 0.0
        %2083 = vmatpush1.msra.mxu0 0.0
        %2084 = vmatprep.subr.mxu0 0.0
        %2085 = vmatpush1.msra.mxu0 0.0
        %2086 = vmatprep.subr.mxu0 0.0
        %2087 = vmatpush1.msra.mxu0 0.0
        %2088 = vmatprep.subr.mxu0 0.0
        %2089 = vmatpush1.msra.mxu0 0.0
        %2090 = vmatprep.subr.mxu0 0.0
        %2091 = vmatpush1.msra.mxu0 0.0
        %2092 = vmatprep.subr.mxu0 0.0
        %2093 = vmatpush1.msra.mxu0 0.0
        %2094 = vmatprep.subr.mxu0 0.0
        %2095 = vmatpush1.msra.mxu0 0.0
        %2096 = vmatprep.subr.mxu0 0.0
        %2097 = vmatpush1.msra.mxu0 0.0
        %2098 = vmatprep.subr.mxu0 0.0
        %2099 = vmatpush1.msra.mxu0 0.0
        %2100 = vmatprep.subr.mxu0 0.0
        %2101 = vmatpush1.msra.mxu0 0.0
        %2102 = vmatprep.subr.mxu0 0.0
        %2103 = vmatpush1.msra.mxu0 0.0
        %2104 = vmatprep.subr.mxu0 0.0
        %2105 = vmatpush1.msra.mxu0 0.0
        %2106 = vmatprep.subr.mxu0 0.0
        %2107 = vmatpush1.msra.mxu0 0.0
        %2108 = vmatprep.subr.mxu0 0.0
        %2109 = vmatpush1.msra.mxu0 0.0
        %2110 = vmatprep.mubr.f32.mxu0 0.0
        %v2111 = vand.u32 %v1039, 4294901760
        %2112 = vmatmul.mubr.f32.gmra.mrb[0].mxu0 %v2111
        %v2113 = vpop.f32.mrb[0].mxu0
        %v2114 = vadd.f32 %v2013, %v2113
        %v2115 = vpop.f32.mrb[0].mxu0
        %2116 = vmatprep.mubr.f32.mxu0 0.0
        %v2117 = vand.u32 %v1042, 4294901760
        %2118 = vmatmul.mubr.f32.gmra.mrb[0].mxu0 %v2117
        %v2119 = vpop.f32.mrb[0].mxu0
        %v2120 = vadd.f32 %v2021, %v2119
        %v2121 = vpop.f32.mrb[0].mxu0
        %2122 = vmatprep.mubr.f32.mxu0 0.0
        %v2123 = vand.u32 %v1045, 4294901760
        %2124 = vmatmul.mubr.f32.gmra.mrb[0].mxu0 %v2123
        %v2125 = vpop.f32.mrb[0].mxu0
        %v2126 = vadd.f32 %v2029, %v2125
        %v2127 = vpop.f32.mrb[0].mxu0
        %2128 = vmatprep.mubr.f32.mxu0 0.0
        %v2129 = vand.u32 %v1048, 4294901760
        %2130 = vmatmul.mubr.f32.gmra.mrb[0].mxu0 %v2129
        %v2131 = vpop.f32.mrb[0].mxu0
        %v2132 = vadd.f32 %v2037, %v2131
        %v2133 = vpop.f32.mrb[0].mxu0
        %2134 = vdwg.mxu0
        %2135 = vmatprep.subr.mxu0 0.0
        %v2136 = vand.u32 %v1001, 4294901760
        %2137 = vmatpush1.msra.mxu0 %v2136
        %2138 = vmatprep.subr.mxu0 0.0
        %v2139 = vand.u32 %v1007, 4294901760
        %2140 = vmatpush1.msra.mxu0 %v2139
        %2141 = vmatprep.subr.mxu0 0.0
        %2142 = vmatpush1.msra.mxu0 0.0
        %2143 = vmatprep.subr.mxu0 0.0
        %2144 = vmatpush1.msra.mxu0 0.0
        %2145 = vmatprep.subr.mxu0 0.0
        %2146 = vmatpush1.msra.mxu0 0.0
        %2147 = vmatprep.subr.mxu0 0.0
        %2148 = vmatpush1.msra.mxu0 0.0
        %2149 = vmatprep.subr.mxu0 0.0
        %2150 = vmatpush1.msra.mxu0 0.0
        %2151 = vmatprep.subr.mxu0 0.0
        %2152 = vmatpush1.msra.mxu0 0.0
        %2153 = vmatprep.subr.mxu0 0.0
        %2154 = vmatpush1.msra.mxu0 0.0
        %2155 = vmatprep.subr.mxu0 0.0
        %2156 = vmatpush1.msra.mxu0 0.0
        %2157 = vmatprep.subr.mxu0 0.0
        %2158 = vmatpush1.msra.mxu0 0.0
        %2159 = vmatprep.subr.mxu0 0.0
        %2160 = vmatpush1.msra.mxu0 0.0
        %2161 = vmatprep.subr.mxu0 0.0
        %2162 = vmatpush1.msra.mxu0 0.0
        %2163 = vmatprep.subr.mxu0 0.0
        %2164 = vmatpush1.msra.mxu0 0.0
        %2165 = vmatprep.subr.mxu0 0.0
        %2166 = vmatpush1.msra.mxu0 0.0
        %2167 = vmatprep.subr.mxu0 0.0
        %2168 = vmatpush1.msra.mxu0 0.0
        %2169 = vmatprep.subr.mxu0 0.0
        %2170 = vmatpush1.msra.mxu0 0.0
        %2171 = vmatprep.subr.mxu0 0.0
        %2172 = vmatpush1.msra.mxu0 0.0
        %2173 = vmatprep.subr.mxu0 0.0
        %2174 = vmatpush1.msra.mxu0 0.0
        %2175 = vmatprep.subr.mxu0 0.0
        %2176 = vmatpush1.msra.mxu0 0.0
        %2177 = vmatprep.subr.mxu0 0.0
        %2178 = vmatpush1.msra.mxu0 0.0
        %2179 = vmatprep.subr.mxu0 0.0
        %2180 = vmatpush1.msra.mxu0 0.0
        %2181 = vmatprep.subr.mxu0 0.0
        %2182 = vmatpush1.msra.mxu0 0.0
        %2183 = vmatprep.subr.mxu0 0.0
        %2184 = vmatpush1.msra.mxu0 0.0
        %2185 = vmatprep.subr.mxu0 0.0
        %2186 = vmatpush1.msra.mxu0 0.0
        %2187 = vmatprep.subr.mxu0 0.0
        %2188 = vmatpush1.msra.mxu0 0.0
        %2189 = vmatprep.subr.mxu0 0.0
        %2190 = vmatpush1.msra.mxu0 0.0
        %2191 = vmatprep.subr.mxu0 0.0
        %2192 = vmatpush1.msra.mxu0 0.0
        %2193 = vmatprep.subr.mxu0 0.0
        %2194 = vmatpush1.msra.mxu0 0.0
        %2195 = vmatprep.subr.mxu0 0.0
        %2196 = vmatpush1.msra.mxu0 0.0
        %2197 = vmatprep.subr.mxu0 0.0
        %2198 = vmatpush1.msra.mxu0 0.0
        %2199 = vmatprep.subr.mxu0 0.0
        %2200 = vmatpush1.msra.mxu0 0.0
        %2201 = vmatprep.mubr.f32.mxu0 0.0
        %v2202 = vand.u32 %v1039, 4294901760
        %2203 = vmatmul.mubr.f32.gmra.mrb[0].mxu0 %v2202
        %v2204 = vpop.f32.mrb[0].mxu0
        %v2205 = vadd.f32 %v2114, %v2204
        %v2206 = vpop.f32.mrb[0].mxu0
        %2207 = vmatprep.mubr.f32.mxu0 0.0
        %v2208 = vand.u32 %v1042, 4294901760
        %2209 = vmatmul.mubr.f32.gmra.mrb[0].mxu0 %v2208
        %v2210 = vpop.f32.mrb[0].mxu0
        %v2211 = vadd.f32 %v2120, %v2210
        %v2212 = vpop.f32.mrb[0].mxu0
        %2213 = vmatprep.mubr.f32.mxu0 0.0
        %v2214 = vand.u32 %v1045, 4294901760
        %2215 = vmatmul.mubr.f32.gmra.mrb[0].mxu0 %v2214
        %v2216 = vpop.f32.mrb[0].mxu0
        %v2217 = vadd.f32 %v2126, %v2216
        %v2218 = vpop.f32.mrb[0].mxu0
        %2219 = vmatprep.mubr.f32.mxu0 0.0
        %v2220 = vand.u32 %v1048, 4294901760
        %2221 = vmatmul.mubr.f32.gmra.mrb[0].mxu0 %v2220
        %v2222 = vpop.f32.mrb[0].mxu0
        %v2223 = vadd.f32 %v2132, %v2222
        %v2224 = vpop.f32.mrb[0].mxu0
        %2225 = vdwg.mxu0
        %2226 = vmatprep.subr.mxu0 0.0
        %v2227 = vand.u32 %v1013, 4294901760
        %2228 = vmatpush1.msra.mxu0 %v2227
        %2229 = vmatprep.subr.mxu0 0.0
        %v2230 = vand.u32 %v1019, 4294901760
        %2231 = vmatpush1.msra.mxu0 %v2230
        %2232 = vmatprep.subr.mxu0 0.0
        %2233 = vmatpush1.msra.mxu0 0.0
        %2234 = vmatprep.subr.mxu0 0.0
        %2235 = vmatpush1.msra.mxu0 0.0
        %2236 = vmatprep.subr.mxu0 0.0
        %2237 = vmatpush1.msra.mxu0 0.0
        %2238 = vmatprep.subr.mxu0 0.0
        %2239 = vmatpush1.msra.mxu0 0.0
        %2240 = vmatprep.subr.mxu0 0.0
        %2241 = vmatpush1.msra.mxu0 0.0
        %2242 = vmatprep.subr.mxu0 0.0
        %2243 = vmatpush1.msra.mxu0 0.0
        %2244 = vmatprep.subr.mxu0 0.0
        %2245 = vmatpush1.msra.mxu0 0.0
        %2246 = vmatprep.subr.mxu0 0.0
        %2247 = vmatpush1.msra.mxu0 0.0
        %2248 = vmatprep.subr.mxu0 0.0
        %2249 = vmatpush1.msra.mxu0 0.0
        %2250 = vmatprep.subr.mxu0 0.0
        %2251 = vmatpush1.msra.mxu0 0.0
        %2252 = vmatprep.subr.mxu0 0.0
        %2253 = vmatpush1.msra.mxu0 0.0
        %2254 = vmatprep.subr.mxu0 0.0
        %2255 = vmatpush1.msra.mxu0 0.0
        %2256 = vmatprep.subr.mxu0 0.0
        %2257 = vmatpush1.msra.mxu0 0.0
        %2258 = vmatprep.subr.mxu0 0.0
        %2259 = vmatpush1.msra.mxu0 0.0
        %2260 = vmatprep.subr.mxu0 0.0
        %2261 = vmatpush1.msra.mxu0 0.0
        %2262 = vmatprep.subr.mxu0 0.0
        %2263 = vmatpush1.msra.mxu0 0.0
        %2264 = vmatprep.subr.mxu0 0.0
        %2265 = vmatpush1.msra.mxu0 0.0
        %2266 = vmatprep.subr.mxu0 0.0
        %2267 = vmatpush1.msra.mxu0 0.0
        %2268 = vmatprep.subr.mxu0 0.0
        %2269 = vmatpush1.msra.mxu0 0.0
        %2270 = vmatprep.subr.mxu0 0.0
        %2271 = vmatpush1.msra.mxu0 0.0
        %2272 = vmatprep.subr.mxu0 0.0
        %2273 = vmatpush1.msra.mxu0 0.0
        %2274 = vmatprep.subr.mxu0 0.0
        %2275 = vmatpush1.msra.mxu0 0.0
        %2276 = vmatprep.subr.mxu0 0.0
        %2277 = vmatpush1.msra.mxu0 0.0
        %2278 = vmatprep.subr.mxu0 0.0
        %2279 = vmatpush1.msra.mxu0 0.0
        %2280 = vmatprep.subr.mxu0 0.0
        %2281 = vmatpush1.msra.mxu0 0.0
        %2282 = vmatprep.subr.mxu0 0.0
        %2283 = vmatpush1.msra.mxu0 0.0
        %2284 = vmatprep.subr.mxu0 0.0
        %2285 = vmatpush1.msra.mxu0 0.0
        %2286 = vmatprep.subr.mxu0 0.0
        %2287 = vmatpush1.msra.mxu0 0.0
        %2288 = vmatprep.subr.mxu0 0.0
        %2289 = vmatpush1.msra.mxu0 0.0
        %2290 = vmatprep.subr.mxu0 0.0
        %2291 = vmatpush1.msra.mxu0 0.0
        %2292 = vmatprep.mubr.f32.mxu0 0.0
        %v2293 = vand.u32 %v1039, 4294901760
        %v2294 = vsub.f32 %v1039, %v2293
        %v2295 = vand.u32 %v2294, 4294901760
        %v2296 = vsub.f32 %v2294, %v2295
        %v2297 = vand.u32 %v2296, 4294901760
        %2298 = vmatmul.mubr.f32.gmra.mrb[0].mxu0 %v2297
        %v2299 = vpop.f32.mrb[0].mxu0
        %v2300 = vadd.f32 0.0, %v2299
        %v2301 = vpop.f32.mrb[0].mxu0
        %2302 = vmatprep.mubr.f32.mxu0 0.0
        %v2303 = vand.u32 %v1042, 4294901760
        %v2304 = vsub.f32 %v1042, %v2303
        %v2305 = vand.u32 %v2304, 4294901760
        %v2306 = vsub.f32 %v2304, %v2305
        %v2307 = vand.u32 %v2306, 4294901760
        %2308 = vmatmul.mubr.f32.gmra.mrb[0].mxu0 %v2307
        %v2309 = vpop.f32.mrb[0].mxu0
        %v2310 = vadd.f32 0.0, %v2309
        %v2311 = vpop.f32.mrb[0].mxu0
        %2312 = vmatprep.mubr.f32.mxu0 0.0
        %v2313 = vand.u32 %v1045, 4294901760
        %v2314 = vsub.f32 %v1045, %v2313
        %v2315 = vand.u32 %v2314, 4294901760
        %v2316 = vsub.f32 %v2314, %v2315
        %v2317 = vand.u32 %v2316, 4294901760
        %2318 = vmatmul.mubr.f32.gmra.mrb[0].mxu0 %v2317
        %v2319 = vpop.f32.mrb[0].mxu0
        %v2320 = vadd.f32 0.0, %v2319
        %v2321 = vpop.f32.mrb[0].mxu0
        %2322 = vmatprep.mubr.f32.mxu0 0.0
        %v2323 = vand.u32 %v1048, 4294901760
        %v2324 = vsub.f32 %v1048, %v2323
        %v2325 = vand.u32 %v2324, 4294901760
        %v2326 = vsub.f32 %v2324, %v2325
        %v2327 = vand.u32 %v2326, 4294901760
        %2328 = vmatmul.mubr.f32.gmra.mrb[0].mxu0 %v2327
        %v2329 = vpop.f32.mrb[0].mxu0
        %v2330 = vadd.f32 0.0, %v2329
        %v2331 = vpop.f32.mrb[0].mxu0
        %2332 = vdwg.mxu0
        %2333 = vmatprep.subr.mxu0 0.0
        %v2334 = vand.u32 %v1013, 4294901760
        %v2335 = vsub.f32 %v1013, %v2334
        %v2336 = vand.u32 %v2335, 4294901760
        %v2337 = vsub.f32 %v2335, %v2336
        %v2338 = vand.u32 %v2337, 4294901760
        %2339 = vmatpush1.msra.mxu0 %v2338
        %2340 = vmatprep.subr.mxu0 0.0
        %v2341 = vand.u32 %v1019, 4294901760
        %v2342 = vsub.f32 %v1019, %v2341
        %v2343 = vand.u32 %v2342, 4294901760
        %v2344 = vsub.f32 %v2342, %v2343
        %v2345 = vand.u32 %v2344, 4294901760
        %2346 = vmatpush1.msra.mxu0 %v2345
        %2347 = vmatprep.subr.mxu0 0.0
        %2348 = vmatpush1.msra.mxu0 0.0
        %2349 = vmatprep.subr.mxu0 0.0
        %2350 = vmatpush1.msra.mxu0 0.0
        %2351 = vmatprep.subr.mxu0 0.0
        %2352 = vmatpush1.msra.mxu0 0.0
        %2353 = vmatprep.subr.mxu0 0.0
        %2354 = vmatpush1.msra.mxu0 0.0
        %2355 = vmatprep.subr.mxu0 0.0
        %2356 = vmatpush1.msra.mxu0 0.0
        %2357 = vmatprep.subr.mxu0 0.0
        %2358 = vmatpush1.msra.mxu0 0.0
        %2359 = vmatprep.subr.mxu0 0.0
        %2360 = vmatpush1.msra.mxu0 0.0
        %2361 = vmatprep.subr.mxu0 0.0
        %2362 = vmatpush1.msra.mxu0 0.0
        %2363 = vmatprep.subr.mxu0 0.0
        %2364 = vmatpush1.msra.mxu0 0.0
        %2365 = vmatprep.subr.mxu0 0.0
        %2366 = vmatpush1.msra.mxu0 0.0
        %2367 = vmatprep.subr.mxu0 0.0
        %2368 = vmatpush1.msra.mxu0 0.0
        %2369 = vmatprep.subr.mxu0 0.0
        %2370 = vmatpush1.msra.mxu0 0.0
        %2371 = vmatprep.subr.mxu0 0.0
        %2372 = vmatpush1.msra.mxu0 0.0
        %2373 = vmatprep.subr.mxu0 0.0
        %2374 = vmatpush1.msra.mxu0 0.0
        %2375 = vmatprep.subr.mxu0 0.0
        %2376 = vmatpush1.msra.mxu0 0.0
        %2377 = vmatprep.subr.mxu0 0.0
        %2378 = vmatpush1.msra.mxu0 0.0
        %2379 = vmatprep.subr.mxu0 0.0
        %2380 = vmatpush1.msra.mxu0 0.0
        %2381 = vmatprep.subr.mxu0 0.0
        %2382 = vmatpush1.msra.mxu0 0.0
        %2383 = vmatprep.subr.mxu0 0.0
        %2384 = vmatpush1.msra.mxu0 0.0
        %2385 = vmatprep.subr.mxu0 0.0
        %2386 = vmatpush1.msra.mxu0 0.0
        %2387 = vmatprep.subr.mxu0 0.0
        %2388 = vmatpush1.msra.mxu0 0.0
        %2389 = vmatprep.subr.mxu0 0.0
        %2390 = vmatpush1.msra.mxu0 0.0
        %2391 = vmatprep.subr.mxu0 0.0
        %2392 = vmatpush1.msra.mxu0 0.0
        %2393 = vmatprep.subr.mxu0 0.0
        %2394 = vmatpush1.msra.mxu0 0.0
        %2395 = vmatprep.subr.mxu0 0.0
        %2396 = vmatpush1.msra.mxu0 0.0
        %2397 = vmatprep.subr.mxu0 0.0
        %2398 = vmatpush1.msra.mxu0 0.0
        %2399 = vmatprep.subr.mxu0 0.0
        %2400 = vmatpush1.msra.mxu0 0.0
        %2401 = vmatprep.subr.mxu0 0.0
        %2402 = vmatpush1.msra.mxu0 0.0
        %2403 = vmatprep.subr.mxu0 0.0
        %2404 = vmatpush1.msra.mxu0 0.0
        %2405 = vmatprep.subr.mxu0 0.0
        %2406 = vmatpush1.msra.mxu0 0.0
        %2407 = vmatprep.mubr.f32.mxu0 0.0
        %v2408 = vand.u32 %v1039, 4294901760
        %2409 = vmatmul.mubr.f32.gmra.mrb[0].mxu0 %v2408
        %v2410 = vpop.f32.mrb[0].mxu0
        %v2411 = vadd.f32 %v2300, %v2410
        %v2412 = vpop.f32.mrb[0].mxu0
        %2413 = vmatprep.mubr.f32.mxu0 0.0
        %v2414 = vand.u32 %v1042, 4294901760
        %2415 = vmatmul.mubr.f32.gmra.mrb[0].mxu0 %v2414
        %v2416 = vpop.f32.mrb[0].mxu0
        %v2417 = vadd.f32 %v2310, %v2416
        %v2418 = vpop.f32.mrb[0].mxu0
        %2419 = vmatprep.mubr.f32.mxu0 0.0
        %v2420 = vand.u32 %v1045, 4294901760
        %2421 = vmatmul.mubr.f32.gmra.mrb[0].mxu0 %v2420
        %v2422 = vpop.f32.mrb[0].mxu0
        %v2423 = vadd.f32 %v2320, %v2422
        %v2424 = vpop.f32.mrb[0].mxu0
        %2425 = vmatprep.mubr.f32.mxu0 0.0
        %v2426 = vand.u32 %v1048, 4294901760
        %2427 = vmatmul.mubr.f32.gmra.mrb[0].mxu0 %v2426
        %v2428 = vpop.f32.mrb[0].mxu0
        %v2429 = vadd.f32 %v2330, %v2428
        %v2430 = vpop.f32.mrb[0].mxu0
        %2431 = vdwg.mxu0
        %2432 = vmatprep.subr.mxu0 0.0
        %v2433 = vand.u32 %v1013, 4294901760
        %v2434 = vsub.f32 %v1013, %v2433
        %2435 = vmatpush1.msra.mxu0 %v2434
        %2436 = vmatprep.subr.mxu0 0.0
        %v2437 = vand.u32 %v1019, 4294901760
        %v2438 = vsub.f32 %v1019, %v2437
        %2439 = vmatpush1.msra.mxu0 %v2438
        %2440 = vmatprep.subr.mxu0 0.0
        %2441 = vmatpush1.msra.mxu0 0.0
        %2442 = vmatprep.subr.mxu0 0.0
        %2443 = vmatpush1.msra.mxu0 0.0
        %2444 = vmatprep.subr.mxu0 0.0
        %2445 = vmatpush1.msra.mxu0 0.0
        %2446 = vmatprep.subr.mxu0 0.0
        %2447 = vmatpush1.msra.mxu0 0.0
        %2448 = vmatprep.subr.mxu0 0.0
        %2449 = vmatpush1.msra.mxu0 0.0
        %2450 = vmatprep.subr.mxu0 0.0
        %2451 = vmatpush1.msra.mxu0 0.0
        %2452 = vmatprep.subr.mxu0 0.0
        %2453 = vmatpush1.msra.mxu0 0.0
        %2454 = vmatprep.subr.mxu0 0.0
        %2455 = vmatpush1.msra.mxu0 0.0
        %2456 = vmatprep.subr.mxu0 0.0
        %2457 = vmatpush1.msra.mxu0 0.0
        %2458 = vmatprep.subr.mxu0 0.0
        %2459 = vmatpush1.msra.mxu0 0.0
        %2460 = vmatprep.subr.mxu0 0.0
        %2461 = vmatpush1.msra.mxu0 0.0
        %2462 = vmatprep.subr.mxu0 0.0
        %2463 = vmatpush1.msra.mxu0 0.0
        %2464 = vmatprep.subr.mxu0 0.0
        %2465 = vmatpush1.msra.mxu0 0.0
        %2466 = vmatprep.subr.mxu0 0.0
        %2467 = vmatpush1.msra.mxu0 0.0
        %2468 = vmatprep.subr.mxu0 0.0
        %2469 = vmatpush1.msra.mxu0 0.0
        %2470 = vmatprep.subr.mxu0 0.0
        %2471 = vmatpush1.msra.mxu0 0.0
        %2472 = vmatprep.subr.mxu0 0.0
        %2473 = vmatpush1.msra.mxu0 0.0
        %2474 = vmatprep.subr.mxu0 0.0
        %2475 = vmatpush1.msra.mxu0 0.0
        %2476 = vmatprep.subr.mxu0 0.0
        %2477 = vmatpush1.msra.mxu0 0.0
        %2478 = vmatprep.subr.mxu0 0.0
        %2479 = vmatpush1.msra.mxu0 0.0
        %2480 = vmatprep.subr.mxu0 0.0
        %2481 = vmatpush1.msra.mxu0 0.0
        %2482 = vmatprep.subr.mxu0 0.0
        %2483 = vmatpush1.msra.mxu0 0.0
        %2484 = vmatprep.subr.mxu0 0.0
        %2485 = vmatpush1.msra.mxu0 0.0
        %2486 = vmatprep.subr.mxu0 0.0
        %2487 = vmatpush1.msra.mxu0 0.0
        %2488 = vmatprep.subr.mxu0 0.0
        %2489 = vmatpush1.msra.mxu0 0.0
        %2490 = vmatprep.subr.mxu0 0.0
        %2491 = vmatpush1.msra.mxu0 0.0
        %2492 = vmatprep.subr.mxu0 0.0
        %2493 = vmatpush1.msra.mxu0 0.0
        %2494 = vmatprep.subr.mxu0 0.0
        %2495 = vmatpush1.msra.mxu0 0.0
        %2496 = vmatprep.subr.mxu0 0.0
        %2497 = vmatpush1.msra.mxu0 0.0
        %2498 = vmatprep.subr.mxu0 0.0
        %2499 = vmatpush1.msra.mxu0 0.0
        %2500 = vmatprep.mubr.f32.mxu0 0.0
        %v2501 = vand.u32 %v1039, 4294901760
        %v2502 = vsub.f32 %v1039, %v2501
        %2503 = vmatmul.mubr.f32.gmra.mrb[0].mxu0 %v2502
        %v2504 = vpop.f32.mrb[0].mxu0
        %v2505 = vadd.f32 %v2411, %v2504
        %v2506 = vpop.f32.mrb[0].mxu0
        %2507 = vmatprep.mubr.f32.mxu0 0.0
        %v2508 = vand.u32 %v1042, 4294901760
        %v2509 = vsub.f32 %v1042, %v2508
        %2510 = vmatmul.mubr.f32.gmra.mrb[0].mxu0 %v2509
        %v2511 = vpop.f32.mrb[0].mxu0
        %v2512 = vadd.f32 %v2417, %v2511
        %v2513 = vpop.f32.mrb[0].mxu0
        %2514 = vmatprep.mubr.f32.mxu0 0.0
        %v2515 = vand.u32 %v1045, 4294901760
        %v2516 = vsub.f32 %v1045, %v2515
        %2517 = vmatmul.mubr.f32.gmra.mrb[0].mxu0 %v2516
        %v2518 = vpop.f32.mrb[0].mxu0
        %v2519 = vadd.f32 %v2423, %v2518
        %v2520 = vpop.f32.mrb[0].mxu0
        %2521 = vmatprep.mubr.f32.mxu0 0.0
        %v2522 = vand.u32 %v1048, 4294901760
        %v2523 = vsub.f32 %v1048, %v2522
        %2524 = vmatmul.mubr.f32.gmra.mrb[0].mxu0 %v2523
        %v2525 = vpop.f32.mrb[0].mxu0
        %v2526 = vadd.f32 %v2429, %v2525
        %v2527 = vpop.f32.mrb[0].mxu0
        %2528 = vdwg.mxu0
        %2529 = vmatprep.subr.mxu0 0.0
        %v2530 = vand.u32 %v1013, 4294901760
        %2531 = vmatpush1.msra.mxu0 %v2530
        %2532 = vmatprep.subr.mxu0 0.0
        %v2533 = vand.u32 %v1019, 4294901760
        %2534 = vmatpush1.msra.mxu0 %v2533
        %2535 = vmatprep.subr.mxu0 0.0
        %2536 = vmatpush1.msra.mxu0 0.0
        %2537 = vmatprep.subr.mxu0 0.0
        %2538 = vmatpush1.msra.mxu0 0.0
        %2539 = vmatprep.subr.mxu0 0.0
        %2540 = vmatpush1.msra.mxu0 0.0
        %2541 = vmatprep.subr.mxu0 0.0
        %2542 = vmatpush1.msra.mxu0 0.0
        %2543 = vmatprep.subr.mxu0 0.0
        %2544 = vmatpush1.msra.mxu0 0.0
        %2545 = vmatprep.subr.mxu0 0.0
        %2546 = vmatpush1.msra.mxu0 0.0
        %2547 = vmatprep.subr.mxu0 0.0
        %2548 = vmatpush1.msra.mxu0 0.0
        %2549 = vmatprep.subr.mxu0 0.0
        %2550 = vmatpush1.msra.mxu0 0.0
        %2551 = vmatprep.subr.mxu0 0.0
        %2552 = vmatpush1.msra.mxu0 0.0
        %2553 = vmatprep.subr.mxu0 0.0
        %2554 = vmatpush1.msra.mxu0 0.0
        %2555 = vmatprep.subr.mxu0 0.0
        %2556 = vmatpush1.msra.mxu0 0.0
        %2557 = vmatprep.subr.mxu0 0.0
        %2558 = vmatpush1.msra.mxu0 0.0
        %2559 = vmatprep.subr.mxu0 0.0
        %2560 = vmatpush1.msra.mxu0 0.0
        %2561 = vmatprep.subr.mxu0 0.0
        %2562 = vmatpush1.msra.mxu0 0.0
        %2563 = vmatprep.subr.mxu0 0.0
        %2564 = vmatpush1.msra.mxu0 0.0
        %2565 = vmatprep.subr.mxu0 0.0
        %2566 = vmatpush1.msra.mxu0 0.0
        %2567 = vmatprep.subr.mxu0 0.0
        %2568 = vmatpush1.msra.mxu0 0.0
        %2569 = vmatprep.subr.mxu0 0.0
        %2570 = vmatpush1.msra.mxu0 0.0
        %2571 = vmatprep.subr.mxu0 0.0
        %2572 = vmatpush1.msra.mxu0 0.0
        %2573 = vmatprep.subr.mxu0 0.0
        %2574 = vmatpush1.msra.mxu0 0.0
        %2575 = vmatprep.subr.mxu0 0.0
        %2576 = vmatpush1.msra.mxu0 0.0
        %2577 = vmatprep.subr.mxu0 0.0
        %2578 = vmatpush1.msra.mxu0 0.0
        %2579 = vmatprep.subr.mxu0 0.0
        %2580 = vmatpush1.msra.mxu0 0.0
        %2581 = vmatprep.subr.mxu0 0.0
        %2582 = vmatpush1.msra.mxu0 0.0
        %2583 = vmatprep.subr.mxu0 0.0
        %2584 = vmatpush1.msra.mxu0 0.0
        %2585 = vmatprep.subr.mxu0 0.0
        %2586 = vmatpush1.msra.mxu0 0.0
        %2587 = vmatprep.subr.mxu0 0.0
        %2588 = vmatpush1.msra.mxu0 0.0
        %2589 = vmatprep.subr.mxu0 0.0
        %2590 = vmatpush1.msra.mxu0 0.0
        %2591 = vmatprep.subr.mxu0 0.0
        %2592 = vmatpush1.msra.mxu0 0.0
        %2593 = vmatprep.subr.mxu0 0.0
        %2594 = vmatpush1.msra.mxu0 0.0
        %2595 = vmatprep.mubr.f32.mxu0 0.0
        %v2596 = vand.u32 %v1039, 4294901760
        %v2597 = vsub.f32 %v1039, %v2596
        %v2598 = vand.u32 %v2597, 4294901760
        %2599 = vmatmul.mubr.f32.gmra.mrb[0].mxu0 %v2598
        %v2600 = vpop.f32.mrb[0].mxu0
        %v2601 = vadd.f32 %v2505, %v2600
        %v2602 = vpop.f32.mrb[0].mxu0
        %2603 = vmatprep.mubr.f32.mxu0 0.0
        %v2604 = vand.u32 %v1042, 4294901760
        %v2605 = vsub.f32 %v1042, %v2604
        %v2606 = vand.u32 %v2605, 4294901760
        %2607 = vmatmul.mubr.f32.gmra.mrb[0].mxu0 %v2606
        %v2608 = vpop.f32.mrb[0].mxu0
        %v2609 = vadd.f32 %v2512, %v2608
        %v2610 = vpop.f32.mrb[0].mxu0
        %2611 = vmatprep.mubr.f32.mxu0 0.0
        %v2612 = vand.u32 %v1045, 4294901760
        %v2613 = vsub.f32 %v1045, %v2612
        %v2614 = vand.u32 %v2613, 4294901760
        %2615 = vmatmul.mubr.f32.gmra.mrb[0].mxu0 %v2614
        %v2616 = vpop.f32.mrb[0].mxu0
        %v2617 = vadd.f32 %v2519, %v2616
        %v2618 = vpop.f32.mrb[0].mxu0
        %2619 = vmatprep.mubr.f32.mxu0 0.0
        %v2620 = vand.u32 %v1048, 4294901760
        %v2621 = vsub.f32 %v1048, %v2620
        %v2622 = vand.u32 %v2621, 4294901760
        %2623 = vmatmul.mubr.f32.gmra.mrb[0].mxu0 %v2622
        %v2624 = vpop.f32.mrb[0].mxu0
        %v2625 = vadd.f32 %v2526, %v2624
        %v2626 = vpop.f32.mrb[0].mxu0
        %2627 = vdwg.mxu0
        %2628 = vmatprep.subr.mxu0 0.0
        %v2629 = vand.u32 %v1013, 4294901760
        %v2630 = vsub.f32 %v1013, %v2629
        %v2631 = vand.u32 %v2630, 4294901760
        %2632 = vmatpush1.msra.mxu0 %v2631
        %2633 = vmatprep.subr.mxu0 0.0
        %v2634 = vand.u32 %v1019, 4294901760
        %v2635 = vsub.f32 %v1019, %v2634
        %v2636 = vand.u32 %v2635, 4294901760
        %2637 = vmatpush1.msra.mxu0 %v2636
        %2638 = vmatprep.subr.mxu0 0.0
        %2639 = vmatpush1.msra.mxu0 0.0
        %2640 = vmatprep.subr.mxu0 0.0
        %2641 = vmatpush1.msra.mxu0 0.0
        %2642 = vmatprep.subr.mxu0 0.0
        %2643 = vmatpush1.msra.mxu0 0.0
        %2644 = vmatprep.subr.mxu0 0.0
        %2645 = vmatpush1.msra.mxu0 0.0
        %2646 = vmatprep.subr.mxu0 0.0
        %2647 = vmatpush1.msra.mxu0 0.0
        %2648 = vmatprep.subr.mxu0 0.0
        %2649 = vmatpush1.msra.mxu0 0.0
        %2650 = vmatprep.subr.mxu0 0.0
        %2651 = vmatpush1.msra.mxu0 0.0
        %2652 = vmatprep.subr.mxu0 0.0
        %2653 = vmatpush1.msra.mxu0 0.0
        %2654 = vmatprep.subr.mxu0 0.0
        %2655 = vmatpush1.msra.mxu0 0.0
        %2656 = vmatprep.subr.mxu0 0.0
        %2657 = vmatpush1.msra.mxu0 0.0
        %2658 = vmatprep.subr.mxu0 0.0
        %2659 = vmatpush1.msra.mxu0 0.0
        %2660 = vmatprep.subr.mxu0 0.0
        %2661 = vmatpush1.msra.mxu0 0.0
        %2662 = vmatprep.subr.mxu0 0.0
        %2663 = vmatpush1.msra.mxu0 0.0
        %2664 = vmatprep.subr.mxu0 0.0
        %2665 = vmatpush1.msra.mxu0 0.0
        %2666 = vmatprep.subr.mxu0 0.0
        %2667 = vmatpush1.msra.mxu0 0.0
        %2668 = vmatprep.subr.mxu0 0.0
        %2669 = vmatpush1.msra.mxu0 0.0
        %2670 = vmatprep.subr.mxu0 0.0
        %2671 = vmatpush1.msra.mxu0 0.0
        %2672 = vmatprep.subr.mxu0 0.0
        %2673 = vmatpush1.msra.mxu0 0.0
        %2674 = vmatprep.subr.mxu0 0.0
        %2675 = vmatpush1.msra.mxu0 0.0
        %2676 = vmatprep.subr.mxu0 0.0
        %2677 = vmatpush1.msra.mxu0 0.0
        %2678 = vmatprep.subr.mxu0 0.0
        %2679 = vmatpush1.msra.mxu0 0.0
        %2680 = vmatprep.subr.mxu0 0.0
        %2681 = vmatpush1.msra.mxu0 0.0
        %2682 = vmatprep.subr.mxu0 0.0
        %2683 = vmatpush1.msra.mxu0 0.0
        %2684 = vmatprep.subr.mxu0 0.0
        %2685 = vmatpush1.msra.mxu0 0.0
        %2686 = vmatprep.subr.mxu0 0.0
        %2687 = vmatpush1.msra.mxu0 0.0
        %2688 = vmatprep.subr.mxu0 0.0
        %2689 = vmatpush1.msra.mxu0 0.0
        %2690 = vmatprep.subr.mxu0 0.0
        %2691 = vmatpush1.msra.mxu0 0.0
        %2692 = vmatprep.subr.mxu0 0.0
        %2693 = vmatpush1.msra.mxu0 0.0
        %2694 = vmatprep.subr.mxu0 0.0
        %2695 = vmatpush1.msra.mxu0 0.0
        %2696 = vmatprep.subr.mxu0 0.0
        %2697 = vmatpush1.msra.mxu0 0.0
        %2698 = vmatprep.mubr.f32.mxu0 0.0
        %v2699 = vand.u32 %v1039, 4294901760
        %2700 = vmatmul.mubr.f32.gmra.mrb[0].mxu0 %v2699
        %v2701 = vpop.f32.mrb[0].mxu0
        %v2702 = vadd.f32 %v2601, %v2701
        %v2703 = vpop.f32.mrb[0].mxu0
        %2704 = vmatprep.mubr.f32.mxu0 0.0
        %v2705 = vand.u32 %v1042, 4294901760
        %2706 = vmatmul.mubr.f32.gmra.mrb[0].mxu0 %v2705
        %v2707 = vpop.f32.mrb[0].mxu0
        %v2708 = vadd.f32 %v2609, %v2707
        %v2709 = vpop.f32.mrb[0].mxu0
        %2710 = vmatprep.mubr.f32.mxu0 0.0
        %v2711 = vand.u32 %v1045, 4294901760
        %2712 = vmatmul.mubr.f32.gmra.mrb[0].mxu0 %v2711
        %v2713 = vpop.f32.mrb[0].mxu0
        %v2714 = vadd.f32 %v2617, %v2713
        %v2715 = vpop.f32.mrb[0].mxu0
        %2716 = vmatprep.mubr.f32.mxu0 0.0
        %v2717 = vand.u32 %v1048, 4294901760
        %2718 = vmatmul.mubr.f32.gmra.mrb[0].mxu0 %v2717
        %v2719 = vpop.f32.mrb[0].mxu0
        %v2720 = vadd.f32 %v2625, %v2719
        %v2721 = vpop.f32.mrb[0].mxu0
        %2722 = vdwg.mxu0
        %2723 = vmatprep.subr.mxu0 0.0
        %v2724 = vand.u32 %v1013, 4294901760
        %2725 = vmatpush1.msra.mxu0 %v2724
        %2726 = vmatprep.subr.mxu0 0.0
        %v2727 = vand.u32 %v1019, 4294901760
        %2728 = vmatpush1.msra.mxu0 %v2727
        %2729 = vmatprep.subr.mxu0 0.0
        %2730 = vmatpush1.msra.mxu0 0.0
        %2731 = vmatprep.subr.mxu0 0.0
        %2732 = vmatpush1.msra.mxu0 0.0
        %2733 = vmatprep.subr.mxu0 0.0
        %2734 = vmatpush1.msra.mxu0 0.0
        %2735 = vmatprep.subr.mxu0 0.0
        %2736 = vmatpush1.msra.mxu0 0.0
        %2737 = vmatprep.subr.mxu0 0.0
        %2738 = vmatpush1.msra.mxu0 0.0
        %2739 = vmatprep.subr.mxu0 0.0
        %2740 = vmatpush1.msra.mxu0 0.0
        %2741 = vmatprep.subr.mxu0 0.0
        %2742 = vmatpush1.msra.mxu0 0.0
        %2743 = vmatprep.subr.mxu0 0.0
        %2744 = vmatpush1.msra.mxu0 0.0
        %2745 = vmatprep.subr.mxu0 0.0
        %2746 = vmatpush1.msra.mxu0 0.0
        %2747 = vmatprep.subr.mxu0 0.0
        %2748 = vmatpush1.msra.mxu0 0.0
        %2749 = vmatprep.subr.mxu0 0.0
        %2750 = vmatpush1.msra.mxu0 0.0
        %2751 = vmatprep.subr.mxu0 0.0
        %2752 = vmatpush1.msra.mxu0 0.0
        %2753 = vmatprep.subr.mxu0 0.0
        %2754 = vmatpush1.msra.mxu0 0.0
        %2755 = vmatprep.subr.mxu0 0.0
        %2756 = vmatpush1.msra.mxu0 0.0
        %2757 = vmatprep.subr.mxu0 0.0
        %2758 = vmatpush1.msra.mxu0 0.0
        %2759 = vmatprep.subr.mxu0 0.0
        %2760 = vmatpush1.msra.mxu0 0.0
        %2761 = vmatprep.subr.mxu0 0.0
        %2762 = vmatpush1.msra.mxu0 0.0
        %2763 = vmatprep.subr.mxu0 0.0
        %2764 = vmatpush1.msra.mxu0 0.0
        %2765 = vmatprep.subr.mxu0 0.0
        %2766 = vmatpush1.msra.mxu0 0.0
        %2767 = vmatprep.subr.mxu0 0.0
        %2768 = vmatpush1.msra.mxu0 0.0
        %2769 = vmatprep.subr.mxu0 0.0
        %2770 = vmatpush1.msra.mxu0 0.0
        %2771 = vmatprep.subr.mxu0 0.0
        %2772 = vmatpush1.msra.mxu0 0.0
        %2773 = vmatprep.subr.mxu0 0.0
        %2774 = vmatpush1.msra.mxu0 0.0
        %2775 = vmatprep.subr.mxu0 0.0
        %2776 = vmatpush1.msra.mxu0 0.0
        %2777 = vmatprep.subr.mxu0 0.0
        %2778 = vmatpush1.msra.mxu0 0.0
        %2779 = vmatprep.subr.mxu0 0.0
        %2780 = vmatpush1.msra.mxu0 0.0
        %2781 = vmatprep.subr.mxu0 0.0
        %2782 = vmatpush1.msra.mxu0 0.0
        %2783 = vmatprep.subr.mxu0 0.0
        %2784 = vmatpush1.msra.mxu0 0.0
        %2785 = vmatprep.subr.mxu0 0.0
        %2786 = vmatpush1.msra.mxu0 0.0
        %2787 = vmatprep.subr.mxu0 0.0
        %2788 = vmatpush1.msra.mxu0 0.0
        %2789 = vmatprep.mubr.f32.mxu0 0.0
        %v2790 = vand.u32 %v1039, 4294901760
        %2791 = vmatmul.mubr.f32.gmra.mrb[0].mxu0 %v2790
        %v2792 = vpop.f32.mrb[0].mxu0
        %v2793 = vadd.f32 %v2702, %v2792
        %v2794 = vpop.f32.mrb[0].mxu0
        %2795 = vmatprep.mubr.f32.mxu0 0.0
        %v2796 = vand.u32 %v1042, 4294901760
        %2797 = vmatmul.mubr.f32.gmra.mrb[0].mxu0 %v2796
        %v2798 = vpop.f32.mrb[0].mxu0
        %v2799 = vadd.f32 %v2708, %v2798
        %v2800 = vpop.f32.mrb[0].mxu0
        %2801 = vmatprep.mubr.f32.mxu0 0.0
        %v2802 = vand.u32 %v1045, 4294901760
        %2803 = vmatmul.mubr.f32.gmra.mrb[0].mxu0 %v2802
        %v2804 = vpop.f32.mrb[0].mxu0
        %v2805 = vadd.f32 %v2714, %v2804
        %v2806 = vpop.f32.mrb[0].mxu0
        %2807 = vmatprep.mubr.f32.mxu0 0.0
        %v2808 = vand.u32 %v1048, 4294901760
        %2809 = vmatmul.mubr.f32.gmra.mrb[0].mxu0 %v2808
        %v2810 = vpop.f32.mrb[0].mxu0
        %v2811 = vadd.f32 %v2720, %v2810
        %v2812 = vpop.f32.mrb[0].mxu0
        %2813 = vdwg.mxu0
        %2814 = vmatprep.subr.mxu0 0.0
        %v2815 = vand.u32 %v1025, 4294901760
        %2816 = vmatpush1.msra.mxu0 %v2815
        %2817 = vmatprep.subr.mxu0 0.0
        %v2818 = vand.u32 %v1031, 4294901760
        %2819 = vmatpush1.msra.mxu0 %v2818
        %2820 = vmatprep.subr.mxu0 0.0
        %2821 = vmatpush1.msra.mxu0 0.0
        %2822 = vmatprep.subr.mxu0 0.0
        %2823 = vmatpush1.msra.mxu0 0.0
        %2824 = vmatprep.subr.mxu0 0.0
        %2825 = vmatpush1.msra.mxu0 0.0
        %2826 = vmatprep.subr.mxu0 0.0
        %2827 = vmatpush1.msra.mxu0 0.0
        %2828 = vmatprep.subr.mxu0 0.0
        %2829 = vmatpush1.msra.mxu0 0.0
        %2830 = vmatprep.subr.mxu0 0.0
        %2831 = vmatpush1.msra.mxu0 0.0
        %2832 = vmatprep.subr.mxu0 0.0
        %2833 = vmatpush1.msra.mxu0 0.0
        %2834 = vmatprep.subr.mxu0 0.0
        %2835 = vmatpush1.msra.mxu0 0.0
        %2836 = vmatprep.subr.mxu0 0.0
        %2837 = vmatpush1.msra.mxu0 0.0
        %2838 = vmatprep.subr.mxu0 0.0
        %2839 = vmatpush1.msra.mxu0 0.0
        %2840 = vmatprep.subr.mxu0 0.0
        %2841 = vmatpush1.msra.mxu0 0.0
        %2842 = vmatprep.subr.mxu0 0.0
        %2843 = vmatpush1.msra.mxu0 0.0
        %2844 = vmatprep.subr.mxu0 0.0
        %2845 = vmatpush1.msra.mxu0 0.0
        %2846 = vmatprep.subr.mxu0 0.0
        %2847 = vmatpush1.msra.mxu0 0.0
        %2848 = vmatprep.subr.mxu0 0.0
        %2849 = vmatpush1.msra.mxu0 0.0
        %2850 = vmatprep.subr.mxu0 0.0
        %2851 = vmatpush1.msra.mxu0 0.0
        %2852 = vmatprep.subr.mxu0 0.0
        %2853 = vmatpush1.msra.mxu0 0.0
        %2854 = vmatprep.subr.mxu0 0.0
        %2855 = vmatpush1.msra.mxu0 0.0
        %2856 = vmatprep.subr.mxu0 0.0
        %2857 = vmatpush1.msra.mxu0 0.0
        %2858 = vmatprep.subr.mxu0 0.0
        %2859 = vmatpush1.msra.mxu0 0.0
        %2860 = vmatprep.subr.mxu0 0.0
        %2861 = vmatpush1.msra.mxu0 0.0
        %2862 = vmatprep.subr.mxu0 0.0
        %2863 = vmatpush1.msra.mxu0 0.0
        %2864 = vmatprep.subr.mxu0 0.0
        %2865 = vmatpush1.msra.mxu0 0.0
        %2866 = vmatprep.subr.mxu0 0.0
        %2867 = vmatpush1.msra.mxu0 0.0
        %2868 = vmatprep.subr.mxu0 0.0
        %2869 = vmatpush1.msra.mxu0 0.0
        %2870 = vmatprep.subr.mxu0 0.0
        %2871 = vmatpush1.msra.mxu0 0.0
        %2872 = vmatprep.subr.mxu0 0.0
        %2873 = vmatpush1.msra.mxu0 0.0
        %2874 = vmatprep.subr.mxu0 0.0
        %2875 = vmatpush1.msra.mxu0 0.0
        %2876 = vmatprep.subr.mxu0 0.0
        %2877 = vmatpush1.msra.mxu0 0.0
        %2878 = vmatprep.subr.mxu0 0.0
        %2879 = vmatpush1.msra.mxu0 0.0
        %2880 = vmatprep.mubr.f32.mxu0 0.0
        %v2881 = vand.u32 %v1039, 4294901760
        %v2882 = vsub.f32 %v1039, %v2881
        %v2883 = vand.u32 %v2882, 4294901760
        %v2884 = vsub.f32 %v2882, %v2883
        %v2885 = vand.u32 %v2884, 4294901760
        %2886 = vmatmul.mubr.f32.gmra.mrb[0].mxu0 %v2885
        %v2887 = vpop.f32.mrb[0].mxu0
        %v2888 = vadd.f32 0.0, %v2887
        %v2889 = vpop.f32.mrb[0].mxu0
        %2890 = vmatprep.mubr.f32.mxu0 0.0
        %v2891 = vand.u32 %v1042, 4294901760
        %v2892 = vsub.f32 %v1042, %v2891
        %v2893 = vand.u32 %v2892, 4294901760
        %v2894 = vsub.f32 %v2892, %v2893
        %v2895 = vand.u32 %v2894, 4294901760
        %2896 = vmatmul.mubr.f32.gmra.mrb[0].mxu0 %v2895
        %v2897 = vpop.f32.mrb[0].mxu0
        %v2898 = vadd.f32 0.0, %v2897
        %v2899 = vpop.f32.mrb[0].mxu0
        %2900 = vmatprep.mubr.f32.mxu0 0.0
        %v2901 = vand.u32 %v1045, 4294901760
        %v2902 = vsub.f32 %v1045, %v2901
        %v2903 = vand.u32 %v2902, 4294901760
        %v2904 = vsub.f32 %v2902, %v2903
        %v2905 = vand.u32 %v2904, 4294901760
        %2906 = vmatmul.mubr.f32.gmra.mrb[0].mxu0 %v2905
        %v2907 = vpop.f32.mrb[0].mxu0
        %v2908 = vadd.f32 0.0, %v2907
        %v2909 = vpop.f32.mrb[0].mxu0
        %2910 = vmatprep.mubr.f32.mxu0 0.0
        %v2911 = vand.u32 %v1048, 4294901760
        %v2912 = vsub.f32 %v1048, %v2911
        %v2913 = vand.u32 %v2912, 4294901760
        %v2914 = vsub.f32 %v2912, %v2913
        %v2915 = vand.u32 %v2914, 4294901760
        %2916 = vmatmul.mubr.f32.gmra.mrb[0].mxu0 %v2915
        %v2917 = vpop.f32.mrb[0].mxu0
        %v2918 = vadd.f32 0.0, %v2917
        %v2919 = vpop.f32.mrb[0].mxu0
        %2920 = vdwg.mxu0
        %2921 = vmatprep.subr.mxu0 0.0
        %v2922 = vand.u32 %v1025, 4294901760
        %v2923 = vsub.f32 %v1025, %v2922
        %v2924 = vand.u32 %v2923, 4294901760
        %v2925 = vsub.f32 %v2923, %v2924
        %v2926 = vand.u32 %v2925, 4294901760
        %2927 = vmatpush1.msra.mxu0 %v2926
        %2928 = vmatprep.subr.mxu0 0.0
        %v2929 = vand.u32 %v1031, 4294901760
        %v2930 = vsub.f32 %v1031, %v2929
        %v2931 = vand.u32 %v2930, 4294901760
        %v2932 = vsub.f32 %v2930, %v2931
        %v2933 = vand.u32 %v2932, 4294901760
        %2934 = vmatpush1.msra.mxu0 %v2933
        %2935 = vmatprep.subr.mxu0 0.0
        %2936 = vmatpush1.msra.mxu0 0.0
        %2937 = vmatprep.subr.mxu0 0.0
        %2938 = vmatpush1.msra.mxu0 0.0
        %2939 = vmatprep.subr.mxu0 0.0
        %2940 = vmatpush1.msra.mxu0 0.0
        %2941 = vmatprep.subr.mxu0 0.0
        %2942 = vmatpush1.msra.mxu0 0.0
        %2943 = vmatprep.subr.mxu0 0.0
        %2944 = vmatpush1.msra.mxu0 0.0
        %2945 = vmatprep.subr.mxu0 0.0
        %2946 = vmatpush1.msra.mxu0 0.0
        %2947 = vmatprep.subr.mxu0 0.0
        %2948 = vmatpush1.msra.mxu0 0.0
        %2949 = vmatprep.subr.mxu0 0.0
        %2950 = vmatpush1.msra.mxu0 0.0
        %2951 = vmatprep.subr.mxu0 0.0
        %2952 = vmatpush1.msra.mxu0 0.0
        %2953 = vmatprep.subr.mxu0 0.0
        %2954 = vmatpush1.msra.mxu0 0.0
        %2955 = vmatprep.subr.mxu0 0.0
        %2956 = vmatpush1.msra.mxu0 0.0
        %2957 = vmatprep.subr.mxu0 0.0
        %2958 = vmatpush1.msra.mxu0 0.0
        %2959 = vmatprep.subr.mxu0 0.0
        %2960 = vmatpush1.msra.mxu0 0.0
        %2961 = vmatprep.subr.mxu0 0.0
        %2962 = vmatpush1.msra.mxu0 0.0
        %2963 = vmatprep.subr.mxu0 0.0
        %2964 = vmatpush1.msra.mxu0 0.0
        %2965 = vmatprep.subr.mxu0 0.0
        %2966 = vmatpush1.msra.mxu0 0.0
        %2967 = vmatprep.subr.mxu0 0.0
        %2968 = vmatpush1.msra.mxu0 0.0
        %2969 = vmatprep.subr.mxu0 0.0
        %2970 = vmatpush1.msra.mxu0 0.0
        %2971 = vmatprep.subr.mxu0 0.0
        %2972 = vmatpush1.msra.mxu0 0.0
        %2973 = vmatprep.subr.mxu0 0.0
        %2974 = vmatpush1.msra.mxu0 0.0
        %2975 = vmatprep.subr.mxu0 0.0
        %2976 = vmatpush1.msra.mxu0 0.0
        %2977 = vmatprep.subr.mxu0 0.0
        %2978 = vmatpush1.msra.mxu0 0.0
        %2979 = vmatprep.subr.mxu0 0.0
        %2980 = vmatpush1.msra.mxu0 0.0
        %2981 = vmatprep.subr.mxu0 0.0
        %2982 = vmatpush1.msra.mxu0 0.0
        %2983 = vmatprep.subr.mxu0 0.0
        %2984 = vmatpush1.msra.mxu0 0.0
        %2985 = vmatprep.subr.mxu0 0.0
        %2986 = vmatpush1.msra.mxu0 0.0
        %2987 = vmatprep.subr.mxu0 0.0
        %2988 = vmatpush1.msra.mxu0 0.0
        %2989 = vmatprep.subr.mxu0 0.0
        %2990 = vmatpush1.msra.mxu0 0.0
        %2991 = vmatprep.subr.mxu0 0.0
        %2992 = vmatpush1.msra.mxu0 0.0
        %2993 = vmatprep.subr.mxu0 0.0
        %2994 = vmatpush1.msra.mxu0 0.0
        %2995 = vmatprep.mubr.f32.mxu0 0.0
        %v2996 = vand.u32 %v1039, 4294901760
        %2997 = vmatmul.mubr.f32.gmra.mrb[0].mxu0 %v2996
        %v2998 = vpop.f32.mrb[0].mxu0
        %v2999 = vadd.f32 %v2888, %v2998
        %v3000 = vpop.f32.mrb[0].mxu0
        %3001 = vmatprep.mubr.f32.mxu0 0.0
        %v3002 = vand.u32 %v1042, 4294901760
        %3003 = vmatmul.mubr.f32.gmra.mrb[0].mxu0 %v3002
        %v3004 = vpop.f32.mrb[0].mxu0
        %v3005 = vadd.f32 %v2898, %v3004
        %v3006 = vpop.f32.mrb[0].mxu0
        %3007 = vmatprep.mubr.f32.mxu0 0.0
        %v3008 = vand.u32 %v1045, 4294901760
        %3009 = vmatmul.mubr.f32.gmra.mrb[0].mxu0 %v3008
        %v3010 = vpop.f32.mrb[0].mxu0
        %v3011 = vadd.f32 %v2908, %v3010
        %v3012 = vpop.f32.mrb[0].mxu0
        %3013 = vmatprep.mubr.f32.mxu0 0.0
        %v3014 = vand.u32 %v1048, 4294901760
        %3015 = vmatmul.mubr.f32.gmra.mrb[0].mxu0 %v3014
        %v3016 = vpop.f32.mrb[0].mxu0
        %v3017 = vadd.f32 %v2918, %v3016
        %v3018 = vpop.f32.mrb[0].mxu0
        %3019 = vdwg.mxu0
        %3020 = vmatprep.subr.mxu0 0.0
        %v3021 = vand.u32 %v1025, 4294901760
        %v3022 = vsub.f32 %v1025, %v3021
        %3023 = vmatpush1.msra.mxu0 %v3022
        %3024 = vmatprep.subr.mxu0 0.0
        %v3025 = vand.u32 %v1031, 4294901760
        %v3026 = vsub.f32 %v1031, %v3025
        %3027 = vmatpush1.msra.mxu0 %v3026
        %3028 = vmatprep.subr.mxu0 0.0
        %3029 = vmatpush1.msra.mxu0 0.0
        %3030 = vmatprep.subr.mxu0 0.0
        %3031 = vmatpush1.msra.mxu0 0.0
        %3032 = vmatprep.subr.mxu0 0.0
        %3033 = vmatpush1.msra.mxu0 0.0
        %3034 = vmatprep.subr.mxu0 0.0
        %3035 = vmatpush1.msra.mxu0 0.0
        %3036 = vmatprep.subr.mxu0 0.0
        %3037 = vmatpush1.msra.mxu0 0.0
        %3038 = vmatprep.subr.mxu0 0.0
        %3039 = vmatpush1.msra.mxu0 0.0
        %3040 = vmatprep.subr.mxu0 0.0
        %3041 = vmatpush1.msra.mxu0 0.0
        %3042 = vmatprep.subr.mxu0 0.0
        %3043 = vmatpush1.msra.mxu0 0.0
        %3044 = vmatprep.subr.mxu0 0.0
        %3045 = vmatpush1.msra.mxu0 0.0
        %3046 = vmatprep.subr.mxu0 0.0
        %3047 = vmatpush1.msra.mxu0 0.0
        %3048 = vmatprep.subr.mxu0 0.0
        %3049 = vmatpush1.msra.mxu0 0.0
        %3050 = vmatprep.subr.mxu0 0.0
        %3051 = vmatpush1.msra.mxu0 0.0
        %3052 = vmatprep.subr.mxu0 0.0
        %3053 = vmatpush1.msra.mxu0 0.0
        %3054 = vmatprep.subr.mxu0 0.0
        %3055 = vmatpush1.msra.mxu0 0.0
        %3056 = vmatprep.subr.mxu0 0.0
        %3057 = vmatpush1.msra.mxu0 0.0
        %3058 = vmatprep.subr.mxu0 0.0
        %3059 = vmatpush1.msra.mxu0 0.0
        %3060 = vmatprep.subr.mxu0 0.0
        %3061 = vmatpush1.msra.mxu0 0.0
        %3062 = vmatprep.subr.mxu0 0.0
        %3063 = vmatpush1.msra.mxu0 0.0
        %3064 = vmatprep.subr.mxu0 0.0
        %3065 = vmatpush1.msra.mxu0 0.0
        %3066 = vmatprep.subr.mxu0 0.0
        %3067 = vmatpush1.msra.mxu0 0.0
        %3068 = vmatprep.subr.mxu0 0.0
        %3069 = vmatpush1.msra.mxu0 0.0
        %3070 = vmatprep.subr.mxu0 0.0
        %3071 = vmatpush1.msra.mxu0 0.0
        %3072 = vmatprep.subr.mxu0 0.0
        %3073 = vmatpush1.msra.mxu0 0.0
        %3074 = vmatprep.subr.mxu0 0.0
        %3075 = vmatpush1.msra.mxu0 0.0
        %3076 = vmatprep.subr.mxu0 0.0
        %3077 = vmatpush1.msra.mxu0 0.0
        %3078 = vmatprep.subr.mxu0 0.0
        %3079 = vmatpush1.msra.mxu0 0.0
        %3080 = vmatprep.subr.mxu0 0.0
        %3081 = vmatpush1.msra.mxu0 0.0
        %3082 = vmatprep.subr.mxu0 0.0
        %3083 = vmatpush1.msra.mxu0 0.0
        %3084 = vmatprep.subr.mxu0 0.0
        %3085 = vmatpush1.msra.mxu0 0.0
        %3086 = vmatprep.subr.mxu0 0.0
        %3087 = vmatpush1.msra.mxu0 0.0
        %3088 = vmatprep.mubr.f32.mxu0 0.0
        %v3089 = vand.u32 %v1039, 4294901760
        %v3090 = vsub.f32 %v1039, %v3089
        %3091 = vmatmul.mubr.f32.gmra.mrb[0].mxu0 %v3090
        %v3092 = vpop.f32.mrb[0].mxu0
        %v3093 = vadd.f32 %v2999, %v3092
        %v3094 = vpop.f32.mrb[0].mxu0
        %3095 = vmatprep.mubr.f32.mxu0 0.0
        %v3096 = vand.u32 %v1042, 4294901760
        %v3097 = vsub.f32 %v1042, %v3096
        %3098 = vmatmul.mubr.f32.gmra.mrb[0].mxu0 %v3097
        %v3099 = vpop.f32.mrb[0].mxu0
        %v3100 = vadd.f32 %v3005, %v3099
        %v3101 = vpop.f32.mrb[0].mxu0
        %3102 = vmatprep.mubr.f32.mxu0 0.0
        %v3103 = vand.u32 %v1045, 4294901760
        %v3104 = vsub.f32 %v1045, %v3103
        %3105 = vmatmul.mubr.f32.gmra.mrb[0].mxu0 %v3104
        %v3106 = vpop.f32.mrb[0].mxu0
        %v3107 = vadd.f32 %v3011, %v3106
        %v3108 = vpop.f32.mrb[0].mxu0
        %3109 = vmatprep.mubr.f32.mxu0 0.0
        %v3110 = vand.u32 %v1048, 4294901760
        %v3111 = vsub.f32 %v1048, %v3110
        %3112 = vmatmul.mubr.f32.gmra.mrb[0].mxu0 %v3111
        %v3113 = vpop.f32.mrb[0].mxu0
        %v3114 = vadd.f32 %v3017, %v3113
        %v3115 = vpop.f32.mrb[0].mxu0
        %3116 = vdwg.mxu0
        %3117 = vmatprep.subr.mxu0 0.0
        %v3118 = vand.u32 %v1025, 4294901760
        %3119 = vmatpush1.msra.mxu0 %v3118
        %3120 = vmatprep.subr.mxu0 0.0
        %v3121 = vand.u32 %v1031, 4294901760
        %3122 = vmatpush1.msra.mxu0 %v3121
        %3123 = vmatprep.subr.mxu0 0.0
        %3124 = vmatpush1.msra.mxu0 0.0
        %3125 = vmatprep.subr.mxu0 0.0
        %3126 = vmatpush1.msra.mxu0 0.0
        %3127 = vmatprep.subr.mxu0 0.0
        %3128 = vmatpush1.msra.mxu0 0.0
        %3129 = vmatprep.subr.mxu0 0.0
        %3130 = vmatpush1.msra.mxu0 0.0
        %3131 = vmatprep.subr.mxu0 0.0
        %3132 = vmatpush1.msra.mxu0 0.0
        %3133 = vmatprep.subr.mxu0 0.0
        %3134 = vmatpush1.msra.mxu0 0.0
        %3135 = vmatprep.subr.mxu0 0.0
        %3136 = vmatpush1.msra.mxu0 0.0
        %3137 = vmatprep.subr.mxu0 0.0
        %3138 = vmatpush1.msra.mxu0 0.0
        %3139 = vmatprep.subr.mxu0 0.0
        %3140 = vmatpush1.msra.mxu0 0.0
        %3141 = vmatprep.subr.mxu0 0.0
        %3142 = vmatpush1.msra.mxu0 0.0
        %3143 = vmatprep.subr.mxu0 0.0
        %3144 = vmatpush1.msra.mxu0 0.0
        %3145 = vmatprep.subr.mxu0 0.0
        %3146 = vmatpush1.msra.mxu0 0.0
        %3147 = vmatprep.subr.mxu0 0.0
        %3148 = vmatpush1.msra.mxu0 0.0
        %3149 = vmatprep.subr.mxu0 0.0
        %3150 = vmatpush1.msra.mxu0 0.0
        %3151 = vmatprep.subr.mxu0 0.0
        %3152 = vmatpush1.msra.mxu0 0.0
        %3153 = vmatprep.subr.mxu0 0.0
        %3154 = vmatpush1.msra.mxu0 0.0
        %3155 = vmatprep.subr.mxu0 0.0
        %3156 = vmatpush1.msra.mxu0 0.0
        %3157 = vmatprep.subr.mxu0 0.0
        %3158 = vmatpush1.msra.mxu0 0.0
        %3159 = vmatprep.subr.mxu0 0.0
        %3160 = vmatpush1.msra.mxu0 0.0
        %3161 = vmatprep.subr.mxu0 0.0
        %3162 = vmatpush1.msra.mxu0 0.0
        %3163 = vmatprep.subr.mxu0 0.0
        %3164 = vmatpush1.msra.mxu0 0.0
        %3165 = vmatprep.subr.mxu0 0.0
        %3166 = vmatpush1.msra.mxu0 0.0
        %3167 = vmatprep.subr.mxu0 0.0
        %3168 = vmatpush1.msra.mxu0 0.0
        %3169 = vmatprep.subr.mxu0 0.0
        %3170 = vmatpush1.msra.mxu0 0.0
        %3171 = vmatprep.subr.mxu0 0.0
        %3172 = vmatpush1.msra.mxu0 0.0
        %3173 = vmatprep.subr.mxu0 0.0
        %3174 = vmatpush1.msra.mxu0 0.0
        %3175 = vmatprep.subr.mxu0 0.0
        %3176 = vmatpush1.msra.mxu0 0.0
        %3177 = vmatprep.subr.mxu0 0.0
        %3178 = vmatpush1.msra.mxu0 0.0
        %3179 = vmatprep.subr.mxu0 0.0
        %3180 = vmatpush1.msra.mxu0 0.0
        %3181 = vmatprep.subr.mxu0 0.0
        %3182 = vmatpush1.msra.mxu0 0.0
        %3183 = vmatprep.mubr.f32.mxu0 0.0
        %v3184 = vand.u32 %v1039, 4294901760
        %v3185 = vsub.f32 %v1039, %v3184
        %v3186 = vand.u32 %v3185, 4294901760
        %3187 = vmatmul.mubr.f32.gmra.mrb[0].mxu0 %v3186
        %v3188 = vpop.f32.mrb[0].mxu0
        %v3189 = vadd.f32 %v3093, %v3188
        %v3190 = vpop.f32.mrb[0].mxu0
        %3191 = vmatprep.mubr.f32.mxu0 0.0
        %v3192 = vand.u32 %v1042, 4294901760
        %v3193 = vsub.f32 %v1042, %v3192
        %v3194 = vand.u32 %v3193, 4294901760
        %3195 = vmatmul.mubr.f32.gmra.mrb[0].mxu0 %v3194
        %v3196 = vpop.f32.mrb[0].mxu0
        %v3197 = vadd.f32 %v3100, %v3196
        %v3198 = vpop.f32.mrb[0].mxu0
        %3199 = vmatprep.mubr.f32.mxu0 0.0
        %v3200 = vand.u32 %v1045, 4294901760
        %v3201 = vsub.f32 %v1045, %v3200
        %v3202 = vand.u32 %v3201, 4294901760
        %3203 = vmatmul.mubr.f32.gmra.mrb[0].mxu0 %v3202
        %v3204 = vpop.f32.mrb[0].mxu0
        %v3205 = vadd.f32 %v3107, %v3204
        %v3206 = vpop.f32.mrb[0].mxu0
        %3207 = vmatprep.mubr.f32.mxu0 0.0
        %v3208 = vand.u32 %v1048, 4294901760
        %v3209 = vsub.f32 %v1048, %v3208
        %v3210 = vand.u32 %v3209, 4294901760
        %3211 = vmatmul.mubr.f32.gmra.mrb[0].mxu0 %v3210
        %v3212 = vpop.f32.mrb[0].mxu0
        %v3213 = vadd.f32 %v3114, %v3212
        %v3214 = vpop.f32.mrb[0].mxu0
        %3215 = vdwg.mxu0
        %3216 = vmatprep.subr.mxu0 0.0
        %v3217 = vand.u32 %v1025, 4294901760
        %v3218 = vsub.f32 %v1025, %v3217
        %v3219 = vand.u32 %v3218, 4294901760
        %3220 = vmatpush1.msra.mxu0 %v3219
        %3221 = vmatprep.subr.mxu0 0.0
        %v3222 = vand.u32 %v1031, 4294901760
        %v3223 = vsub.f32 %v1031, %v3222
        %v3224 = vand.u32 %v3223, 4294901760
        %3225 = vmatpush1.msra.mxu0 %v3224
        %3226 = vmatprep.subr.mxu0 0.0
        %3227 = vmatpush1.msra.mxu0 0.0
        %3228 = vmatprep.subr.mxu0 0.0
        %3229 = vmatpush1.msra.mxu0 0.0
        %3230 = vmatprep.subr.mxu0 0.0
        %3231 = vmatpush1.msra.mxu0 0.0
        %3232 = vmatprep.subr.mxu0 0.0
        %3233 = vmatpush1.msra.mxu0 0.0
        %3234 = vmatprep.subr.mxu0 0.0
        %3235 = vmatpush1.msra.mxu0 0.0
        %3236 = vmatprep.subr.mxu0 0.0
        %3237 = vmatpush1.msra.mxu0 0.0
        %3238 = vmatprep.subr.mxu0 0.0
        %3239 = vmatpush1.msra.mxu0 0.0
        %3240 = vmatprep.subr.mxu0 0.0
        %3241 = vmatpush1.msra.mxu0 0.0
        %3242 = vmatprep.subr.mxu0 0.0
        %3243 = vmatpush1.msra.mxu0 0.0
        %3244 = vmatprep.subr.mxu0 0.0
        %3245 = vmatpush1.msra.mxu0 0.0
        %3246 = vmatprep.subr.mxu0 0.0
        %3247 = vmatpush1.msra.mxu0 0.0
        %3248 = vmatprep.subr.mxu0 0.0
        %3249 = vmatpush1.msra.mxu0 0.0
        %3250 = vmatprep.subr.mxu0 0.0
        %3251 = vmatpush1.msra.mxu0 0.0
        %3252 = vmatprep.subr.mxu0 0.0
        %3253 = vmatpush1.msra.mxu0 0.0
        %3254 = vmatprep.subr.mxu0 0.0
        %3255 = vmatpush1.msra.mxu0 0.0
        %3256 = vmatprep.subr.mxu0 0.0
        %3257 = vmatpush1.msra.mxu0 0.0
        %3258 = vmatprep.subr.mxu0 0.0
        %3259 = vmatpush1.msra.mxu0 0.0
        %3260 = vmatprep.subr.mxu0 0.0
        %3261 = vmatpush1.msra.mxu0 0.0
        %3262 = vmatprep.subr.mxu0 0.0
        %3263 = vmatpush1.msra.mxu0 0.0
        %3264 = vmatprep.subr.mxu0 0.0
        %3265 = vmatpush1.msra.mxu0 0.0
        %3266 = vmatprep.subr.mxu0 0.0
        %3267 = vmatpush1.msra.mxu0 0.0
        %3268 = vmatprep.subr.mxu0 0.0
        %3269 = vmatpush1.msra.mxu0 0.0
        %3270 = vmatprep.subr.mxu0 0.0
        %3271 = vmatpush1.msra.mxu0 0.0
        %3272 = vmatprep.subr.mxu0 0.0
        %3273 = vmatpush1.msra.mxu0 0.0
        %3274 = vmatprep.subr.mxu0 0.0
        %3275 = vmatpush1.msra.mxu0 0.0
        %3276 = vmatprep.subr.mxu0 0.0
        %3277 = vmatpush1.msra.mxu0 0.0
        %3278 = vmatprep.subr.mxu0 0.0
        %3279 = vmatpush1.msra.mxu0 0.0
        %3280 = vmatprep.subr.mxu0 0.0
        %3281 = vmatpush1.msra.mxu0 0.0
        %3282 = vmatprep.subr.mxu0 0.0
        %3283 = vmatpush1.msra.mxu0 0.0
        %3284 = vmatprep.subr.mxu0 0.0
        %3285 = vmatpush1.msra.mxu0 0.0
        %3286 = vmatprep.mubr.f32.mxu0 0.0
        %v3287 = vand.u32 %v1039, 4294901760
        %3288 = vmatmul.mubr.f32.gmra.mrb[0].mxu0 %v3287
        %v3289 = vpop.f32.mrb[0].mxu0
        %v3290 = vadd.f32 %v3189, %v3289
        %v3291 = vpop.f32.mrb[0].mxu0
        %3292 = vmatprep.mubr.f32.mxu0 0.0
        %v3293 = vand.u32 %v1042, 4294901760
        %3294 = vmatmul.mubr.f32.gmra.mrb[0].mxu0 %v3293
        %v3295 = vpop.f32.mrb[0].mxu0
        %v3296 = vadd.f32 %v3197, %v3295
        %v3297 = vpop.f32.mrb[0].mxu0
        %3298 = vmatprep.mubr.f32.mxu0 0.0
        %v3299 = vand.u32 %v1045, 4294901760
        %3300 = vmatmul.mubr.f32.gmra.mrb[0].mxu0 %v3299
        %v3301 = vpop.f32.mrb[0].mxu0
        %v3302 = vadd.f32 %v3205, %v3301
        %v3303 = vpop.f32.mrb[0].mxu0
        %3304 = vmatprep.mubr.f32.mxu0 0.0
        %v3305 = vand.u32 %v1048, 4294901760
        %3306 = vmatmul.mubr.f32.gmra.mrb[0].mxu0 %v3305
        %v3307 = vpop.f32.mrb[0].mxu0
        %v3308 = vadd.f32 %v3213, %v3307
        %v3309 = vpop.f32.mrb[0].mxu0
        %3310 = vdwg.mxu0
        %3311 = vmatprep.subr.mxu0 0.0
        %v3312 = vand.u32 %v1025, 4294901760
        %3313 = vmatpush1.msra.mxu0 %v3312
        %3314 = vmatprep.subr.mxu0 0.0
        %v3315 = vand.u32 %v1031, 4294901760
        %3316 = vmatpush1.msra.mxu0 %v3315
        %3317 = vmatprep.subr.mxu0 0.0
        %3318 = vmatpush1.msra.mxu0 0.0
        %3319 = vmatprep.subr.mxu0 0.0
        %3320 = vmatpush1.msra.mxu0 0.0
        %3321 = vmatprep.subr.mxu0 0.0
        %3322 = vmatpush1.msra.mxu0 0.0
        %3323 = vmatprep.subr.mxu0 0.0
        %3324 = vmatpush1.msra.mxu0 0.0
        %3325 = vmatprep.subr.mxu0 0.0
        %3326 = vmatpush1.msra.mxu0 0.0
        %3327 = vmatprep.subr.mxu0 0.0
        %3328 = vmatpush1.msra.mxu0 0.0
        %3329 = vmatprep.subr.mxu0 0.0
        %3330 = vmatpush1.msra.mxu0 0.0
        %3331 = vmatprep.subr.mxu0 0.0
        %3332 = vmatpush1.msra.mxu0 0.0
        %3333 = vmatprep.subr.mxu0 0.0
        %3334 = vmatpush1.msra.mxu0 0.0
        %3335 = vmatprep.subr.mxu0 0.0
        %3336 = vmatpush1.msra.mxu0 0.0
        %3337 = vmatprep.subr.mxu0 0.0
        %3338 = vmatpush1.msra.mxu0 0.0
        %3339 = vmatprep.subr.mxu0 0.0
        %3340 = vmatpush1.msra.mxu0 0.0
        %3341 = vmatprep.subr.mxu0 0.0
        %3342 = vmatpush1.msra.mxu0 0.0
        %3343 = vmatprep.subr.mxu0 0.0
        %3344 = vmatpush1.msra.mxu0 0.0
        %3345 = vmatprep.subr.mxu0 0.0
        %3346 = vmatpush1.msra.mxu0 0.0
        %3347 = vmatprep.subr.mxu0 0.0
        %3348 = vmatpush1.msra.mxu0 0.0
        %3349 = vmatprep.subr.mxu0 0.0
        %3350 = vmatpush1.msra.mxu0 0.0
        %3351 = vmatprep.subr.mxu0 0.0
        %3352 = vmatpush1.msra.mxu0 0.0
        %3353 = vmatprep.subr.mxu0 0.0
        %3354 = vmatpush1.msra.mxu0 0.0
        %3355 = vmatprep.subr.mxu0 0.0
        %3356 = vmatpush1.msra.mxu0 0.0
        %3357 = vmatprep.subr.mxu0 0.0
        %3358 = vmatpush1.msra.mxu0 0.0
        %3359 = vmatprep.subr.mxu0 0.0
        %3360 = vmatpush1.msra.mxu0 0.0
        %3361 = vmatprep.subr.mxu0 0.0
        %3362 = vmatpush1.msra.mxu0 0.0
        %3363 = vmatprep.subr.mxu0 0.0
        %3364 = vmatpush1.msra.mxu0 0.0
        %3365 = vmatprep.subr.mxu0 0.0
        %3366 = vmatpush1.msra.mxu0 0.0
        %3367 = vmatprep.subr.mxu0 0.0
        %3368 = vmatpush1.msra.mxu0 0.0
        %3369 = vmatprep.subr.mxu0 0.0
        %3370 = vmatpush1.msra.mxu0 0.0
        %3371 = vmatprep.subr.mxu0 0.0
        %3372 = vmatpush1.msra.mxu0 0.0
        %3373 = vmatprep.subr.mxu0 0.0
        %3374 = vmatpush1.msra.mxu0 0.0
        %3375 = vmatprep.subr.mxu0 0.0
        %3376 = vmatpush1.msra.mxu0 0.0
        %3377 = vmatprep.mubr.f32.mxu0 0.0
        %v3378 = vand.u32 %v1039, 4294901760
        %3379 = vmatmul.mubr.f32.gmra.mrb[0].mxu0 %v3378
        %v3380 = vpop.f32.mrb[0].mxu0
        %v3381 = vadd.f32 %v3290, %v3380
        %v3382 = vpop.f32.mrb[0].mxu0
        %3383 = vmatprep.mubr.f32.mxu0 0.0
        %v3384 = vand.u32 %v1042, 4294901760
        %3385 = vmatmul.mubr.f32.gmra.mrb[0].mxu0 %v3384
        %v3386 = vpop.f32.mrb[0].mxu0
        %v3387 = vadd.f32 %v3296, %v3386
        %v3388 = vpop.f32.mrb[0].mxu0
        %3389 = vmatprep.mubr.f32.mxu0 0.0
        %v3390 = vand.u32 %v1045, 4294901760
        %3391 = vmatmul.mubr.f32.gmra.mrb[0].mxu0 %v3390
        %v3392 = vpop.f32.mrb[0].mxu0
        %v3393 = vadd.f32 %v3302, %v3392
        %v3394 = vpop.f32.mrb[0].mxu0
        %3395 = vmatprep.mubr.f32.mxu0 0.0
        %v3396 = vand.u32 %v1048, 4294901760
        %3397 = vmatmul.mubr.f32.gmra.mrb[0].mxu0 %v3396
        %v3398 = vpop.f32.mrb[0].mxu0
        %v3399 = vadd.f32 %v3308, %v3398
        %v3400 = vpop.f32.mrb[0].mxu0
        %3401 = vdwg.mxu0
        %3410 = vrot.lane.b32.xlu0 %v1629, 119
        %v3411 = vpop.permute.xlu0 %3410
        %3412 = vrot.lane.b32.xlu0 %v1635, 119
        %v3413 = vpop.permute.xlu0 %3412
        %3414 = vrot.lane.b32.xlu0 %v2217, 119
        %v3415 = vpop.permute.xlu0 %3414
        %3416 = vrot.lane.b32.xlu0 %v2223, 119
        %v3417 = vpop.permute.xlu0 %3416
        %3418 = vrot.lane.b32.xlu0 %v2805, 119
        %v3419 = vpop.permute.xlu0 %3418
        %3420 = vrot.lane.b32.xlu0 %v2811, 119
        %v3421 = vpop.permute.xlu0 %3420
        %3422 = vrot.lane.b32.xlu0 %v3393, 119
        %v3423 = vpop.permute.xlu0 %3422
        %3424 = vrot.lane.b32.xlu0 %v3399, 119
        %v3425 = vpop.permute.xlu0 %3424
        %v3434 = vsub.f32 %v1617, %v3411
        %v3435 = vsub.f32 %v1623, %v3413
        %v3436 = vsub.f32 %v2205, %v3415
        %v3437 = vsub.f32 %v2211, %v3417
        %v3438 = vsub.f32 %v2793, %v3419
        %v3439 = vsub.f32 %v2799, %v3421
        %v3440 = vsub.f32 %v3381, %v3423
        %v3441 = vsub.f32 %v3387, %v3425
        %3442 = vrot.lane.b32.xlu0 %v1629, 9
        %v3443 = vpop.permute.xlu0 %3442
        %3444 = vrot.lane.b32.xlu0 %v1635, 9
        %v3445 = vpop.permute.xlu0 %3444
        %3446 = vrot.lane.b32.xlu0 %v2217, 9
        %v3447 = vpop.permute.xlu0 %3446
        %3448 = vrot.lane.b32.xlu0 %v2223, 9
        %v3449 = vpop.permute.xlu0 %3448
        %3450 = vrot.lane.b32.xlu0 %v2805, 9
        %v3451 = vpop.permute.xlu0 %3450
        %3452 = vrot.lane.b32.xlu0 %v2811, 9
        %v3453 = vpop.permute.xlu0 %3452
        %3454 = vrot.lane.b32.xlu0 %v3393, 9
        %v3455 = vpop.permute.xlu0 %3454
        %3456 = vrot.lane.b32.xlu0 %v3399, 9
        %v3457 = vpop.permute.xlu0 %3456
        %v3466 = vadd.f32 %v1617, %v3443
        %v3467 = vadd.f32 %v1623, %v3445
        %v3468 = vadd.f32 %v2205, %v3447
        %v3469 = vadd.f32 %v2211, %v3449
        %v3470 = vadd.f32 %v2793, %v3451
        %v3471 = vadd.f32 %v2799, %v3453
        %v3472 = vadd.f32 %v3381, %v3455
        %v3473 = vadd.f32 %v3387, %v3457
        %v3474 = vmul.f32 %v3434, %v3434
        %v3475 = vmul.f32 %v3435, %v3435
        %v3476 = vmul.f32 %v3436, %v3436
        %v3477 = vmul.f32 %v3437, %v3437
        %v3478 = vmul.f32 %v3438, %v3438
        %v3479 = vmul.f32 %v3439, %v3439
        %v3480 = vmul.f32 %v3440, %v3440
        %v3481 = vmul.f32 %v3441, %v3441
        %v3482 = vmul.f32 %v3466, %v3466
        %v3483 = vmul.f32 %v3467, %v3467
        %v3484 = vmul.f32 %v3468, %v3468
        %v3485 = vmul.f32 %v3469, %v3469
        %v3486 = vmul.f32 %v3470, %v3470
        %v3487 = vmul.f32 %v3471, %v3471
        %v3488 = vmul.f32 %v3472, %v3472
        %v3489 = vmul.f32 %v3473, %v3473
        %3498 = vrot.lane.b32.xlu0 %v3482, 119
        %v3499 = vpop.permute.xlu0 %3498
        %3500 = vrot.lane.b32.xlu0 %v3483, 119
        %v3501 = vpop.permute.xlu0 %3500
        %3502 = vrot.lane.b32.xlu0 %v3484, 119
        %v3503 = vpop.permute.xlu0 %3502
        %3504 = vrot.lane.b32.xlu0 %v3485, 119
        %v3505 = vpop.permute.xlu0 %3504
        %3506 = vrot.lane.b32.xlu0 %v3486, 119
        %v3507 = vpop.permute.xlu0 %3506
        %3508 = vrot.lane.b32.xlu0 %v3487, 119
        %v3509 = vpop.permute.xlu0 %3508
        %3510 = vrot.lane.b32.xlu0 %v3488, 119
        %v3511 = vpop.permute.xlu0 %3510
        %3512 = vrot.lane.b32.xlu0 %v3489, 119
        %v3513 = vpop.permute.xlu0 %3512
        %v3522 = vadd.f32 %v3474, %v3499
        %v3523 = vadd.f32 %v3475, %v3501
        %v3524 = vadd.f32 %v3476, %v3503
        %v3525 = vadd.f32 %v3477, %v3505
        %v3526 = vadd.f32 %v3478, %v3507
        %v3527 = vadd.f32 %v3479, %v3509
        %v3528 = vadd.f32 %v3480, %v3511
        %v3529 = vadd.f32 %v3481, %v3513
        %v3530 = vrsqrt.pop %v3522
        %v3531 = vmul.f32 %v3522, %v3530
        %vm3532 = vcmp.eq.f32.partialorder %v3522, inf
        %v3533 = vsel %vm3532, %v3522, %v3531
        %vm3534 = vcmp.eq.f32.partialorder %v3522, 0.0
        %v3535 = vand.u32 %v3522, 2147483648
        %v3536 = vsel %vm3534, %v3535, %v3533
        %v3537 = vrsqrt.pop %v3523
        %v3538 = vmul.f32 %v3523, %v3537
        %vm3539 = vcmp.eq.f32.partialorder %v3523, inf
        %v3540 = vsel %vm3539, %v3523, %v3538
        %vm3541 = vcmp.eq.f32.partialorder %v3523, 0.0
        %v3542 = vand.u32 %v3523, 2147483648
        %v3543 = vsel %vm3541, %v3542, %v3540
        %v3544 = vrsqrt.pop %v3524
        %v3545 = vmul.f32 %v3524, %v3544
        %vm3546 = vcmp.eq.f32.partialorder %v3524, inf
        %v3547 = vsel %vm3546, %v3524, %v3545
        %vm3548 = vcmp.eq.f32.partialorder %v3524, 0.0
        %v3549 = vand.u32 %v3524, 2147483648
        %v3550 = vsel %vm3548, %v3549, %v3547
        %v3551 = vrsqrt.pop %v3525
        %v3552 = vmul.f32 %v3525, %v3551
        %vm3553 = vcmp.eq.f32.partialorder %v3525, inf
        %v3554 = vsel %vm3553, %v3525, %v3552
        %vm3555 = vcmp.eq.f32.partialorder %v3525, 0.0
        %v3556 = vand.u32 %v3525, 2147483648
        %v3557 = vsel %vm3555, %v3556, %v3554
        %v3558 = vrsqrt.pop %v3526
        %v3559 = vmul.f32 %v3526, %v3558
        %vm3560 = vcmp.eq.f32.partialorder %v3526, inf
        %v3561 = vsel %vm3560, %v3526, %v3559
        %vm3562 = vcmp.eq.f32.partialorder %v3526, 0.0
        %v3563 = vand.u32 %v3526, 2147483648
        %v3564 = vsel %vm3562, %v3563, %v3561
        %v3565 = vrsqrt.pop %v3527
        %v3566 = vmul.f32 %v3527, %v3565
        %vm3567 = vcmp.eq.f32.partialorder %v3527, inf
        %v3568 = vsel %vm3567, %v3527, %v3566
        %vm3569 = vcmp.eq.f32.partialorder %v3527, 0.0
        %v3570 = vand.u32 %v3527, 2147483648
        %v3571 = vsel %vm3569, %v3570, %v3568
        %v3572 = vrsqrt.pop %v3528
        %v3573 = vmul.f32 %v3528, %v3572
        %vm3574 = vcmp.eq.f32.partialorder %v3528, inf
        %v3575 = vsel %vm3574, %v3528, %v3573
        %vm3576 = vcmp.eq.f32.partialorder %v3528, 0.0
        %v3577 = vand.u32 %v3528, 2147483648
        %v3578 = vsel %vm3576, %v3577, %v3575
        %v3579 = vrsqrt.pop %v3529
        %v3580 = vmul.f32 %v3529, %v3579
        %vm3581 = vcmp.eq.f32.partialorder %v3529, inf
        %v3582 = vsel %vm3581, %v3529, %v3580
        %vm3583 = vcmp.eq.f32.partialorder %v3529, 0.0
        %v3584 = vand.u32 %v3529, 2147483648
        %v3585 = vsel %vm3583, %v3584, %v3582
        %vm3586 = vcmask 72704
        %3587 = vst.msk [vmem:[%s230] sm:$0xff] %vm3586, %v3536
        %3588 = vst.msk [vmem:[%s230 + $0x8] sm:$0xff] %vm3586, %v3543
        %3589 = vst.msk [vmem:[%s230 + $0x10] sm:$0xff] %vm3586, %v3550
        %3590 = vst.msk [vmem:[%s230 + $0x18] sm:$0xff] %vm3586, %v3557
        %3591 = vst.msk [vmem:[%s230 + $0x20] sm:$0xff] %vm3586, %v3564
        %3592 = vst.msk [vmem:[%s230 + $0x28] sm:$0xff] %vm3586, %v3571
        %3593 = vst.msk [vmem:[%s230 + $0x30] sm:$0xff] %vm3586, %v3578
        %3594 = vst.msk [vmem:[%s230 + $0x38] sm:$0xff] %vm3586, %v3585
        %3603 = vrot.lane.b32.xlu0 %v3434, 9
        %v3604 = vpop.permute.xlu0 %3603
        %3605 = vrot.lane.b32.xlu0 %v3435, 9
        %v3606 = vpop.permute.xlu0 %3605
        %3607 = vrot.lane.b32.xlu0 %v3436, 9
        %v3608 = vpop.permute.xlu0 %3607
        %3609 = vrot.lane.b32.xlu0 %v3437, 9
        %v3610 = vpop.permute.xlu0 %3609
        %3611 = vrot.lane.b32.xlu0 %v3438, 9
        %v3612 = vpop.permute.xlu0 %3611
        %3613 = vrot.lane.b32.xlu0 %v3439, 9
        %v3614 = vpop.permute.xlu0 %3613
        %3615 = vrot.lane.b32.xlu0 %v3440, 9
        %v3616 = vpop.permute.xlu0 %3615
        %3617 = vrot.lane.b32.xlu0 %v3441, 9
        %v3618 = vpop.permute.xlu0 %3617
        %v3627 = vand.u32 2147483647, %v3604
        %v3628 = vand.u32 2147483647, %v3466
        %v3629 = vmin.f32 %v3627, %v3628
        %v3630 = vmax.f32 %v3627, %v3628
        %v3631 = vrcp.pop %v3630
        %v3632 = vmul.f32 %v3629, %v3631
        %v3633 = vmul.f32 %v3632, %v3632
        %v3634 = vmul.f32 0.002785687, %v3633
        %v3635 = vadd.f32 %v3634, -0.015866
        %v3636 = vmul.f32 %v3635, %v3633
        %v3637 = vadd.f32 %v3636, 0.04247222
        %v3638 = vmul.f32 %v3637, %v3633
        %v3639 = vadd.f32 %v3638, -0.074975304
        %v3640 = vmul.f32 %v3639, %v3633
        %v3641 = vadd.f32 %v3640, 0.1064488
        %v3642 = vmul.f32 %v3641, %v3633
        %v3643 = vadd.f32 %v3642, -0.14207031
        %v3644 = vmul.f32 %v3643, %v3633
        %v3645 = vadd.f32 %v3644, 0.19993454
        %v3646 = vmul.f32 %v3645, %v3633
        %v3647 = vadd.f32 %v3646, -0.33333147
        %v3648 = vmul.f32 %v3647, %v3633
        %v3649 = vmul.f32 %v3648, %v3632
        %v3650 = vadd.f32 %v3649, %v3632
        %vm3651 = vcmp.gt.f32.partialorder %v3628, %v3627
        %v3652 = vsub.f32 1.5707964, %v3650
        %v3653 = vsel %vm3651, %v3652, %v3650
        %vm3654 = vcmp.lt.f32.partialorder %v3604, 0.0
        %v3655 = vsub.f32 3.1415927, %v3653
        %v3656 = vsel %vm3654, %v3655, %v3653
        %vm3657 = vcmp.lt.s32.totalorder %v3604, 0
        %v3658 = vsel %vm3657, 3.1415927, 0.0
        %vm3659 = vcmp.eq.f32.partialorder %v3466, 0.0
        %v3660 = vsel %vm3659, %v3658, %v3656
        %vm3661 = vcmp.ne.f32.partialorder %v3604, %v3604
        %vm3662 = vcmp.ne.f32.partialorder %v3466, %v3466
        %vm3663 = vmor %vm3661, %vm3662
        %v3664 = vsel %vm3663, nan, %v3660
        %vm3665 = vcmp.lt.f32.partialorder %v3604, 0.0
        %v3666 = vsel %vm3665, 2.3561945, 0.7853982
        %vm3667 = vcmp.eq.s32.totalorder %v3627, inf
        %vm3668 = vcmp.eq.s32.totalorder %v3628, inf
        %vm3669 = vmand %vm3667, %vm3668
        %v3670 = vsel %vm3669, %v3666, %v3664
        %v3671 = vand.u32 2147483647, %v3670
        %v3672 = vand.u32 %v3466, 2147483648
        %v3673 = vor.u32 %v3671, %v3672
        %v3674 = vand.u32 2147483647, %v3606
        %v3675 = vand.u32 2147483647, %v3467
        %v3676 = vmin.f32 %v3674, %v3675
        %v3677 = vmax.f32 %v3674, %v3675
        %v3678 = vrcp.pop %v3677
        %v3679 = vmul.f32 %v3676, %v3678
        %v3680 = vmul.f32 %v3679, %v3679
        %v3681 = vmul.f32 0.002785687, %v3680
        %v3682 = vadd.f32 %v3681, -0.015866
        %v3683 = vmul.f32 %v3682, %v3680
        %v3684 = vadd.f32 %v3683, 0.04247222
        %v3685 = vmul.f32 %v3684, %v3680
        %v3686 = vadd.f32 %v3685, -0.074975304
        %v3687 = vmul.f32 %v3686, %v3680
        %v3688 = vadd.f32 %v3687, 0.1064488
        %v3689 = vmul.f32 %v3688, %v3680
        %v3690 = vadd.f32 %v3689, -0.14207031
        %v3691 = vmul.f32 %v3690, %v3680
        %v3692 = vadd.f32 %v3691, 0.19993454
        %v3693 = vmul.f32 %v3692, %v3680
        %v3694 = vadd.f32 %v3693, -0.33333147
        %v3695 = vmul.f32 %v3694, %v3680
        %v3696 = vmul.f32 %v3695, %v3679
        %v3697 = vadd.f32 %v3696, %v3679
        %vm3698 = vcmp.gt.f32.partialorder %v3675, %v3674
        %v3699 = vsub.f32 1.5707964, %v3697
        %v3700 = vsel %vm3698, %v3699, %v3697
        %vm3701 = vcmp.lt.f32.partialorder %v3606, 0.0
        %v3702 = vsub.f32 3.1415927, %v3700
        %v3703 = vsel %vm3701, %v3702, %v3700
        %vm3704 = vcmp.lt.s32.totalorder %v3606, 0
        %v3705 = vsel %vm3704, 3.1415927, 0.0
        %vm3706 = vcmp.eq.f32.partialorder %v3467, 0.0
        %v3707 = vsel %vm3706, %v3705, %v3703
        %vm3708 = vcmp.ne.f32.partialorder %v3606, %v3606
        %vm3709 = vcmp.ne.f32.partialorder %v3467, %v3467
        %vm3710 = vmor %vm3708, %vm3709
        %v3711 = vsel %vm3710, nan, %v3707
        %vm3712 = vcmp.lt.f32.partialorder %v3606, 0.0
        %v3713 = vsel %vm3712, 2.3561945, 0.7853982
        %vm3714 = vcmp.eq.s32.totalorder %v3674, inf
        %vm3715 = vcmp.eq.s32.totalorder %v3675, inf
        %vm3716 = vmand %vm3714, %vm3715
        %v3717 = vsel %vm3716, %v3713, %v3711
        %v3718 = vand.u32 2147483647, %v3717
        %v3719 = vand.u32 %v3467, 2147483648
        %v3720 = vor.u32 %v3718, %v3719
        %v3721 = vand.u32 2147483647, %v3608
        %v3722 = vand.u32 2147483647, %v3468
        %v3723 = vmin.f32 %v3721, %v3722
        %v3724 = vmax.f32 %v3721, %v3722
        %v3725 = vrcp.pop %v3724
        %v3726 = vmul.f32 %v3723, %v3725
        %v3727 = vmul.f32 %v3726, %v3726
        %v3728 = vmul.f32 0.002785687, %v3727
        %v3729 = vadd.f32 %v3728, -0.015866
        %v3730 = vmul.f32 %v3729, %v3727
        %v3731 = vadd.f32 %v3730, 0.04247222
        %v3732 = vmul.f32 %v3731, %v3727
        %v3733 = vadd.f32 %v3732, -0.074975304
        %v3734 = vmul.f32 %v3733, %v3727
        %v3735 = vadd.f32 %v3734, 0.1064488
        %v3736 = vmul.f32 %v3735, %v3727
        %v3737 = vadd.f32 %v3736, -0.14207031
        %v3738 = vmul.f32 %v3737, %v3727
        %v3739 = vadd.f32 %v3738, 0.19993454
        %v3740 = vmul.f32 %v3739, %v3727
        %v3741 = vadd.f32 %v3740, -0.33333147
        %v3742 = vmul.f32 %v3741, %v3727
        %v3743 = vmul.f32 %v3742, %v3726
        %v3744 = vadd.f32 %v3743, %v3726
        %vm3745 = vcmp.gt.f32.partialorder %v3722, %v3721
        %v3746 = vsub.f32 1.5707964, %v3744
        %v3747 = vsel %vm3745, %v3746, %v3744
        %vm3748 = vcmp.lt.f32.partialorder %v3608, 0.0
        %v3749 = vsub.f32 3.1415927, %v3747
        %v3750 = vsel %vm3748, %v3749, %v3747
        %vm3751 = vcmp.lt.s32.totalorder %v3608, 0
        %v3752 = vsel %vm3751, 3.1415927, 0.0
        %vm3753 = vcmp.eq.f32.partialorder %v3468, 0.0
        %v3754 = vsel %vm3753, %v3752, %v3750
        %vm3755 = vcmp.ne.f32.partialorder %v3608, %v3608
        %vm3756 = vcmp.ne.f32.partialorder %v3468, %v3468
        %vm3757 = vmor %vm3755, %vm3756
        %v3758 = vsel %vm3757, nan, %v3754
        %vm3759 = vcmp.lt.f32.partialorder %v3608, 0.0
        %v3760 = vsel %vm3759, 2.3561945, 0.7853982
        %vm3761 = vcmp.eq.s32.totalorder %v3721, inf
        %vm3762 = vcmp.eq.s32.totalorder %v3722, inf
        %vm3763 = vmand %vm3761, %vm3762
        %v3764 = vsel %vm3763, %v3760, %v3758
        %v3765 = vand.u32 2147483647, %v3764
        %v3766 = vand.u32 %v3468, 2147483648
        %v3767 = vor.u32 %v3765, %v3766
        %v3768 = vand.u32 2147483647, %v3610
        %v3769 = vand.u32 2147483647, %v3469
        %v3770 = vmin.f32 %v3768, %v3769
        %v3771 = vmax.f32 %v3768, %v3769
        %v3772 = vrcp.pop %v3771
        %v3773 = vmul.f32 %v3770, %v3772
        %v3774 = vmul.f32 %v3773, %v3773
        %v3775 = vmul.f32 0.002785687, %v3774
        %v3776 = vadd.f32 %v3775, -0.015866
        %v3777 = vmul.f32 %v3776, %v3774
        %v3778 = vadd.f32 %v3777, 0.04247222
        %v3779 = vmul.f32 %v3778, %v3774
        %v3780 = vadd.f32 %v3779, -0.074975304
        %v3781 = vmul.f32 %v3780, %v3774
        %v3782 = vadd.f32 %v3781, 0.1064488
        %v3783 = vmul.f32 %v3782, %v3774
        %v3784 = vadd.f32 %v3783, -0.14207031
        %v3785 = vmul.f32 %v3784, %v3774
        %v3786 = vadd.f32 %v3785, 0.19993454
        %v3787 = vmul.f32 %v3786, %v3774
        %v3788 = vadd.f32 %v3787, -0.33333147
        %v3789 = vmul.f32 %v3788, %v3774
        %v3790 = vmul.f32 %v3789, %v3773
        %v3791 = vadd.f32 %v3790, %v3773
        %vm3792 = vcmp.gt.f32.partialorder %v3769, %v3768
        %v3793 = vsub.f32 1.5707964, %v3791
        %v3794 = vsel %vm3792, %v3793, %v3791
        %vm3795 = vcmp.lt.f32.partialorder %v3610, 0.0
        %v3796 = vsub.f32 3.1415927, %v3794
        %v3797 = vsel %vm3795, %v3796, %v3794
        %vm3798 = vcmp.lt.s32.totalorder %v3610, 0
        %v3799 = vsel %vm3798, 3.1415927, 0.0
        %vm3800 = vcmp.eq.f32.partialorder %v3469, 0.0
        %v3801 = vsel %vm3800, %v3799, %v3797
        %vm3802 = vcmp.ne.f32.partialorder %v3610, %v3610
        %vm3803 = vcmp.ne.f32.partialorder %v3469, %v3469
        %vm3804 = vmor %vm3802, %vm3803
        %v3805 = vsel %vm3804, nan, %v3801
        %vm3806 = vcmp.lt.f32.partialorder %v3610, 0.0
        %v3807 = vsel %vm3806, 2.3561945, 0.7853982
        %vm3808 = vcmp.eq.s32.totalorder %v3768, inf
        %vm3809 = vcmp.eq.s32.totalorder %v3769, inf
        %vm3810 = vmand %vm3808, %vm3809
        %v3811 = vsel %vm3810, %v3807, %v3805
        %v3812 = vand.u32 2147483647, %v3811
        %v3813 = vand.u32 %v3469, 2147483648
        %v3814 = vor.u32 %v3812, %v3813
        %v3815 = vand.u32 2147483647, %v3612
        %v3816 = vand.u32 2147483647, %v3470
        %v3817 = vmin.f32 %v3815, %v3816
        %v3818 = vmax.f32 %v3815, %v3816
        %v3819 = vrcp.pop %v3818
        %v3820 = vmul.f32 %v3817, %v3819
        %v3821 = vmul.f32 %v3820, %v3820
        %v3822 = vmul.f32 0.002785687, %v3821
        %v3823 = vadd.f32 %v3822, -0.015866
        %v3824 = vmul.f32 %v3823, %v3821
        %v3825 = vadd.f32 %v3824, 0.04247222
        %v3826 = vmul.f32 %v3825, %v3821
        %v3827 = vadd.f32 %v3826, -0.074975304
        %v3828 = vmul.f32 %v3827, %v3821
        %v3829 = vadd.f32 %v3828, 0.1064488
        %v3830 = vmul.f32 %v3829, %v3821
        %v3831 = vadd.f32 %v3830, -0.14207031
        %v3832 = vmul.f32 %v3831, %v3821
        %v3833 = vadd.f32 %v3832, 0.19993454
        %v3834 = vmul.f32 %v3833, %v3821
        %v3835 = vadd.f32 %v3834, -0.33333147
        %v3836 = vmul.f32 %v3835, %v3821
        %v3837 = vmul.f32 %v3836, %v3820
        %v3838 = vadd.f32 %v3837, %v3820
        %vm3839 = vcmp.gt.f32.partialorder %v3816, %v3815
        %v3840 = vsub.f32 1.5707964, %v3838
        %v3841 = vsel %vm3839, %v3840, %v3838
        %vm3842 = vcmp.lt.f32.partialorder %v3612, 0.0
        %v3843 = vsub.f32 3.1415927, %v3841
        %v3844 = vsel %vm3842, %v3843, %v3841
        %vm3845 = vcmp.lt.s32.totalorder %v3612, 0
        %v3846 = vsel %vm3845, 3.1415927, 0.0
        %vm3847 = vcmp.eq.f32.partialorder %v3470, 0.0
        %v3848 = vsel %vm3847, %v3846, %v3844
        %vm3849 = vcmp.ne.f32.partialorder %v3612, %v3612
        %vm3850 = vcmp.ne.f32.partialorder %v3470, %v3470
        %vm3851 = vmor %vm3849, %vm3850
        %v3852 = vsel %vm3851, nan, %v3848
        %vm3853 = vcmp.lt.f32.partialorder %v3612, 0.0
        %v3854 = vsel %vm3853, 2.3561945, 0.7853982
        %vm3855 = vcmp.eq.s32.totalorder %v3815, inf
        %vm3856 = vcmp.eq.s32.totalorder %v3816, inf
        %vm3857 = vmand %vm3855, %vm3856
        %v3858 = vsel %vm3857, %v3854, %v3852
        %v3859 = vand.u32 2147483647, %v3858
        %v3860 = vand.u32 %v3470, 2147483648
        %v3861 = vor.u32 %v3859, %v3860
        %v3862 = vand.u32 2147483647, %v3614
        %v3863 = vand.u32 2147483647, %v3471
        %v3864 = vmin.f32 %v3862, %v3863
        %v3865 = vmax.f32 %v3862, %v3863
        %v3866 = vrcp.pop %v3865
        %v3867 = vmul.f32 %v3864, %v3866
        %v3868 = vmul.f32 %v3867, %v3867
        %v3869 = vmul.f32 0.002785687, %v3868
        %v3870 = vadd.f32 %v3869, -0.015866
        %v3871 = vmul.f32 %v3870, %v3868
        %v3872 = vadd.f32 %v3871, 0.04247222
        %v3873 = vmul.f32 %v3872, %v3868
        %v3874 = vadd.f32 %v3873, -0.074975304
        %v3875 = vmul.f32 %v3874, %v3868
        %v3876 = vadd.f32 %v3875, 0.1064488
        %v3877 = vmul.f32 %v3876, %v3868
        %v3878 = vadd.f32 %v3877, -0.14207031
        %v3879 = vmul.f32 %v3878, %v3868
        %v3880 = vadd.f32 %v3879, 0.19993454
        %v3881 = vmul.f32 %v3880, %v3868
        %v3882 = vadd.f32 %v3881, -0.33333147
        %v3883 = vmul.f32 %v3882, %v3868
        %v3884 = vmul.f32 %v3883, %v3867
        %v3885 = vadd.f32 %v3884, %v3867
        %vm3886 = vcmp.gt.f32.partialorder %v3863, %v3862
        %v3887 = vsub.f32 1.5707964, %v3885
        %v3888 = vsel %vm3886, %v3887, %v3885
        %vm3889 = vcmp.lt.f32.partialorder %v3614, 0.0
        %v3890 = vsub.f32 3.1415927, %v3888
        %v3891 = vsel %vm3889, %v3890, %v3888
        %vm3892 = vcmp.lt.s32.totalorder %v3614, 0
        %v3893 = vsel %vm3892, 3.1415927, 0.0
        %vm3894 = vcmp.eq.f32.partialorder %v3471, 0.0
        %v3895 = vsel %vm3894, %v3893, %v3891
        %vm3896 = vcmp.ne.f32.partialorder %v3614, %v3614
        %vm3897 = vcmp.ne.f32.partialorder %v3471, %v3471
        %vm3898 = vmor %vm3896, %vm3897
        %v3899 = vsel %vm3898, nan, %v3895
        %vm3900 = vcmp.lt.f32.partialorder %v3614, 0.0
        %v3901 = vsel %vm3900, 2.3561945, 0.7853982
        %vm3902 = vcmp.eq.s32.totalorder %v3862, inf
        %vm3903 = vcmp.eq.s32.totalorder %v3863, inf
        %vm3904 = vmand %vm3902, %vm3903
        %v3905 = vsel %vm3904, %v3901, %v3899
        %v3906 = vand.u32 2147483647, %v3905
        %v3907 = vand.u32 %v3471, 2147483648
        %v3908 = vor.u32 %v3906, %v3907
        %v3909 = vand.u32 2147483647, %v3616
        %v3910 = vand.u32 2147483647, %v3472
        %v3911 = vmin.f32 %v3909, %v3910
        %v3912 = vmax.f32 %v3909, %v3910
        %v3913 = vrcp.pop %v3912
        %v3914 = vmul.f32 %v3911, %v3913
        %v3915 = vmul.f32 %v3914, %v3914
        %v3916 = vmul.f32 0.002785687, %v3915
        %v3917 = vadd.f32 %v3916, -0.015866
        %v3918 = vmul.f32 %v3917, %v3915
        %v3919 = vadd.f32 %v3918, 0.04247222
        %v3920 = vmul.f32 %v3919, %v3915
        %v3921 = vadd.f32 %v3920, -0.074975304
        %v3922 = vmul.f32 %v3921, %v3915
        %v3923 = vadd.f32 %v3922, 0.1064488
        %v3924 = vmul.f32 %v3923, %v3915
        %v3925 = vadd.f32 %v3924, -0.14207031
        %v3926 = vmul.f32 %v3925, %v3915
        %v3927 = vadd.f32 %v3926, 0.19993454
        %v3928 = vmul.f32 %v3927, %v3915
        %v3929 = vadd.f32 %v3928, -0.33333147
        %v3930 = vmul.f32 %v3929, %v3915
        %v3931 = vmul.f32 %v3930, %v3914
        %v3932 = vadd.f32 %v3931, %v3914
        %vm3933 = vcmp.gt.f32.partialorder %v3910, %v3909
        %v3934 = vsub.f32 1.5707964, %v3932
        %v3935 = vsel %vm3933, %v3934, %v3932
        %vm3936 = vcmp.lt.f32.partialorder %v3616, 0.0
        %v3937 = vsub.f32 3.1415927, %v3935
        %v3938 = vsel %vm3936, %v3937, %v3935
        %vm3939 = vcmp.lt.s32.totalorder %v3616, 0
        %v3940 = vsel %vm3939, 3.1415927, 0.0
        %vm3941 = vcmp.eq.f32.partialorder %v3472, 0.0
        %v3942 = vsel %vm3941, %v3940, %v3938
        %vm3943 = vcmp.ne.f32.partialorder %v3616, %v3616
        %vm3944 = vcmp.ne.f32.partialorder %v3472, %v3472
        %vm3945 = vmor %vm3943, %vm3944
        %v3946 = vsel %vm3945, nan, %v3942
        %vm3947 = vcmp.lt.f32.partialorder %v3616, 0.0
        %v3948 = vsel %vm3947, 2.3561945, 0.7853982
        %vm3949 = vcmp.eq.s32.totalorder %v3909, inf
        %vm3950 = vcmp.eq.s32.totalorder %v3910, inf
        %vm3951 = vmand %vm3949, %vm3950
        %v3952 = vsel %vm3951, %v3948, %v3946
        %v3953 = vand.u32 2147483647, %v3952
        %v3954 = vand.u32 %v3472, 2147483648
        %v3955 = vor.u32 %v3953, %v3954
        %v3956 = vand.u32 2147483647, %v3618
        %v3957 = vand.u32 2147483647, %v3473
        %v3958 = vmin.f32 %v3956, %v3957
        %v3959 = vmax.f32 %v3956, %v3957
        %v3960 = vrcp.pop %v3959
        %v3961 = vmul.f32 %v3958, %v3960
        %v3962 = vmul.f32 %v3961, %v3961
        %v3963 = vmul.f32 0.002785687, %v3962
        %v3964 = vadd.f32 %v3963, -0.015866
        %v3965 = vmul.f32 %v3964, %v3962
        %v3966 = vadd.f32 %v3965, 0.04247222
        %v3967 = vmul.f32 %v3966, %v3962
        %v3968 = vadd.f32 %v3967, -0.074975304
        %v3969 = vmul.f32 %v3968, %v3962
        %v3970 = vadd.f32 %v3969, 0.1064488
        %v3971 = vmul.f32 %v3970, %v3962
        %v3972 = vadd.f32 %v3971, -0.14207031
        %v3973 = vmul.f32 %v3972, %v3962
        %v3974 = vadd.f32 %v3973, 0.19993454
        %v3975 = vmul.f32 %v3974, %v3962
        %v3976 = vadd.f32 %v3975, -0.33333147
        %v3977 = vmul.f32 %v3976, %v3962
        %v3978 = vmul.f32 %v3977, %v3961
        %v3979 = vadd.f32 %v3978, %v3961
        %vm3980 = vcmp.gt.f32.partialorder %v3957, %v3956
        %v3981 = vsub.f32 1.5707964, %v3979
        %v3982 = vsel %vm3980, %v3981, %v3979
        %vm3983 = vcmp.lt.f32.partialorder %v3618, 0.0
        %v3984 = vsub.f32 3.1415927, %v3982
        %v3985 = vsel %vm3983, %v3984, %v3982
        %vm3986 = vcmp.lt.s32.totalorder %v3618, 0
        %v3987 = vsel %vm3986, 3.1415927, 0.0
        %vm3988 = vcmp.eq.f32.partialorder %v3473, 0.0
        %v3989 = vsel %vm3988, %v3987, %v3985
        %vm3990 = vcmp.ne.f32.partialorder %v3618, %v3618
        %vm3991 = vcmp.ne.f32.partialorder %v3473, %v3473
        %vm3992 = vmor %vm3990, %vm3991
        %v3993 = vsel %vm3992, nan, %v3989
        %vm3994 = vcmp.lt.f32.partialorder %v3618, 0.0
        %v3995 = vsel %vm3994, 2.3561945, 0.7853982
        %vm3996 = vcmp.eq.s32.totalorder %v3956, inf
        %vm3997 = vcmp.eq.s32.totalorder %v3957, inf
        %vm3998 = vmand %vm3996, %vm3997
        %v3999 = vsel %vm3998, %v3995, %v3993
        %v4000 = vand.u32 2147483647, %v3999
        %v4001 = vand.u32 %v3473, 2147483648
        %v4002 = vor.u32 %v4000, %v4001
        %4011 = vrot.lane.b32.xlu0 %v3673, 119
        %v4012 = vpop.permute.xlu0 %4011
        %4013 = vrot.lane.b32.xlu0 %v3720, 119
        %v4014 = vpop.permute.xlu0 %4013
        %4015 = vrot.lane.b32.xlu0 %v3767, 119
        %v4016 = vpop.permute.xlu0 %4015
        %4017 = vrot.lane.b32.xlu0 %v3814, 119
        %v4018 = vpop.permute.xlu0 %4017
        %4019 = vrot.lane.b32.xlu0 %v3861, 119
        %v4020 = vpop.permute.xlu0 %4019
        %4021 = vrot.lane.b32.xlu0 %v3908, 119
        %v4022 = vpop.permute.xlu0 %4021
        %4023 = vrot.lane.b32.xlu0 %v3955, 119
        %v4024 = vpop.permute.xlu0 %4023
        %4025 = vrot.lane.b32.xlu0 %v4002, 119
        %v4026 = vpop.permute.xlu0 %4025
        %4035 = vst.msk [vmem:[%s237] sm:$0xff] %vm3586, %v4012
        %4036 = vst.msk [vmem:[%s237 + $0x8] sm:$0xff] %vm3586, %v4014
        %4037 = vst.msk [vmem:[%s237 + $0x10] sm:$0xff] %vm3586, %v4016
        %4038 = vst.msk [vmem:[%s237 + $0x18] sm:$0xff] %vm3586, %v4018
        %4039 = vst.msk [vmem:[%s237 + $0x20] sm:$0xff] %vm3586, %v4020
        %4040 = vst.msk [vmem:[%s237 + $0x28] sm:$0xff] %vm3586, %v4022
        %4041 = vst.msk [vmem:[%s237 + $0x30] sm:$0xff] %vm3586, %v4024
        %4042 = vst.msk [vmem:[%s237 + $0x38] sm:$0xff] %vm3586, %v4026
        %s4043 = smul.u32 4, %s19
        %p4044 = scmp.lt.s32.totalorder %s4043, 7
        %s4045 = scalar_select %p4044, %s4043, 7
        %s4046 = smul.addr %s4045, 2
        %s4047 = smul.addr %s4046, 8
        %s4048 = scalar_lea.vmem %s3, %s4047
        %s4049 = smul.u32 4, %s19
        %p4050 = scmp.lt.s32.totalorder %s4049, 7
        %s4051 = scalar_select %p4050, %s4049, 7
        %s4052 = smul.addr %s4051, 2
        %s4053 = smul.addr %s4052, 8
        %s4054 = scalar_lea.vmem %s4, %s4053
        // Predicated region
        $region37: #{tpu_custom_call.1} parent=31 // pred_check
          %p4055 = pneg %p105
        $region38: #{tpu_custom_call.1} parent=31 // pred_check_branch
          %4057 = sbr.rel (%p4055) target = $region40
        $region39: #{tpu_custom_call.1} parent=31 // pred_region
          %s4058 = smul.u32 4, %s19
        $region40: #{tpu_custom_call.1} parent=31 // pred_fallthru
          _
        // Predicated region
        $region41: #{tpu_custom_call.1} parent=31 // pred_check
          %p4059 = pneg %p131
        $region42: #{tpu_custom_call.1} parent=31 // pred_check_branch
          %4061 = sbr.rel (%p4059) target = $region44
        $region43: #{tpu_custom_call.1} parent=31 // pred_region
          %s4062 = smul.u32 4, %s19
        $region44: #{tpu_custom_call.1} parent=31 // pred_fallthru
          _
      $region32: #{tpu_custom_call.1} parent=5 // pred_fallthru
        _
      %p4063 = scmp.le.s32.totalorder 2, %s14
      // Predicated region
      $region45: #{tpu_custom_call.1} parent=5 // pred_check
        %p4064 = pneg %p4063
      $region46: #{tpu_custom_call.1} parent=5 // pred_check_branch
        %4066 = sbr.rel (%p4064) target = $region48
      $region47: #{tpu_custom_call.1} parent=5 // pred_region
        %s4067 = ssub.s32 %s14, 2
        // Predicated region
        $region49: #{tpu_custom_call.1} parent=47 // pred_check
          %p4068 = pneg %p111
        $region50: #{tpu_custom_call.1} parent=47 // pred_check_branch
          %4070 = sbr.rel (%p4068) target = $region52
        $region51: #{tpu_custom_call.1} parent=47 // pred_region
          %s4071 = smul.u32 4, %s20
          %p4072 = scmp.lt.s32.totalorder %s4071, 7
          %s4073 = scalar_select %p4072, %s4071, 7
          %s4074 = smul.addr %s4073, 2
          %s4075 = smul.addr %s4074, 8
          %s4076 = scalar_lea.vmem %s3, %s4075
        $region52: #{tpu_custom_call.1} parent=47 // pred_fallthru
          _
        // Predicated region
        $region53: #{tpu_custom_call.1} parent=47 // pred_check
          %p4077 = pneg %p137
        $region54: #{tpu_custom_call.1} parent=47 // pred_check_branch
          %4079 = sbr.rel (%p4077) target = $region56
        $region55: #{tpu_custom_call.1} parent=47 // pred_region
          %s4080 = smul.u32 4, %s20
          %p4081 = scmp.lt.s32.totalorder %s4080, 7
          %s4082 = scalar_select %p4081, %s4080, 7
          %s4083 = smul.addr %s4082, 2
          %s4084 = smul.addr %s4083, 8
          %s4085 = scalar_lea.vmem %s4, %s4084
        $region56: #{tpu_custom_call.1} parent=47 // pred_fallthru
          _
      $region48: #{tpu_custom_call.1} parent=5 // pred_fallthru
        _
    $region6: #{tpu_custom_call.1} parent=1 // loop_footer
      %s18 = sadd.s32 1, %s14
    $region7: #{tpu_custom_call.1} parent=1 // loop_footer_branch
      %13 = sbr.rel target = $region3
    $region8: #{tpu_custom_call.1} parent=1 // loop_exit
      _
    %4086 = vsyncpa [#allocation3], 1
    %s4087 = scalar_lea.sflag [#allocation3], 1
    %4088 = vsyncpa %s4087, 1

</llo_original>
